<compile_context>
chip_gen: v5e
topology: v5e:2x2
jax: 0.10.0
libtpu: 0.0.40
codegen_flags: <defaults>
</compile_context>

<pallas_src>
import functools
import math

import jax
import jax.numpy as jnp
from jax.experimental import pallas as pl
from jax.experimental.pallas import tpu as pltpu

REG_MAX = 16
EPS = 1e-7
LANE = 128
N_FEAT = 11          # pred xyxy (4) + target xyxy (4) + anchor (2) + weight (1)


def _atan(x):
    """arctan(x), Cephes atanf-style polynomial (max abs err ~1e-7).

    Built only from compare/select/div/mul/add so it lowers on the VPU.
    Sign-aware: atan(-x) = -atan(x).
    """
    sgn = jnp.where(x < 0.0, -1.0, 1.0)
    xa = jnp.abs(x)
    t3p8 = 2.414213562373095      # tan(3*pi/8)
    tp8 = 0.4142135623730951      # tan(pi/8)
    big = xa > t3p8
    mid = xa > tp8
    x_big = -1.0 / jnp.maximum(xa, 1e-30)
    x_mid = (xa - 1.0) / (xa + 1.0)
    xr = jnp.where(big, x_big, jnp.where(mid, x_mid, xa))
    y0 = jnp.where(big, math.pi / 2, jnp.where(mid, math.pi / 4, 0.0))
    z = xr * xr
    p = ((8.05374449538e-2 * z - 1.38776856032e-1) * z
         + 1.99777106478e-1) * z - 3.33329491539e-1
    return sgn * (y0 + xr + xr * z * p)


# -----------------------------------------------------------------------------
# Pallas kernel: one tile = tg * 128 anchors, features on the leading axis.
# -----------------------------------------------------------------------------
def bbox_loss_kernel(slab_ref, pd_ref, iou_ref, dfl_ref):
    i = pl.program_id(1)                      # inner (reduction) grid axis

    @pl.when(i == 0)
    def _():
        iou_ref[...] = jnp.zeros_like(iou_ref)
        dfl_ref[...] = jnp.zeros_like(dfl_ref)

    # Each feature row is a dense (tg, 128) slab: anchors on sublanes+lanes.
    weight = slab_ref[10]        # target_scores.sum(-1) * fg  (0 on pad rows)

    # ---------------- bbox_iou(..., xywh=False, CIoU=True) -------------------
    b1x1, b1y1, b1x2, b1y2 = slab_ref[0], slab_ref[1], slab_ref[2], slab_ref[3]
    b2x1, b2y1, b2x2, b2y2 = slab_ref[4], slab_ref[5], slab_ref[6], slab_ref[7]

    w1 = b1x2 - b1x1
    h1 = b1y2 - b1y1 + EPS
    w2 = b2x2 - b2x1
    h2 = b2y2 - b2y1 + EPS

    inter = (jnp.maximum(jnp.minimum(b1x2, b2x2) - jnp.maximum(b1x1, b2x1), 0.0)
             * jnp.maximum(jnp.minimum(b1y2, b2y2) - jnp.maximum(b1y1, b2y1), 0.0))
    union = w1 * h1 + w2 * h2 - inter + EPS
    iou = inter / union

    cw = jnp.maximum(b1x2, b2x2) - jnp.minimum(b1x1, b2x1)
    ch = jnp.maximum(b1y2, b2y2) - jnp.minimum(b1y1, b2y1)
    c2 = cw * cw + ch * ch + EPS
    rho2 = ((b2x1 + b2x2 - b1x1 - b1x2) ** 2
            + (b2y1 + b2y2 - b1y1 - b1y2) ** 2) * 0.25
    v = (4.0 / math.pi ** 2) * (_atan(w2 / h2) - _atan(w1 / h1)) ** 2
    alpha = v / (v - iou + (1.0 + EPS))
    ciou = iou - (rho2 / c2 + v * alpha)

    iou_ref[...] += (1.0 - ciou) * weight

    # ------------- bbox2dist(target_xyxy) + DFL cross-entropy ----------------
    dist_max = float(REG_MAX - 1) - 0.01                     # 14.99
    # Re-index slab_ref lazily per side so only one target distance is live
    # at a time (keeps vreg live ranges short inside the unrolled bin loop).
    side_fns = (
        lambda: slab_ref[8] - slab_ref[4],    # l = ax - x1
        lambda: slab_ref[9] - slab_ref[5],    # t = ay - y1
        lambda: slab_ref[6] - slab_ref[8],    # r = x2 - ax
        lambda: slab_ref[7] - slab_ref[9],    # b = y2 - ay
    )

    ce_sum = jnp.zeros_like(weight)
    for s in range(4):
        tgt = jnp.clip(side_fns[s](), 0.0, dist_max)
        base = s * REG_MAX
        # running max over the 16 bins (bins = leading ref axis, pure VPU)
        m = pd_ref[base]
        for k in range(1, REG_MAX):
            m = jnp.maximum(m, pd_ref[base + k])
        esum = jnp.zeros_like(m)
        picked = jnp.zeros_like(m)
        for k in range(REG_MAX):
            lk = pd_ref[base + k]
            esum = esum + jnp.exp(lk - m)                     # EUP slot
            # triangular interp weight: wl at bin tl, wr at bin tl+1, else 0
            coef = jnp.maximum(1.0 - jnp.abs(tgt - float(k)), 0.0)
            picked = picked + lk * coef
        # CE(tl)*wl + CE(tl+1)*wr == logsumexp - (wl*logit_tl + wr*logit_tr)
        ce_sum = ce_sum + (m + jnp.log(esum)) - picked

    dfl_ref[...] += ce_sum * 0.25 * weight          # mean over the 4 sides


# -----------------------------------------------------------------------------
# Wrapper: layout plumbing (transpose to lane-dense), pallas_call, final reduce.
# -----------------------------------------------------------------------------
@functools.partial(jax.jit, static_argnames=("tg", "cores"))
def bbox_loss(pred_dist, pred_bboxes, anchor_points, target_bboxes,
              target_scores, target_scores_sum, fg_mask, tg=16, cores=2):
    B, N, _ = pred_bboxes.shape
    M = B * N
    f32 = jnp.float32

    pd = pred_dist.reshape(M, 4 * REG_MAX).astype(f32)
    pb = pred_bboxes.reshape(M, 4).astype(f32)
    tb = target_bboxes.reshape(M, 4).astype(f32)
    ap = jnp.broadcast_to(anchor_points[None].astype(f32), (B, N, 2)).reshape(M, 2)
    # Pre-reduce target_scores (largest input) to a single weight row; the fg
    # boolean gather becomes a zero-weight mask (identical sum).
    w = (target_scores.astype(f32).sum(-1) * fg_mask.astype(f32)).reshape(M, 1)

    feat = jnp.concatenate([pb, tb, ap, w], axis=-1)          # (M, 11)

    chunk = cores * tg * LANE                 # anchors per (core, grid-step)
    Mp = ((M + chunk - 1) // chunk) * chunk
    pad = Mp - M
    if pad:
        feat = jnp.pad(feat, ((0, pad), (0, 0)))   # zero boxes + weight=0: benign
        pd = jnp.pad(pd, ((0, pad), (0, 0)))

    G = Mp // LANE
    steps = G // (cores * tg)

    # Lane-dense layout: features on the leading axis, anchors on (sublane, lane).
    slab = feat.T.reshape(N_FEAT, G, LANE)
    pdt = pd.T.reshape(4 * REG_MAX, G, LANE)

    iou_part, dfl_part = pl.pallas_call(
        bbox_loss_kernel,
        out_shape=(jax.ShapeDtypeStruct((cores * tg, LANE), f32),
                   jax.ShapeDtypeStruct((cores * tg, LANE), f32)),
        grid_spec=pltpu.PrefetchScalarGridSpec(
            num_scalar_prefetch=0,
            grid=(cores, steps),
            in_specs=[
                pl.BlockSpec((N_FEAT, tg, LANE),
                             lambda c, i: (0, c * steps + i, 0)),
                pl.BlockSpec((4 * REG_MAX, tg, LANE),
                             lambda c, i: (0, c * steps + i, 0)),
            ],
            out_specs=[
                pl.BlockSpec((tg, LANE), lambda c, i: (c, 0)),
                pl.BlockSpec((tg, LANE), lambda c, i: (c, 0)),
            ],
        ),
        compiler_params=pltpu.CompilerParams(
            dimension_semantics=("parallel", "arbitrary")),
    )(slab, pdt)

    tss = jnp.asarray(target_scores_sum, f32)
    loss_iou = jnp.sum(iou_part) / tss
    loss_dfl = jnp.sum(dfl_part) / tss
    return loss_iou, loss_dfl


# -----------------------------------------------------------------------------
# Pure-JAX reference (mirrors the PyTorch forward with dense fg masking)
# -----------------------------------------------------------------------------
def _bbox_ciou_ref(box1, box2, eps=EPS):
    b1x1, b1y1, b1x2, b1y2 = [box1[..., i:i + 1] for i in range(4)]
    b2x1, b2y1, b2x2, b2y2 = [box2[..., i:i + 1] for i in range(4)]
    w1, h1 = b1x2 - b1x1, b1y2 - b1y1 + eps
    w2, h2 = b2x2 - b2x1, b2y2 - b2y1 + eps
    inter = (jnp.clip(jnp.minimum(b1x2, b2x2) - jnp.maximum(b1x1, b2x1), 0)
             * jnp.clip(jnp.minimum(b1y2, b2y2) - jnp.maximum(b1y1, b2y1), 0))
    union = w1 * h1 + w2 * h2 - inter + eps
    iou = inter / union
    cw = jnp.maximum(b1x2, b2x2) - jnp.minimum(b1x1, b2x1)
    ch = jnp.maximum(b1y2, b2y2) - jnp.minimum(b1y1, b2y1)
    c2 = cw ** 2 + ch ** 2 + eps
    rho2 = ((b2x1 + b2x2 - b1x1 - b1x2) ** 2
            + (b2y1 + b2y2 - b1y1 - b1y2) ** 2) / 4.0
    v = (4.0 / math.pi ** 2) * (jnp.arctan(w2 / h2) - jnp.arctan(w1 / h1)) ** 2
    alpha = v / (v - iou + (1.0 + eps))
    return iou - (rho2 / c2 + v * alpha)


def reference_loss(pred_dist, pred_bboxes, anchor_points, target_bboxes,
                   target_scores, target_scores_sum, fg_mask):
    fg = fg_mask.astype(jnp.float32)[..., None]
    weight = target_scores.sum(-1, keepdims=True)
    ciou = _bbox_ciou_ref(pred_bboxes, target_bboxes)
    loss_iou = ((1.0 - ciou) * weight * fg).sum() / target_scores_sum

    ap = jnp.broadcast_to(anchor_points[None], (*pred_bboxes.shape[:-1], 2))
    x1y1 = target_bboxes[..., 0:2]
    x2y2 = target_bboxes[..., 2:4]
    ltrb = jnp.concatenate([ap - x1y1, x2y2 - ap], axis=-1)
    t = jnp.clip(ltrb, 0.0, REG_MAX - 1 - 0.01)
    tl = jnp.floor(t)
    wl = tl + 1.0 - t
    wr = 1.0 - wl
    tli = tl.astype(jnp.int32)
    logits = pred_dist.reshape(*pred_dist.shape[:-1], 4, REG_MAX)
    lse = jax.nn.logsumexp(logits, axis=-1)
    l_tl = jnp.take_along_axis(logits, tli[..., None], axis=-1)[..., 0]
    l_tr = jnp.take_along_axis(logits, (tli + 1)[..., None], axis=-1)[..., 0]
    ce = (lse - l_tl) * wl + (lse - l_tr) * wr
    dfl = ce.mean(-1, keepdims=True)
    loss_dfl = (dfl * weight * fg).sum() / target_scores_sum
    return loss_iou, loss_dfl


# -----------------------------------------------------------------------------
if __name__ == "__main__":
    key = jax.random.PRNGKey(0)
    B, N, nc = 2, 64, 4
    k = jax.random.split(key, 8)

    anchor_points = jax.random.uniform(k[0], (N, 2), minval=4.0, maxval=12.0)
    ap_b = jnp.broadcast_to(anchor_points[None], (B, N, 2))

    lt_p = jax.random.uniform(k[1], (B, N, 2), minval=0.5, maxval=6.0)
    rb_p = jax.random.uniform(k[2], (B, N, 2), minval=0.5, maxval=6.0)
    pred_bboxes = jnp.concatenate([ap_b - lt_p, ap_b + rb_p], -1)     # xyxy

    lt_t = jax.random.uniform(k[3], (B, N, 2), minval=0.5, maxval=6.0)
    rb_t = jax.random.uniform(k[4], (B, N, 2), minval=0.5, maxval=6.0)
    target_bboxes = jnp.concatenate([ap_b - lt_t, ap_b + rb_t], -1)   # xyxy

    pred_dist = jax.random.normal(k[5], (B, N, 4 * REG_MAX), jnp.float32)
    target_scores = jax.nn.sigmoid(jax.random.normal(k[6], (B, N, nc)))
    fg_mask = jax.random.uniform(k[7], (B, N)) > 0.5
    target_scores_sum = jnp.maximum(target_scores.sum(), 1.0)

    loss_iou, loss_dfl = bbox_loss(pred_dist, pred_bboxes, anchor_points,
                                   target_bboxes, target_scores,
                                   target_scores_sum, fg_mask)
    jax.block_until_ready((loss_iou, loss_dfl))

    ref_iou, ref_dfl = reference_loss(pred_dist, pred_bboxes, anchor_points,
                                      target_bboxes, target_scores,
                                      target_scores_sum, fg_mask)

    assert jnp.allclose(loss_iou, ref_iou, rtol=1e-4, atol=1e-4), (loss_iou, ref_iou)
    assert jnp.allclose(loss_dfl, ref_dfl, rtol=1e-4, atol=1e-4), (loss_dfl, ref_dfl)
    print("KERNEL_OK")
</pallas_src>

<mosaic_0001>
module attributes {stable_mosaic.version = 11 : i64} {
  func.func @bbox_loss_kernel(%arg0: i32, %arg1: i32, %arg2: memref<11x16x128xf32, #tpu.memory_space<vmem>>, %arg3: memref<64x16x128xf32, #tpu.memory_space<vmem>>, %arg4: memref<16x128xf32, #tpu.memory_space<vmem>>, %arg5: memref<16x128xf32, #tpu.memory_space<vmem>>) attributes {dimension_semantics = [#tpu.dimension_semantics<parallel>, #tpu.dimension_semantics<arbitrary>], iteration_bounds = array<i64: 2, 1>, scalar_prefetch = 0 : i64, scratch_operands = 0 : i64, tpu.core_type = #tpu.core_type<tc>, window_params = [{transform_indices = @transform_0, window_bounds = array<i64: 11, 16, 128>}, {transform_indices = @transform_1, window_bounds = array<i64: 64, 16, 128>}, {transform_indices = @transform_2, window_bounds = array<i64: 16, 128>}, {transform_indices = @transform_3, window_bounds = array<i64: 16, 128>}]} {
    %c0_i32 = arith.constant 0 : i32
    %0 = arith.cmpi eq, %arg1, %c0_i32 : i32
    %1 = arith.extui %0 : i1 to i32
    %c0_i32_0 = arith.constant 0 : i32
    %2 = arith.cmpi ne, %1, %c0_i32_0 : i32
    scf.if %2 {
      %cst_631 = arith.constant 0.000000e+00 : f32
      %1324 = vector.broadcast %cst_631 : f32 to vector<16x128xf32>
      %c0_632 = arith.constant 0 : index
      %c0_633 = arith.constant 0 : index
      %1325 = vector.load %arg4[%c0_632, %c0_633] : memref<16x128xf32, #tpu.memory_space<vmem>>, vector<16x128xf32>
      tpu.vector_store %arg4[%c0_632, %c0_633], %1324 {strides = array<i32>} : memref<16x128xf32, #tpu.memory_space<vmem>>, vector<16x128xf32>,
      %cst_634 = arith.constant 0.000000e+00 : f32
      %1326 = vector.broadcast %cst_634 : f32 to vector<16x128xf32>
      %c0_635 = arith.constant 0 : index
      %c0_636 = arith.constant 0 : index
      %1327 = vector.load %arg5[%c0_635, %c0_636] : memref<16x128xf32, #tpu.memory_space<vmem>>, vector<16x128xf32>
      tpu.vector_store %arg5[%c0_635, %c0_636], %1326 {strides = array<i32>} : memref<16x128xf32, #tpu.memory_space<vmem>>, vector<16x128xf32>,
    } else {
    }
    %c10 = arith.constant 10 : index
    %c0 = arith.constant 0 : index
    %c0_1 = arith.constant 0 : index
    %3 = vector.load %arg2[%c10, %c0, %c0_1] : memref<11x16x128xf32, #tpu.memory_space<vmem>>, vector<1x16x128xf32>
    %4 = vector.shape_cast %3 : vector<1x16x128xf32> to vector<16x128xf32>
    %c0_2 = arith.constant 0 : index
    %c0_3 = arith.constant 0 : index
    %c0_4 = arith.constant 0 : index
    %5 = vector.load %arg2[%c0_2, %c0_3, %c0_4] : memref<11x16x128xf32, #tpu.memory_space<vmem>>, vector<1x16x128xf32>
    %6 = vector.shape_cast %5 : vector<1x16x128xf32> to vector<16x128xf32>
    %c1 = arith.constant 1 : index
    %c0_5 = arith.constant 0 : index
    %c0_6 = arith.constant 0 : index
    %7 = vector.load %arg2[%c1, %c0_5, %c0_6] : memref<11x16x128xf32, #tpu.memory_space<vmem>>, vector<1x16x128xf32>
    %8 = vector.shape_cast %7 : vector<1x16x128xf32> to vector<16x128xf32>
    %c2 = arith.constant 2 : index
    %c0_7 = arith.constant 0 : index
    %c0_8 = arith.constant 0 : index
    %9 = vector.load %arg2[%c2, %c0_7, %c0_8] : memref<11x16x128xf32, #tpu.memory_space<vmem>>, vector<1x16x128xf32>
    %10 = vector.shape_cast %9 : vector<1x16x128xf32> to vector<16x128xf32>
    %c3 = arith.constant 3 : index
    %c0_9 = arith.constant 0 : index
    %c0_10 = arith.constant 0 : index
    %11 = vector.load %arg2[%c3, %c0_9, %c0_10] : memref<11x16x128xf32, #tpu.memory_space<vmem>>, vector<1x16x128xf32>
    %12 = vector.shape_cast %11 : vector<1x16x128xf32> to vector<16x128xf32>
    %c4 = arith.constant 4 : index
    %c0_11 = arith.constant 0 : index
    %c0_12 = arith.constant 0 : index
    %13 = vector.load %arg2[%c4, %c0_11, %c0_12] : memref<11x16x128xf32, #tpu.memory_space<vmem>>, vector<1x16x128xf32>
    %14 = vector.shape_cast %13 : vector<1x16x128xf32> to vector<16x128xf32>
    %c5 = arith.constant 5 : index
    %c0_13 = arith.constant 0 : index
    %c0_14 = arith.constant 0 : index
    %15 = vector.load %arg2[%c5, %c0_13, %c0_14] : memref<11x16x128xf32, #tpu.memory_space<vmem>>, vector<1x16x128xf32>
    %16 = vector.shape_cast %15 : vector<1x16x128xf32> to vector<16x128xf32>
    %c6 = arith.constant 6 : index
    %c0_15 = arith.constant 0 : index
    %c0_16 = arith.constant 0 : index
    %17 = vector.load %arg2[%c6, %c0_15, %c0_16] : memref<11x16x128xf32, #tpu.memory_space<vmem>>, vector<1x16x128xf32>
    %18 = vector.shape_cast %17 : vector<1x16x128xf32> to vector<16x128xf32>
    %c7 = arith.constant 7 : index
    %c0_17 = arith.constant 0 : index
    %c0_18 = arith.constant 0 : index
    %19 = vector.load %arg2[%c7, %c0_17, %c0_18] : memref<11x16x128xf32, #tpu.memory_space<vmem>>, vector<1x16x128xf32>
    %20 = vector.shape_cast %19 : vector<1x16x128xf32> to vector<16x128xf32>
    %21 = arith.subf %10, %6 : vector<16x128xf32>
    %22 = arith.subf %12, %8 : vector<16x128xf32>
    %cst = arith.constant 1.000000e-07 : f32
    %23 = vector.broadcast %cst : f32 to vector<16x128xf32>
    %24 = arith.addf %22, %23 : vector<16x128xf32>
    %25 = arith.subf %18, %14 : vector<16x128xf32>
    %26 = arith.subf %20, %16 : vector<16x128xf32>
    %cst_19 = arith.constant 1.000000e-07 : f32
    %27 = vector.broadcast %cst_19 : f32 to vector<16x128xf32>
    %28 = arith.addf %26, %27 : vector<16x128xf32>
    %29 = arith.minimumf %10, %18 : vector<16x128xf32>
    %30 = arith.maximumf %6, %14 : vector<16x128xf32>
    %31 = arith.subf %29, %30 : vector<16x128xf32>
    %cst_20 = arith.constant 0.000000e+00 : f32
    %32 = vector.broadcast %cst_20 : f32 to vector<16x128xf32>
    %33 = arith.maximumf %31, %32 : vector<16x128xf32>
    %34 = arith.minimumf %12, %20 : vector<16x128xf32>
    %35 = arith.maximumf %8, %16 : vector<16x128xf32>
    %36 = arith.subf %34, %35 : vector<16x128xf32>
    %cst_21 = arith.constant 0.000000e+00 : f32
    %37 = vector.broadcast %cst_21 : f32 to vector<16x128xf32>
    %38 = arith.maximumf %36, %37 : vector<16x128xf32>
    %39 = arith.mulf %33, %38 : vector<16x128xf32>
    %40 = arith.mulf %21, %24 : vector<16x128xf32>
    %41 = arith.mulf %25, %28 : vector<16x128xf32>
    %42 = arith.addf %40, %41 : vector<16x128xf32>
    %43 = arith.subf %42, %39 : vector<16x128xf32>
    %cst_22 = arith.constant 1.000000e-07 : f32
    %44 = vector.broadcast %cst_22 : f32 to vector<16x128xf32>
    %45 = arith.addf %43, %44 : vector<16x128xf32>
    %46 = arith.divf %39, %45 : vector<16x128xf32>
    %47 = arith.maximumf %10, %18 : vector<16x128xf32>
    %48 = arith.minimumf %6, %14 : vector<16x128xf32>
    %49 = arith.subf %47, %48 : vector<16x128xf32>
    %50 = arith.maximumf %12, %20 : vector<16x128xf32>
    %51 = arith.minimumf %8, %16 : vector<16x128xf32>
    %52 = arith.subf %50, %51 : vector<16x128xf32>
    %53 = arith.mulf %49, %49 : vector<16x128xf32>
    %54 = arith.mulf %52, %52 : vector<16x128xf32>
    %55 = arith.addf %53, %54 : vector<16x128xf32>
    %cst_23 = arith.constant 1.000000e-07 : f32
    %56 = vector.broadcast %cst_23 : f32 to vector<16x128xf32>
    %57 = arith.addf %55, %56 : vector<16x128xf32>
    %58 = arith.addf %14, %18 : vector<16x128xf32>
    %59 = arith.subf %58, %6 : vector<16x128xf32>
    %60 = arith.subf %59, %10 : vector<16x128xf32>
    %61 = arith.mulf %60, %60 : vector<16x128xf32>
    %62 = arith.addf %16, %20 : vector<16x128xf32>
    %63 = arith.subf %62, %8 : vector<16x128xf32>
    %64 = arith.subf %63, %12 : vector<16x128xf32>
    %65 = arith.mulf %64, %64 : vector<16x128xf32>
    %66 = arith.addf %61, %65 : vector<16x128xf32>
    %cst_24 = arith.constant 2.500000e-01 : f32
    %67 = vector.broadcast %cst_24 : f32 to vector<16x128xf32>
    %68 = arith.mulf %66, %67 : vector<16x128xf32>
    %69 = arith.divf %25, %28 : vector<16x128xf32>
    %cst_25 = arith.constant 0.000000e+00 : f32
    %70 = vector.broadcast %cst_25 : f32 to vector<16x128xf32>
    %71 = arith.cmpf olt, %69, %70 : vector<16x128xf32>
    %cst_26 = arith.constant -1.000000e+00 : f32
    %cst_27 = arith.constant 1.000000e+00 : f32
    %72 = vector.broadcast %cst_26 : f32 to vector<16x128xf32>
    %73 = vector.broadcast %cst_27 : f32 to vector<16x128xf32>
    %74 = arith.select %71, %72, %73 : vector<16x128xi1>, vector<16x128xf32>
    %75 = math.absf %69 : vector<16x128xf32>
    %cst_28 = arith.constant 2.41421366 : f32
    %76 = vector.broadcast %cst_28 : f32 to vector<16x128xf32>
    %77 = arith.cmpf ogt, %75, %76 : vector<16x128xf32>
    %cst_29 = arith.constant 0.414213568 : f32
    %78 = vector.broadcast %cst_29 : f32 to vector<16x128xf32>
    %79 = arith.cmpf ogt, %75, %78 : vector<16x128xf32>
    %cst_30 = arith.constant 1.000000e-30 : f32
    %80 = vector.broadcast %cst_30 : f32 to vector<16x128xf32>
    %81 = arith.maximumf %75, %80 : vector<16x128xf32>
    %cst_31 = arith.constant -1.000000e+00 : f32
    %82 = vector.broadcast %cst_31 : f32 to vector<16x128xf32>
    %83 = arith.divf %82, %81 : vector<16x128xf32>
    %cst_32 = arith.constant 1.000000e+00 : f32
    %84 = vector.broadcast %cst_32 : f32 to vector<16x128xf32>
    %85 = arith.subf %75, %84 : vector<16x128xf32>
    %cst_33 = arith.constant 1.000000e+00 : f32
    %86 = vector.broadcast %cst_33 : f32 to vector<16x128xf32>
    %87 = arith.addf %75, %86 : vector<16x128xf32>
    %88 = arith.divf %85, %87 : vector<16x128xf32>
    %89 = arith.select %79, %88, %75 : vector<16x128xi1>, vector<16x128xf32>
    %90 = arith.select %77, %83, %89 : vector<16x128xi1>, vector<16x128xf32>
    %cst_34 = arith.constant 0.785398185 : f32
    %cst_35 = arith.constant 0.000000e+00 : f32
    %91 = vector.broadcast %cst_34 : f32 to vector<16x128xf32>
    %92 = vector.broadcast %cst_35 : f32 to vector<16x128xf32>
    %93 = arith.select %79, %91, %92 : vector<16x128xi1>, vector<16x128xf32>
    %cst_36 = arith.constant 1.57079637 : f32
    %94 = vector.broadcast %cst_36 : f32 to vector<16x128xf32>
    %95 = arith.select %77, %94, %93 : vector<16x128xi1>, vector<16x128xf32>
    %96 = arith.mulf %90, %90 : vector<16x128xf32>
    %cst_37 = arith.constant 0.0805374458 : f32
    %97 = vector.broadcast %cst_37 : f32 to vector<16x128xf32>
    %98 = arith.mulf %97, %96 : vector<16x128xf32>
    %cst_38 = arith.constant 0.138776854 : f32
    %99 = vector.broadcast %cst_38 : f32 to vector<16x128xf32>
    %100 = arith.subf %98, %99 : vector<16x128xf32>
    %101 = arith.mulf %100, %96 : vector<16x128xf32>
    %cst_39 = arith.constant 0.199777111 : f32
    %102 = vector.broadcast %cst_39 : f32 to vector<16x128xf32>
    %103 = arith.addf %101, %102 : vector<16x128xf32>
    %104 = arith.mulf %103, %96 : vector<16x128xf32>
    %cst_40 = arith.constant 0.333329499 : f32
    %105 = vector.broadcast %cst_40 : f32 to vector<16x128xf32>
    %106 = arith.subf %104, %105 : vector<16x128xf32>
    %107 = arith.addf %95, %90 : vector<16x128xf32>
    %108 = arith.mulf %90, %96 : vector<16x128xf32>
    %109 = arith.mulf %108, %106 : vector<16x128xf32>
    %110 = arith.addf %107, %109 : vector<16x128xf32>
    %111 = arith.mulf %74, %110 : vector<16x128xf32>
    %112 = arith.divf %21, %24 : vector<16x128xf32>
    %cst_41 = arith.constant 0.000000e+00 : f32
    %113 = vector.broadcast %cst_41 : f32 to vector<16x128xf32>
    %114 = arith.cmpf olt, %112, %113 : vector<16x128xf32>
    %cst_42 = arith.constant -1.000000e+00 : f32
    %cst_43 = arith.constant 1.000000e+00 : f32
    %115 = vector.broadcast %cst_42 : f32 to vector<16x128xf32>
    %116 = vector.broadcast %cst_43 : f32 to vector<16x128xf32>
    %117 = arith.select %114, %115, %116 : vector<16x128xi1>, vector<16x128xf32>
    %118 = math.absf %112 : vector<16x128xf32>
    %cst_44 = arith.constant 2.41421366 : f32
    %119 = vector.broadcast %cst_44 : f32 to vector<16x128xf32>
    %120 = arith.cmpf ogt, %118, %119 : vector<16x128xf32>
    %cst_45 = arith.constant 0.414213568 : f32
    %121 = vector.broadcast %cst_45 : f32 to vector<16x128xf32>
    %122 = arith.cmpf ogt, %118, %121 : vector<16x128xf32>
    %cst_46 = arith.constant 1.000000e-30 : f32
    %123 = vector.broadcast %cst_46 : f32 to vector<16x128xf32>
    %124 = arith.maximumf %118, %123 : vector<16x128xf32>
    %cst_47 = arith.constant -1.000000e+00 : f32
    %125 = vector.broadcast %cst_47 : f32 to vector<16x128xf32>
    %126 = arith.divf %125, %124 : vector<16x128xf32>
    %cst_48 = arith.constant 1.000000e+00 : f32
    %127 = vector.broadcast %cst_48 : f32 to vector<16x128xf32>
    %128 = arith.subf %118, %127 : vector<16x128xf32>
    %cst_49 = arith.constant 1.000000e+00 : f32
    %129 = vector.broadcast %cst_49 : f32 to vector<16x128xf32>
    %130 = arith.addf %118, %129 : vector<16x128xf32>
    %131 = arith.divf %128, %130 : vector<16x128xf32>
    %132 = arith.select %122, %131, %118 : vector<16x128xi1>, vector<16x128xf32>
    %133 = arith.select %120, %126, %132 : vector<16x128xi1>, vector<16x128xf32>
    %cst_50 = arith.constant 0.785398185 : f32
    %cst_51 = arith.constant 0.000000e+00 : f32
    %134 = vector.broadcast %cst_50 : f32 to vector<16x128xf32>
    %135 = vector.broadcast %cst_51 : f32 to vector<16x128xf32>
    %136 = arith.select %122, %134, %135 : vector<16x128xi1>, vector<16x128xf32>
    %cst_52 = arith.constant 1.57079637 : f32
    %137 = vector.broadcast %cst_52 : f32 to vector<16x128xf32>
    %138 = arith.select %120, %137, %136 : vector<16x128xi1>, vector<16x128xf32>
    %139 = arith.mulf %133, %133 : vector<16x128xf32>
    %cst_53 = arith.constant 0.0805374458 : f32
    %140 = vector.broadcast %cst_53 : f32 to vector<16x128xf32>
    %141 = arith.mulf %140, %139 : vector<16x128xf32>
    %cst_54 = arith.constant 0.138776854 : f32
    %142 = vector.broadcast %cst_54 : f32 to vector<16x128xf32>
    %143 = arith.subf %141, %142 : vector<16x128xf32>
    %144 = arith.mulf %143, %139 : vector<16x128xf32>
    %cst_55 = arith.constant 0.199777111 : f32
    %145 = vector.broadcast %cst_55 : f32 to vector<16x128xf32>
    %146 = arith.addf %144, %145 : vector<16x128xf32>
    %147 = arith.mulf %146, %139 : vector<16x128xf32>
    %cst_56 = arith.constant 0.333329499 : f32
    %148 = vector.broadcast %cst_56 : f32 to vector<16x128xf32>
    %149 = arith.subf %147, %148 : vector<16x128xf32>
    %150 = arith.addf %138, %133 : vector<16x128xf32>
    %151 = arith.mulf %133, %139 : vector<16x128xf32>
    %152 = arith.mulf %151, %149 : vector<16x128xf32>
    %153 = arith.addf %150, %152 : vector<16x128xf32>
    %154 = arith.mulf %117, %153 : vector<16x128xf32>
    %155 = arith.subf %111, %154 : vector<16x128xf32>
    %156 = arith.mulf %155, %155 : vector<16x128xf32>
    %cst_57 = arith.constant 0.405284733 : f32
    %157 = vector.broadcast %cst_57 : f32 to vector<16x128xf32>
    %158 = arith.mulf %157, %156 : vector<16x128xf32>
    %159 = arith.subf %158, %46 : vector<16x128xf32>
    %cst_58 = arith.constant 1.00000012 : f32
    %160 = vector.broadcast %cst_58 : f32 to vector<16x128xf32>
    %161 = arith.addf %159, %160 : vector<16x128xf32>
    %162 = arith.divf %158, %161 : vector<16x128xf32>
    %163 = arith.divf %68, %57 : vector<16x128xf32>
    %164 = arith.mulf %158, %162 : vector<16x128xf32>
    %165 = arith.addf %163, %164 : vector<16x128xf32>
    %166 = arith.subf %46, %165 : vector<16x128xf32>
    %c0_59 = arith.constant 0 : index
    %c0_60 = arith.constant 0 : index
    %167 = vector.load %arg4[%c0_59, %c0_60] : memref<16x128xf32, #tpu.memory_space<vmem>>, vector<16x128xf32>
    %cst_61 = arith.constant 1.000000e+00 : f32
    %168 = vector.broadcast %cst_61 : f32 to vector<16x128xf32>
    %169 = arith.subf %168, %166 : vector<16x128xf32>
    %170 = arith.mulf %169, %4 : vector<16x128xf32>
    %171 = arith.addf %167, %170 : vector<16x128xf32>
    %c0_62 = arith.constant 0 : index
    %c0_63 = arith.constant 0 : index
    %172 = vector.load %arg4[%c0_62, %c0_63] : memref<16x128xf32, #tpu.memory_space<vmem>>, vector<16x128xf32>
    tpu.vector_store %arg4[%c0_62, %c0_63], %171 {strides = array<i32>} : memref<16x128xf32, #tpu.memory_space<vmem>>, vector<16x128xf32>,
    %cst_64 = arith.constant 0.000000e+00 : f32
    %173 = vector.broadcast %cst_64 : f32 to vector<16x128xf32>
    %c8 = arith.constant 8 : index
    %c0_65 = arith.constant 0 : index
    %c0_66 = arith.constant 0 : index
    %174 = vector.load %arg2[%c8, %c0_65, %c0_66] : memref<11x16x128xf32, #tpu.memory_space<vmem>>, vector<1x16x128xf32>
    %175 = vector.shape_cast %174 : vector<1x16x128xf32> to vector<16x128xf32>
    %c4_67 = arith.constant 4 : index
    %c0_68 = arith.constant 0 : index
    %c0_69 = arith.constant 0 : index
    %176 = vector.load %arg2[%c4_67, %c0_68, %c0_69] : memref<11x16x128xf32, #tpu.memory_space<vmem>>, vector<1x16x128xf32>
    %177 = vector.shape_cast %176 : vector<1x16x128xf32> to vector<16x128xf32>
    %178 = arith.subf %175, %177 : vector<16x128xf32>
    %cst_70 = arith.constant 0.000000e+00 : f32
    %cst_71 = arith.constant 1.499000e+01 : f32
    %179 = vector.broadcast %cst_70 : f32 to vector<16x128xf32>
    %180 = arith.maximumf %179, %178 : vector<16x128xf32>
    %181 = vector.broadcast %cst_71 : f32 to vector<16x128xf32>
    %182 = arith.minimumf %181, %180 : vector<16x128xf32>
    %c0_72 = arith.constant 0 : index
    %c0_73 = arith.constant 0 : index
    %c0_74 = arith.constant 0 : index
    %183 = vector.load %arg3[%c0_72, %c0_73, %c0_74] : memref<64x16x128xf32, #tpu.memory_space<vmem>>, vector<1x16x128xf32>
    %184 = vector.shape_cast %183 : vector<1x16x128xf32> to vector<16x128xf32>
    %c1_75 = arith.constant 1 : index
    %c0_76 = arith.constant 0 : index
    %c0_77 = arith.constant 0 : index
    %185 = vector.load %arg3[%c1_75, %c0_76, %c0_77] : memref<64x16x128xf32, #tpu.memory_space<vmem>>, vector<1x16x128xf32>
    %186 = vector.shape_cast %185 : vector<1x16x128xf32> to vector<16x128xf32>
    %187 = arith.maximumf %184, %186 : vector<16x128xf32>
    %c2_78 = arith.constant 2 : index
    %c0_79 = arith.constant 0 : index
    %c0_80 = arith.constant 0 : index
    %188 = vector.load %arg3[%c2_78, %c0_79, %c0_80] : memref<64x16x128xf32, #tpu.memory_space<vmem>>, vector<1x16x128xf32>
    %189 = vector.shape_cast %188 : vector<1x16x128xf32> to vector<16x128xf32>
    %190 = arith.maximumf %187, %189 : vector<16x128xf32>
    %c3_81 = arith.constant 3 : index
    %c0_82 = arith.constant 0 : index
    %c0_83 = arith.constant 0 : index
    %191 = vector.load %arg3[%c3_81, %c0_82, %c0_83] : memref<64x16x128xf32, #tpu.memory_space<vmem>>, vector<1x16x128xf32>
    %192 = vector.shape_cast %191 : vector<1x16x128xf32> to vector<16x128xf32>
    %193 = arith.maximumf %190, %192 : vector<16x128xf32>
    %c4_84 = arith.constant 4 : index
    %c0_85 = arith.constant 0 : index
    %c0_86 = arith.constant 0 : index
    %194 = vector.load %arg3[%c4_84, %c0_85, %c0_86] : memref<64x16x128xf32, #tpu.memory_space<vmem>>, vector<1x16x128xf32>
    %195 = vector.shape_cast %194 : vector<1x16x128xf32> to vector<16x128xf32>
    %196 = arith.maximumf %193, %195 : vector<16x128xf32>
    %c5_87 = arith.constant 5 : index
    %c0_88 = arith.constant 0 : index
    %c0_89 = arith.constant 0 : index
    %197 = vector.load %arg3[%c5_87, %c0_88, %c0_89] : memref<64x16x128xf32, #tpu.memory_space<vmem>>, vector<1x16x128xf32>
    %198 = vector.shape_cast %197 : vector<1x16x128xf32> to vector<16x128xf32>
    %199 = arith.maximumf %196, %198 : vector<16x128xf32>
    %c6_90 = arith.constant 6 : index
    %c0_91 = arith.constant 0 : index
    %c0_92 = arith.constant 0 : index
    %200 = vector.load %arg3[%c6_90, %c0_91, %c0_92] : memref<64x16x128xf32, #tpu.memory_space<vmem>>, vector<1x16x128xf32>
    %201 = vector.shape_cast %200 : vector<1x16x128xf32> to vector<16x128xf32>
    %202 = arith.maximumf %199, %201 : vector<16x128xf32>
    %c7_93 = arith.constant 7 : index
    %c0_94 = arith.constant 0 : index
    %c0_95 = arith.constant 0 : index
    %203 = vector.load %arg3[%c7_93, %c0_94, %c0_95] : memref<64x16x128xf32, #tpu.memory_space<vmem>>, vector<1x16x128xf32>
    %204 = vector.shape_cast %203 : vector<1x16x128xf32> to vector<16x128xf32>
    %205 = arith.maximumf %202, %204 : vector<16x128xf32>
    %c8_96 = arith.constant 8 : index
    %c0_97 = arith.constant 0 : index
    %c0_98 = arith.constant 0 : index
    %206 = vector.load %arg3[%c8_96, %c0_97, %c0_98] : memref<64x16x128xf32, #tpu.memory_space<vmem>>, vector<1x16x128xf32>
    %207 = vector.shape_cast %206 : vector<1x16x128xf32> to vector<16x128xf32>
    %208 = arith.maximumf %205, %207 : vector<16x128xf32>
    %c9 = arith.constant 9 : index
    %c0_99 = arith.constant 0 : index
    %c0_100 = arith.constant 0 : index
    %209 = vector.load %arg3[%c9, %c0_99, %c0_100] : memref<64x16x128xf32, #tpu.memory_space<vmem>>, vector<1x16x128xf32>
    %210 = vector.shape_cast %209 : vector<1x16x128xf32> to vector<16x128xf32>
    %211 = arith.maximumf %208, %210 : vector<16x128xf32>
    %c10_101 = arith.constant 10 : index
    %c0_102 = arith.constant 0 : index
    %c0_103 = arith.constant 0 : index
    %212 = vector.load %arg3[%c10_101, %c0_102, %c0_103] : memref<64x16x128xf32, #tpu.memory_space<vmem>>, vector<1x16x128xf32>
    %213 = vector.shape_cast %212 : vector<1x16x128xf32> to vector<16x128xf32>
    %214 = arith.maximumf %211, %213 : vector<16x128xf32>
    %c11 = arith.constant 11 : index
    %c0_104 = arith.constant 0 : index
    %c0_105 = arith.constant 0 : index
    %215 = vector.load %arg3[%c11, %c0_104, %c0_105] : memref<64x16x128xf32, #tpu.memory_space<vmem>>, vector<1x16x128xf32>
    %216 = vector.shape_cast %215 : vector<1x16x128xf32> to vector<16x128xf32>
    %217 = arith.maximumf %214, %216 : vector<16x128xf32>
    %c12 = arith.constant 12 : index
    %c0_106 = arith.constant 0 : index
    %c0_107 = arith.constant 0 : index
    %218 = vector.load %arg3[%c12, %c0_106, %c0_107] : memref<64x16x128xf32, #tpu.memory_space<vmem>>, vector<1x16x128xf32>
    %219 = vector.shape_cast %218 : vector<1x16x128xf32> to vector<16x128xf32>
    %220 = arith.maximumf %217, %219 : vector<16x128xf32>
    %c13 = arith.constant 13 : index
    %c0_108 = arith.constant 0 : index
    %c0_109 = arith.constant 0 : index
    %221 = vector.load %arg3[%c13, %c0_108, %c0_109] : memref<64x16x128xf32, #tpu.memory_space<vmem>>, vector<1x16x128xf32>
    %222 = vector.shape_cast %221 : vector<1x16x128xf32> to vector<16x128xf32>
    %223 = arith.maximumf %220, %222 : vector<16x128xf32>
    %c14 = arith.constant 14 : index
    %c0_110 = arith.constant 0 : index
    %c0_111 = arith.constant 0 : index
    %224 = vector.load %arg3[%c14, %c0_110, %c0_111] : memref<64x16x128xf32, #tpu.memory_space<vmem>>, vector<1x16x128xf32>
    %225 = vector.shape_cast %224 : vector<1x16x128xf32> to vector<16x128xf32>
    %226 = arith.maximumf %223, %225 : vector<16x128xf32>
    %c15 = arith.constant 15 : index
    %c0_112 = arith.constant 0 : index
    %c0_113 = arith.constant 0 : index
    %227 = vector.load %arg3[%c15, %c0_112, %c0_113] : memref<64x16x128xf32, #tpu.memory_space<vmem>>, vector<1x16x128xf32>
    %228 = vector.shape_cast %227 : vector<1x16x128xf32> to vector<16x128xf32>
    %229 = arith.maximumf %226, %228 : vector<16x128xf32>
    %cst_114 = arith.constant 0.000000e+00 : f32
    %230 = vector.broadcast %cst_114 : f32 to vector<16x128xf32>
    %cst_115 = arith.constant 0.000000e+00 : f32
    %231 = vector.broadcast %cst_115 : f32 to vector<16x128xf32>
    %c0_116 = arith.constant 0 : index
    %c0_117 = arith.constant 0 : index
    %c0_118 = arith.constant 0 : index
    %232 = vector.load %arg3[%c0_116, %c0_117, %c0_118] : memref<64x16x128xf32, #tpu.memory_space<vmem>>, vector<1x16x128xf32>
    %233 = vector.shape_cast %232 : vector<1x16x128xf32> to vector<16x128xf32>
    %234 = arith.subf %233, %229 : vector<16x128xf32>
    %235 = math.exp %234 : vector<16x128xf32>
    %236 = arith.addf %230, %235 : vector<16x128xf32>
    %cst_119 = arith.constant 0.000000e+00 : f32
    %237 = vector.broadcast %cst_119 : f32 to vector<16x128xf32>
    %238 = arith.subf %182, %237 : vector<16x128xf32>
    %239 = math.absf %238 : vector<16x128xf32>
    %cst_120 = arith.constant 1.000000e+00 : f32
    %240 = vector.broadcast %cst_120 : f32 to vector<16x128xf32>
    %241 = arith.subf %240, %239 : vector<16x128xf32>
    %cst_121 = arith.constant 0.000000e+00 : f32
    %242 = vector.broadcast %cst_121 : f32 to vector<16x128xf32>
    %243 = arith.maximumf %241, %242 : vector<16x128xf32>
    %244 = arith.mulf %233, %243 : vector<16x128xf32>
    %245 = arith.addf %231, %244 : vector<16x128xf32>
    %c1_122 = arith.constant 1 : index
    %c0_123 = arith.constant 0 : index
    %c0_124 = arith.constant 0 : index
    %246 = vector.load %arg3[%c1_122, %c0_123, %c0_124] : memref<64x16x128xf32, #tpu.memory_space<vmem>>, vector<1x16x128xf32>
    %247 = vector.shape_cast %246 : vector<1x16x128xf32> to vector<16x128xf32>
    %248 = arith.subf %247, %229 : vector<16x128xf32>
    %249 = math.exp %248 : vector<16x128xf32>
    %250 = arith.addf %236, %249 : vector<16x128xf32>
    %cst_125 = arith.constant 1.000000e+00 : f32
    %251 = vector.broadcast %cst_125 : f32 to vector<16x128xf32>
    %252 = arith.subf %182, %251 : vector<16x128xf32>
    %253 = math.absf %252 : vector<16x128xf32>
    %cst_126 = arith.constant 1.000000e+00 : f32
    %254 = vector.broadcast %cst_126 : f32 to vector<16x128xf32>
    %255 = arith.subf %254, %253 : vector<16x128xf32>
    %cst_127 = arith.constant 0.000000e+00 : f32
    %256 = vector.broadcast %cst_127 : f32 to vector<16x128xf32>
    %257 = arith.maximumf %255, %256 : vector<16x128xf32>
    %258 = arith.mulf %247, %257 : vector<16x128xf32>
    %259 = arith.addf %245, %258 : vector<16x128xf32>
    %c2_128 = arith.constant 2 : index
    %c0_129 = arith.constant 0 : index
    %c0_130 = arith.constant 0 : index
    %260 = vector.load %arg3[%c2_128, %c0_129, %c0_130] : memref<64x16x128xf32, #tpu.memory_space<vmem>>, vector<1x16x128xf32>
    %261 = vector.shape_cast %260 : vector<1x16x128xf32> to vector<16x128xf32>
    %262 = arith.subf %261, %229 : vector<16x128xf32>
    %263 = math.exp %262 : vector<16x128xf32>
    %264 = arith.addf %250, %263 : vector<16x128xf32>
    %cst_131 = arith.constant 2.000000e+00 : f32
    %265 = vector.broadcast %cst_131 : f32 to vector<16x128xf32>
    %266 = arith.subf %182, %265 : vector<16x128xf32>
    %267 = math.absf %266 : vector<16x128xf32>
    %cst_132 = arith.constant 1.000000e+00 : f32
    %268 = vector.broadcast %cst_132 : f32 to vector<16x128xf32>
    %269 = arith.subf %268, %267 : vector<16x128xf32>
    %cst_133 = arith.constant 0.000000e+00 : f32
    %270 = vector.broadcast %cst_133 : f32 to vector<16x128xf32>
    %271 = arith.maximumf %269, %270 : vector<16x128xf32>
    %272 = arith.mulf %261, %271 : vector<16x128xf32>
    %273 = arith.addf %259, %272 : vector<16x128xf32>
    %c3_134 = arith.constant 3 : index
    %c0_135 = arith.constant 0 : index
    %c0_136 = arith.constant 0 : index
    %274 = vector.load %arg3[%c3_134, %c0_135, %c0_136] : memref<64x16x128xf32, #tpu.memory_space<vmem>>, vector<1x16x128xf32>
    %275 = vector.shape_cast %274 : vector<1x16x128xf32> to vector<16x128xf32>
    %276 = arith.subf %275, %229 : vector<16x128xf32>
    %277 = math.exp %276 : vector<16x128xf32>
    %278 = arith.addf %264, %277 : vector<16x128xf32>
    %cst_137 = arith.constant 3.000000e+00 : f32
    %279 = vector.broadcast %cst_137 : f32 to vector<16x128xf32>
    %280 = arith.subf %182, %279 : vector<16x128xf32>
    %281 = math.absf %280 : vector<16x128xf32>
    %cst_138 = arith.constant 1.000000e+00 : f32
    %282 = vector.broadcast %cst_138 : f32 to vector<16x128xf32>
    %283 = arith.subf %282, %281 : vector<16x128xf32>
    %cst_139 = arith.constant 0.000000e+00 : f32
    %284 = vector.broadcast %cst_139 : f32 to vector<16x128xf32>
    %285 = arith.maximumf %283, %284 : vector<16x128xf32>
    %286 = arith.mulf %275, %285 : vector<16x128xf32>
    %287 = arith.addf %273, %286 : vector<16x128xf32>
    %c4_140 = arith.constant 4 : index
    %c0_141 = arith.constant 0 : index
    %c0_142 = arith.constant 0 : index
    %288 = vector.load %arg3[%c4_140, %c0_141, %c0_142] : memref<64x16x128xf32, #tpu.memory_space<vmem>>, vector<1x16x128xf32>
    %289 = vector.shape_cast %288 : vector<1x16x128xf32> to vector<16x128xf32>
    %290 = arith.subf %289, %229 : vector<16x128xf32>
    %291 = math.exp %290 : vector<16x128xf32>
    %292 = arith.addf %278, %291 : vector<16x128xf32>
    %cst_143 = arith.constant 4.000000e+00 : f32
    %293 = vector.broadcast %cst_143 : f32 to vector<16x128xf32>
    %294 = arith.subf %182, %293 : vector<16x128xf32>
    %295 = math.absf %294 : vector<16x128xf32>
    %cst_144 = arith.constant 1.000000e+00 : f32
    %296 = vector.broadcast %cst_144 : f32 to vector<16x128xf32>
    %297 = arith.subf %296, %295 : vector<16x128xf32>
    %cst_145 = arith.constant 0.000000e+00 : f32
    %298 = vector.broadcast %cst_145 : f32 to vector<16x128xf32>
    %299 = arith.maximumf %297, %298 : vector<16x128xf32>
    %300 = arith.mulf %289, %299 : vector<16x128xf32>
    %301 = arith.addf %287, %300 : vector<16x128xf32>
    %c5_146 = arith.constant 5 : index
    %c0_147 = arith.constant 0 : index
    %c0_148 = arith.constant 0 : index
    %302 = vector.load %arg3[%c5_146, %c0_147, %c0_148] : memref<64x16x128xf32, #tpu.memory_space<vmem>>, vector<1x16x128xf32>
    %303 = vector.shape_cast %302 : vector<1x16x128xf32> to vector<16x128xf32>
    %304 = arith.subf %303, %229 : vector<16x128xf32>
    %305 = math.exp %304 : vector<16x128xf32>
    %306 = arith.addf %292, %305 : vector<16x128xf32>
    %cst_149 = arith.constant 5.000000e+00 : f32
    %307 = vector.broadcast %cst_149 : f32 to vector<16x128xf32>
    %308 = arith.subf %182, %307 : vector<16x128xf32>
    %309 = math.absf %308 : vector<16x128xf32>
    %cst_150 = arith.constant 1.000000e+00 : f32
    %310 = vector.broadcast %cst_150 : f32 to vector<16x128xf32>
    %311 = arith.subf %310, %309 : vector<16x128xf32>
    %cst_151 = arith.constant 0.000000e+00 : f32
    %312 = vector.broadcast %cst_151 : f32 to vector<16x128xf32>
    %313 = arith.maximumf %311, %312 : vector<16x128xf32>
    %314 = arith.mulf %303, %313 : vector<16x128xf32>
    %315 = arith.addf %301, %314 : vector<16x128xf32>
    %c6_152 = arith.constant 6 : index
    %c0_153 = arith.constant 0 : index
    %c0_154 = arith.constant 0 : index
    %316 = vector.load %arg3[%c6_152, %c0_153, %c0_154] : memref<64x16x128xf32, #tpu.memory_space<vmem>>, vector<1x16x128xf32>
    %317 = vector.shape_cast %316 : vector<1x16x128xf32> to vector<16x128xf32>
    %318 = arith.subf %317, %229 : vector<16x128xf32>
    %319 = math.exp %318 : vector<16x128xf32>
    %320 = arith.addf %306, %319 : vector<16x128xf32>
    %cst_155 = arith.constant 6.000000e+00 : f32
    %321 = vector.broadcast %cst_155 : f32 to vector<16x128xf32>
    %322 = arith.subf %182, %321 : vector<16x128xf32>
    %323 = math.absf %322 : vector<16x128xf32>
    %cst_156 = arith.constant 1.000000e+00 : f32
    %324 = vector.broadcast %cst_156 : f32 to vector<16x128xf32>
    %325 = arith.subf %324, %323 : vector<16x128xf32>
    %cst_157 = arith.constant 0.000000e+00 : f32
    %326 = vector.broadcast %cst_157 : f32 to vector<16x128xf32>
    %327 = arith.maximumf %325, %326 : vector<16x128xf32>
    %328 = arith.mulf %317, %327 : vector<16x128xf32>
    %329 = arith.addf %315, %328 : vector<16x128xf32>
    %c7_158 = arith.constant 7 : index
    %c0_159 = arith.constant 0 : index
    %c0_160 = arith.constant 0 : index
    %330 = vector.load %arg3[%c7_158, %c0_159, %c0_160] : memref<64x16x128xf32, #tpu.memory_space<vmem>>, vector<1x16x128xf32>
    %331 = vector.shape_cast %330 : vector<1x16x128xf32> to vector<16x128xf32>
    %332 = arith.subf %331, %229 : vector<16x128xf32>
    %333 = math.exp %332 : vector<16x128xf32>
    %334 = arith.addf %320, %333 : vector<16x128xf32>
    %cst_161 = arith.constant 7.000000e+00 : f32
    %335 = vector.broadcast %cst_161 : f32 to vector<16x128xf32>
    %336 = arith.subf %182, %335 : vector<16x128xf32>
    %337 = math.absf %336 : vector<16x128xf32>
    %cst_162 = arith.constant 1.000000e+00 : f32
    %338 = vector.broadcast %cst_162 : f32 to vector<16x128xf32>
    %339 = arith.subf %338, %337 : vector<16x128xf32>
    %cst_163 = arith.constant 0.000000e+00 : f32
    %340 = vector.broadcast %cst_163 : f32 to vector<16x128xf32>
    %341 = arith.maximumf %339, %340 : vector<16x128xf32>
    %342 = arith.mulf %331, %341 : vector<16x128xf32>
    %343 = arith.addf %329, %342 : vector<16x128xf32>
    %c8_164 = arith.constant 8 : index
    %c0_165 = arith.constant 0 : index
    %c0_166 = arith.constant 0 : index
    %344 = vector.load %arg3[%c8_164, %c0_165, %c0_166] : memref<64x16x128xf32, #tpu.memory_space<vmem>>, vector<1x16x128xf32>
    %345 = vector.shape_cast %344 : vector<1x16x128xf32> to vector<16x128xf32>
    %346 = arith.subf %345, %229 : vector<16x128xf32>
    %347 = math.exp %346 : vector<16x128xf32>
    %348 = arith.addf %334, %347 : vector<16x128xf32>
    %cst_167 = arith.constant 8.000000e+00 : f32
    %349 = vector.broadcast %cst_167 : f32 to vector<16x128xf32>
    %350 = arith.subf %182, %349 : vector<16x128xf32>
    %351 = math.absf %350 : vector<16x128xf32>
    %cst_168 = arith.constant 1.000000e+00 : f32
    %352 = vector.broadcast %cst_168 : f32 to vector<16x128xf32>
    %353 = arith.subf %352, %351 : vector<16x128xf32>
    %cst_169 = arith.constant 0.000000e+00 : f32
    %354 = vector.broadcast %cst_169 : f32 to vector<16x128xf32>
    %355 = arith.maximumf %353, %354 : vector<16x128xf32>
    %356 = arith.mulf %345, %355 : vector<16x128xf32>
    %357 = arith.addf %343, %356 : vector<16x128xf32>
    %c9_170 = arith.constant 9 : index
    %c0_171 = arith.constant 0 : index
    %c0_172 = arith.constant 0 : index
    %358 = vector.load %arg3[%c9_170, %c0_171, %c0_172] : memref<64x16x128xf32, #tpu.memory_space<vmem>>, vector<1x16x128xf32>
    %359 = vector.shape_cast %358 : vector<1x16x128xf32> to vector<16x128xf32>
    %360 = arith.subf %359, %229 : vector<16x128xf32>
    %361 = math.exp %360 : vector<16x128xf32>
    %362 = arith.addf %348, %361 : vector<16x128xf32>
    %cst_173 = arith.constant 9.000000e+00 : f32
    %363 = vector.broadcast %cst_173 : f32 to vector<16x128xf32>
    %364 = arith.subf %182, %363 : vector<16x128xf32>
    %365 = math.absf %364 : vector<16x128xf32>
    %cst_174 = arith.constant 1.000000e+00 : f32
    %366 = vector.broadcast %cst_174 : f32 to vector<16x128xf32>
    %367 = arith.subf %366, %365 : vector<16x128xf32>
    %cst_175 = arith.constant 0.000000e+00 : f32
    %368 = vector.broadcast %cst_175 : f32 to vector<16x128xf32>
    %369 = arith.maximumf %367, %368 : vector<16x128xf32>
    %370 = arith.mulf %359, %369 : vector<16x128xf32>
    %371 = arith.addf %357, %370 : vector<16x128xf32>
    %c10_176 = arith.constant 10 : index
    %c0_177 = arith.constant 0 : index
    %c0_178 = arith.constant 0 : index
    %372 = vector.load %arg3[%c10_176, %c0_177, %c0_178] : memref<64x16x128xf32, #tpu.memory_space<vmem>>, vector<1x16x128xf32>
    %373 = vector.shape_cast %372 : vector<1x16x128xf32> to vector<16x128xf32>
    %374 = arith.subf %373, %229 : vector<16x128xf32>
    %375 = math.exp %374 : vector<16x128xf32>
    %376 = arith.addf %362, %375 : vector<16x128xf32>
    %cst_179 = arith.constant 1.000000e+01 : f32
    %377 = vector.broadcast %cst_179 : f32 to vector<16x128xf32>
    %378 = arith.subf %182, %377 : vector<16x128xf32>
    %379 = math.absf %378 : vector<16x128xf32>
    %cst_180 = arith.constant 1.000000e+00 : f32
    %380 = vector.broadcast %cst_180 : f32 to vector<16x128xf32>
    %381 = arith.subf %380, %379 : vector<16x128xf32>
    %cst_181 = arith.constant 0.000000e+00 : f32
    %382 = vector.broadcast %cst_181 : f32 to vector<16x128xf32>
    %383 = arith.maximumf %381, %382 : vector<16x128xf32>
    %384 = arith.mulf %373, %383 : vector<16x128xf32>
    %385 = arith.addf %371, %384 : vector<16x128xf32>
    %c11_182 = arith.constant 11 : index
    %c0_183 = arith.constant 0 : index
    %c0_184 = arith.constant 0 : index
    %386 = vector.load %arg3[%c11_182, %c0_183, %c0_184] : memref<64x16x128xf32, #tpu.memory_space<vmem>>, vector<1x16x128xf32>
    %387 = vector.shape_cast %386 : vector<1x16x128xf32> to vector<16x128xf32>
    %388 = arith.subf %387, %229 : vector<16x128xf32>
    %389 = math.exp %388 : vector<16x128xf32>
    %390 = arith.addf %376, %389 : vector<16x128xf32>
    %cst_185 = arith.constant 1.100000e+01 : f32
    %391 = vector.broadcast %cst_185 : f32 to vector<16x128xf32>
    %392 = arith.subf %182, %391 : vector<16x128xf32>
    %393 = math.absf %392 : vector<16x128xf32>
    %cst_186 = arith.constant 1.000000e+00 : f32
    %394 = vector.broadcast %cst_186 : f32 to vector<16x128xf32>
    %395 = arith.subf %394, %393 : vector<16x128xf32>
    %cst_187 = arith.constant 0.000000e+00 : f32
    %396 = vector.broadcast %cst_187 : f32 to vector<16x128xf32>
    %397 = arith.maximumf %395, %396 : vector<16x128xf32>
    %398 = arith.mulf %387, %397 : vector<16x128xf32>
    %399 = arith.addf %385, %398 : vector<16x128xf32>
    %c12_188 = arith.constant 12 : index
    %c0_189 = arith.constant 0 : index
    %c0_190 = arith.constant 0 : index
    %400 = vector.load %arg3[%c12_188, %c0_189, %c0_190] : memref<64x16x128xf32, #tpu.memory_space<vmem>>, vector<1x16x128xf32>
    %401 = vector.shape_cast %400 : vector<1x16x128xf32> to vector<16x128xf32>
    %402 = arith.subf %401, %229 : vector<16x128xf32>
    %403 = math.exp %402 : vector<16x128xf32>
    %404 = arith.addf %390, %403 : vector<16x128xf32>
    %cst_191 = arith.constant 1.200000e+01 : f32
    %405 = vector.broadcast %cst_191 : f32 to vector<16x128xf32>
    %406 = arith.subf %182, %405 : vector<16x128xf32>
    %407 = math.absf %406 : vector<16x128xf32>
    %cst_192 = arith.constant 1.000000e+00 : f32
    %408 = vector.broadcast %cst_192 : f32 to vector<16x128xf32>
    %409 = arith.subf %408, %407 : vector<16x128xf32>
    %cst_193 = arith.constant 0.000000e+00 : f32
    %410 = vector.broadcast %cst_193 : f32 to vector<16x128xf32>
    %411 = arith.maximumf %409, %410 : vector<16x128xf32>
    %412 = arith.mulf %401, %411 : vector<16x128xf32>
    %413 = arith.addf %399, %412 : vector<16x128xf32>
    %c13_194 = arith.constant 13 : index
    %c0_195 = arith.constant 0 : index
    %c0_196 = arith.constant 0 : index
    %414 = vector.load %arg3[%c13_194, %c0_195, %c0_196] : memref<64x16x128xf32, #tpu.memory_space<vmem>>, vector<1x16x128xf32>
    %415 = vector.shape_cast %414 : vector<1x16x128xf32> to vector<16x128xf32>
    %416 = arith.subf %415, %229 : vector<16x128xf32>
    %417 = math.exp %416 : vector<16x128xf32>
    %418 = arith.addf %404, %417 : vector<16x128xf32>
    %cst_197 = arith.constant 1.300000e+01 : f32
    %419 = vector.broadcast %cst_197 : f32 to vector<16x128xf32>
    %420 = arith.subf %182, %419 : vector<16x128xf32>
    %421 = math.absf %420 : vector<16x128xf32>
    %cst_198 = arith.constant 1.000000e+00 : f32
    %422 = vector.broadcast %cst_198 : f32 to vector<16x128xf32>
    %423 = arith.subf %422, %421 : vector<16x128xf32>
    %cst_199 = arith.constant 0.000000e+00 : f32
    %424 = vector.broadcast %cst_199 : f32 to vector<16x128xf32>
    %425 = arith.maximumf %423, %424 : vector<16x128xf32>
    %426 = arith.mulf %415, %425 : vector<16x128xf32>
    %427 = arith.addf %413, %426 : vector<16x128xf32>
    %c14_200 = arith.constant 14 : index
    %c0_201 = arith.constant 0 : index
    %c0_202 = arith.constant 0 : index
    %428 = vector.load %arg3[%c14_200, %c0_201, %c0_202] : memref<64x16x128xf32, #tpu.memory_space<vmem>>, vector<1x16x128xf32>
    %429 = vector.shape_cast %428 : vector<1x16x128xf32> to vector<16x128xf32>
    %430 = arith.subf %429, %229 : vector<16x128xf32>
    %431 = math.exp %430 : vector<16x128xf32>
    %432 = arith.addf %418, %431 : vector<16x128xf32>
    %cst_203 = arith.constant 1.400000e+01 : f32
    %433 = vector.broadcast %cst_203 : f32 to vector<16x128xf32>
    %434 = arith.subf %182, %433 : vector<16x128xf32>
    %435 = math.absf %434 : vector<16x128xf32>
    %cst_204 = arith.constant 1.000000e+00 : f32
    %436 = vector.broadcast %cst_204 : f32 to vector<16x128xf32>
    %437 = arith.subf %436, %435 : vector<16x128xf32>
    %cst_205 = arith.constant 0.000000e+00 : f32
    %438 = vector.broadcast %cst_205 : f32 to vector<16x128xf32>
    %439 = arith.maximumf %437, %438 : vector<16x128xf32>
    %440 = arith.mulf %429, %439 : vector<16x128xf32>
    %441 = arith.addf %427, %440 : vector<16x128xf32>
    %c15_206 = arith.constant 15 : index
    %c0_207 = arith.constant 0 : index
    %c0_208 = arith.constant 0 : index
    %442 = vector.load %arg3[%c15_206, %c0_207, %c0_208] : memref<64x16x128xf32, #tpu.memory_space<vmem>>, vector<1x16x128xf32>
    %443 = vector.shape_cast %442 : vector<1x16x128xf32> to vector<16x128xf32>
    %444 = arith.subf %443, %229 : vector<16x128xf32>
    %445 = math.exp %444 : vector<16x128xf32>
    %446 = arith.addf %432, %445 : vector<16x128xf32>
    %cst_209 = arith.constant 1.500000e+01 : f32
    %447 = vector.broadcast %cst_209 : f32 to vector<16x128xf32>
    %448 = arith.subf %182, %447 : vector<16x128xf32>
    %449 = math.absf %448 : vector<16x128xf32>
    %cst_210 = arith.constant 1.000000e+00 : f32
    %450 = vector.broadcast %cst_210 : f32 to vector<16x128xf32>
    %451 = arith.subf %450, %449 : vector<16x128xf32>
    %cst_211 = arith.constant 0.000000e+00 : f32
    %452 = vector.broadcast %cst_211 : f32 to vector<16x128xf32>
    %453 = arith.maximumf %451, %452 : vector<16x128xf32>
    %454 = arith.mulf %443, %453 : vector<16x128xf32>
    %455 = arith.addf %441, %454 : vector<16x128xf32>
    %456 = math.log %446 : vector<16x128xf32>
    %457 = arith.addf %229, %456 : vector<16x128xf32>
    %458 = arith.addf %173, %457 : vector<16x128xf32>
    %459 = arith.subf %458, %455 : vector<16x128xf32>
    %c9_212 = arith.constant 9 : index
    %c0_213 = arith.constant 0 : index
    %c0_214 = arith.constant 0 : index
    %460 = vector.load %arg2[%c9_212, %c0_213, %c0_214] : memref<11x16x128xf32, #tpu.memory_space<vmem>>, vector<1x16x128xf32>
    %461 = vector.shape_cast %460 : vector<1x16x128xf32> to vector<16x128xf32>
    %c5_215 = arith.constant 5 : index
    %c0_216 = arith.constant 0 : index
    %c0_217 = arith.constant 0 : index
    %462 = vector.load %arg2[%c5_215, %c0_216, %c0_217] : memref<11x16x128xf32, #tpu.memory_space<vmem>>, vector<1x16x128xf32>
    %463 = vector.shape_cast %462 : vector<1x16x128xf32> to vector<16x128xf32>
    %464 = arith.subf %461, %463 : vector<16x128xf32>
    %cst_218 = arith.constant 0.000000e+00 : f32
    %cst_219 = arith.constant 1.499000e+01 : f32
    %465 = vector.broadcast %cst_218 : f32 to vector<16x128xf32>
    %466 = arith.maximumf %465, %464 : vector<16x128xf32>
    %467 = vector.broadcast %cst_219 : f32 to vector<16x128xf32>
    %468 = arith.minimumf %467, %466 : vector<16x128xf32>
    %c16 = arith.constant 16 : index
    %c0_220 = arith.constant 0 : index
    %c0_221 = arith.constant 0 : index
    %469 = vector.load %arg3[%c16, %c0_220, %c0_221] : memref<64x16x128xf32, #tpu.memory_space<vmem>>, vector<1x16x128xf32>
    %470 = vector.shape_cast %469 : vector<1x16x128xf32> to vector<16x128xf32>
    %c17 = arith.constant 17 : index
    %c0_222 = arith.constant 0 : index
    %c0_223 = arith.constant 0 : index
    %471 = vector.load %arg3[%c17, %c0_222, %c0_223] : memref<64x16x128xf32, #tpu.memory_space<vmem>>, vector<1x16x128xf32>
    %472 = vector.shape_cast %471 : vector<1x16x128xf32> to vector<16x128xf32>
    %473 = arith.maximumf %470, %472 : vector<16x128xf32>
    %c18 = arith.constant 18 : index
    %c0_224 = arith.constant 0 : index
    %c0_225 = arith.constant 0 : index
    %474 = vector.load %arg3[%c18, %c0_224, %c0_225] : memref<64x16x128xf32, #tpu.memory_space<vmem>>, vector<1x16x128xf32>
    %475 = vector.shape_cast %474 : vector<1x16x128xf32> to vector<16x128xf32>
    %476 = arith.maximumf %473, %475 : vector<16x128xf32>
    %c19 = arith.constant 19 : index
    %c0_226 = arith.constant 0 : index
    %c0_227 = arith.constant 0 : index
    %477 = vector.load %arg3[%c19, %c0_226, %c0_227] : memref<64x16x128xf32, #tpu.memory_space<vmem>>, vector<1x16x128xf32>
    %478 = vector.shape_cast %477 : vector<1x16x128xf32> to vector<16x128xf32>
    %479 = arith.maximumf %476, %478 : vector<16x128xf32>
    %c20 = arith.constant 20 : index
    %c0_228 = arith.constant 0 : index
    %c0_229 = arith.constant 0 : index
    %480 = vector.load %arg3[%c20, %c0_228, %c0_229] : memref<64x16x128xf32, #tpu.memory_space<vmem>>, vector<1x16x128xf32>
    %481 = vector.shape_cast %480 : vector<1x16x128xf32> to vector<16x128xf32>
    %482 = arith.maximumf %479, %481 : vector<16x128xf32>
    %c21 = arith.constant 21 : index
    %c0_230 = arith.constant 0 : index
    %c0_231 = arith.constant 0 : index
    %483 = vector.load %arg3[%c21, %c0_230, %c0_231] : memref<64x16x128xf32, #tpu.memory_space<vmem>>, vector<1x16x128xf32>
    %484 = vector.shape_cast %483 : vector<1x16x128xf32> to vector<16x128xf32>
    %485 = arith.maximumf %482, %484 : vector<16x128xf32>
    %c22 = arith.constant 22 : index
    %c0_232 = arith.constant 0 : index
    %c0_233 = arith.constant 0 : index
    %486 = vector.load %arg3[%c22, %c0_232, %c0_233] : memref<64x16x128xf32, #tpu.memory_space<vmem>>, vector<1x16x128xf32>
    %487 = vector.shape_cast %486 : vector<1x16x128xf32> to vector<16x128xf32>
    %488 = arith.maximumf %485, %487 : vector<16x128xf32>
    %c23 = arith.constant 23 : index
    %c0_234 = arith.constant 0 : index
    %c0_235 = arith.constant 0 : index
    %489 = vector.load %arg3[%c23, %c0_234, %c0_235] : memref<64x16x128xf32, #tpu.memory_space<vmem>>, vector<1x16x128xf32>
    %490 = vector.shape_cast %489 : vector<1x16x128xf32> to vector<16x128xf32>
    %491 = arith.maximumf %488, %490 : vector<16x128xf32>
    %c24 = arith.constant 24 : index
    %c0_236 = arith.constant 0 : index
    %c0_237 = arith.constant 0 : index
    %492 = vector.load %arg3[%c24, %c0_236, %c0_237] : memref<64x16x128xf32, #tpu.memory_space<vmem>>, vector<1x16x128xf32>
    %493 = vector.shape_cast %492 : vector<1x16x128xf32> to vector<16x128xf32>
    %494 = arith.maximumf %491, %493 : vector<16x128xf32>
    %c25 = arith.constant 25 : index
    %c0_238 = arith.constant 0 : index
    %c0_239 = arith.constant 0 : index
    %495 = vector.load %arg3[%c25, %c0_238, %c0_239] : memref<64x16x128xf32, #tpu.memory_space<vmem>>, vector<1x16x128xf32>
    %496 = vector.shape_cast %495 : vector<1x16x128xf32> to vector<16x128xf32>
    %497 = arith.maximumf %494, %496 : vector<16x128xf32>
    %c26 = arith.constant 26 : index
    %c0_240 = arith.constant 0 : index
    %c0_241 = arith.constant 0 : index
    %498 = vector.load %arg3[%c26, %c0_240, %c0_241] : memref<64x16x128xf32, #tpu.memory_space<vmem>>, vector<1x16x128xf32>
    %499 = vector.shape_cast %498 : vector<1x16x128xf32> to vector<16x128xf32>
    %500 = arith.maximumf %497, %499 : vector<16x128xf32>
    %c27 = arith.constant 27 : index
    %c0_242 = arith.constant 0 : index
    %c0_243 = arith.constant 0 : index
    %501 = vector.load %arg3[%c27, %c0_242, %c0_243] : memref<64x16x128xf32, #tpu.memory_space<vmem>>, vector<1x16x128xf32>
    %502 = vector.shape_cast %501 : vector<1x16x128xf32> to vector<16x128xf32>
    %503 = arith.maximumf %500, %502 : vector<16x128xf32>
    %c28 = arith.constant 28 : index
    %c0_244 = arith.constant 0 : index
    %c0_245 = arith.constant 0 : index
    %504 = vector.load %arg3[%c28, %c0_244, %c0_245] : memref<64x16x128xf32, #tpu.memory_space<vmem>>, vector<1x16x128xf32>
    %505 = vector.shape_cast %504 : vector<1x16x128xf32> to vector<16x128xf32>
    %506 = arith.maximumf %503, %505 : vector<16x128xf32>
    %c29 = arith.constant 29 : index
    %c0_246 = arith.constant 0 : index
    %c0_247 = arith.constant 0 : index
    %507 = vector.load %arg3[%c29, %c0_246, %c0_247] : memref<64x16x128xf32, #tpu.memory_space<vmem>>, vector<1x16x128xf32>
    %508 = vector.shape_cast %507 : vector<1x16x128xf32> to vector<16x128xf32>
    %509 = arith.maximumf %506, %508 : vector<16x128xf32>
    %c30 = arith.constant 30 : index
    %c0_248 = arith.constant 0 : index
    %c0_249 = arith.constant 0 : index
    %510 = vector.load %arg3[%c30, %c0_248, %c0_249] : memref<64x16x128xf32, #tpu.memory_space<vmem>>, vector<1x16x128xf32>
    %511 = vector.shape_cast %510 : vector<1x16x128xf32> to vector<16x128xf32>
    %512 = arith.maximumf %509, %511 : vector<16x128xf32>
    %c31 = arith.constant 31 : index
    %c0_250 = arith.constant 0 : index
    %c0_251 = arith.constant 0 : index
    %513 = vector.load %arg3[%c31, %c0_250, %c0_251] : memref<64x16x128xf32, #tpu.memory_space<vmem>>, vector<1x16x128xf32>
    %514 = vector.shape_cast %513 : vector<1x16x128xf32> to vector<16x128xf32>
    %515 = arith.maximumf %512, %514 : vector<16x128xf32>
    %cst_252 = arith.constant 0.000000e+00 : f32
    %516 = vector.broadcast %cst_252 : f32 to vector<16x128xf32>
    %cst_253 = arith.constant 0.000000e+00 : f32
    %517 = vector.broadcast %cst_253 : f32 to vector<16x128xf32>
    %c16_254 = arith.constant 16 : index
    %c0_255 = arith.constant 0 : index
    %c0_256 = arith.constant 0 : index
    %518 = vector.load %arg3[%c16_254, %c0_255, %c0_256] : memref<64x16x128xf32, #tpu.memory_space<vmem>>, vector<1x16x128xf32>
    %519 = vector.shape_cast %518 : vector<1x16x128xf32> to vector<16x128xf32>
    %520 = arith.subf %519, %515 : vector<16x128xf32>
    %521 = math.exp %520 : vector<16x128xf32>
    %522 = arith.addf %516, %521 : vector<16x128xf32>
    %cst_257 = arith.constant 0.000000e+00 : f32
    %523 = vector.broadcast %cst_257 : f32 to vector<16x128xf32>
    %524 = arith.subf %468, %523 : vector<16x128xf32>
    %525 = math.absf %524 : vector<16x128xf32>
    %cst_258 = arith.constant 1.000000e+00 : f32
    %526 = vector.broadcast %cst_258 : f32 to vector<16x128xf32>
    %527 = arith.subf %526, %525 : vector<16x128xf32>
    %cst_259 = arith.constant 0.000000e+00 : f32
    %528 = vector.broadcast %cst_259 : f32 to vector<16x128xf32>
    %529 = arith.maximumf %527, %528 : vector<16x128xf32>
    %530 = arith.mulf %519, %529 : vector<16x128xf32>
    %531 = arith.addf %517, %530 : vector<16x128xf32>
    %c17_260 = arith.constant 17 : index
    %c0_261 = arith.constant 0 : index
    %c0_262 = arith.constant 0 : index
    %532 = vector.load %arg3[%c17_260, %c0_261, %c0_262] : memref<64x16x128xf32, #tpu.memory_space<vmem>>, vector<1x16x128xf32>
    %533 = vector.shape_cast %532 : vector<1x16x128xf32> to vector<16x128xf32>
    %534 = arith.subf %533, %515 : vector<16x128xf32>
    %535 = math.exp %534 : vector<16x128xf32>
    %536 = arith.addf %522, %535 : vector<16x128xf32>
    %cst_263 = arith.constant 1.000000e+00 : f32
    %537 = vector.broadcast %cst_263 : f32 to vector<16x128xf32>
    %538 = arith.subf %468, %537 : vector<16x128xf32>
    %539 = math.absf %538 : vector<16x128xf32>
    %cst_264 = arith.constant 1.000000e+00 : f32
    %540 = vector.broadcast %cst_264 : f32 to vector<16x128xf32>
    %541 = arith.subf %540, %539 : vector<16x128xf32>
    %cst_265 = arith.constant 0.000000e+00 : f32
    %542 = vector.broadcast %cst_265 : f32 to vector<16x128xf32>
    %543 = arith.maximumf %541, %542 : vector<16x128xf32>
    %544 = arith.mulf %533, %543 : vector<16x128xf32>
    %545 = arith.addf %531, %544 : vector<16x128xf32>
    %c18_266 = arith.constant 18 : index
    %c0_267 = arith.constant 0 : index
    %c0_268 = arith.constant 0 : index
    %546 = vector.load %arg3[%c18_266, %c0_267, %c0_268] : memref<64x16x128xf32, #tpu.memory_space<vmem>>, vector<1x16x128xf32>
    %547 = vector.shape_cast %546 : vector<1x16x128xf32> to vector<16x128xf32>
    %548 = arith.subf %547, %515 : vector<16x128xf32>
    %549 = math.exp %548 : vector<16x128xf32>
    %550 = arith.addf %536, %549 : vector<16x128xf32>
    %cst_269 = arith.constant 2.000000e+00 : f32
    %551 = vector.broadcast %cst_269 : f32 to vector<16x128xf32>
    %552 = arith.subf %468, %551 : vector<16x128xf32>
    %553 = math.absf %552 : vector<16x128xf32>
    %cst_270 = arith.constant 1.000000e+00 : f32
    %554 = vector.broadcast %cst_270 : f32 to vector<16x128xf32>
    %555 = arith.subf %554, %553 : vector<16x128xf32>
    %cst_271 = arith.constant 0.000000e+00 : f32
    %556 = vector.broadcast %cst_271 : f32 to vector<16x128xf32>
    %557 = arith.maximumf %555, %556 : vector<16x128xf32>
    %558 = arith.mulf %547, %557 : vector<16x128xf32>
    %559 = arith.addf %545, %558 : vector<16x128xf32>
    %c19_272 = arith.constant 19 : index
    %c0_273 = arith.constant 0 : index
    %c0_274 = arith.constant 0 : index
    %560 = vector.load %arg3[%c19_272, %c0_273, %c0_274] : memref<64x16x128xf32, #tpu.memory_space<vmem>>, vector<1x16x128xf32>
    %561 = vector.shape_cast %560 : vector<1x16x128xf32> to vector<16x128xf32>
    %562 = arith.subf %561, %515 : vector<16x128xf32>
    %563 = math.exp %562 : vector<16x128xf32>
    %564 = arith.addf %550, %563 : vector<16x128xf32>
    %cst_275 = arith.constant 3.000000e+00 : f32
    %565 = vector.broadcast %cst_275 : f32 to vector<16x128xf32>
    %566 = arith.subf %468, %565 : vector<16x128xf32>
    %567 = math.absf %566 : vector<16x128xf32>
    %cst_276 = arith.constant 1.000000e+00 : f32
    %568 = vector.broadcast %cst_276 : f32 to vector<16x128xf32>
    %569 = arith.subf %568, %567 : vector<16x128xf32>
    %cst_277 = arith.constant 0.000000e+00 : f32
    %570 = vector.broadcast %cst_277 : f32 to vector<16x128xf32>
    %571 = arith.maximumf %569, %570 : vector<16x128xf32>
    %572 = arith.mulf %561, %571 : vector<16x128xf32>
    %573 = arith.addf %559, %572 : vector<16x128xf32>
    %c20_278 = arith.constant 20 : index
    %c0_279 = arith.constant 0 : index
    %c0_280 = arith.constant 0 : index
    %574 = vector.load %arg3[%c20_278, %c0_279, %c0_280] : memref<64x16x128xf32, #tpu.memory_space<vmem>>, vector<1x16x128xf32>
    %575 = vector.shape_cast %574 : vector<1x16x128xf32> to vector<16x128xf32>
    %576 = arith.subf %575, %515 : vector<16x128xf32>
    %577 = math.exp %576 : vector<16x128xf32>
    %578 = arith.addf %564, %577 : vector<16x128xf32>
    %cst_281 = arith.constant 4.000000e+00 : f32
    %579 = vector.broadcast %cst_281 : f32 to vector<16x128xf32>
    %580 = arith.subf %468, %579 : vector<16x128xf32>
    %581 = math.absf %580 : vector<16x128xf32>
    %cst_282 = arith.constant 1.000000e+00 : f32
    %582 = vector.broadcast %cst_282 : f32 to vector<16x128xf32>
    %583 = arith.subf %582, %581 : vector<16x128xf32>
    %cst_283 = arith.constant 0.000000e+00 : f32
    %584 = vector.broadcast %cst_283 : f32 to vector<16x128xf32>
    %585 = arith.maximumf %583, %584 : vector<16x128xf32>
    %586 = arith.mulf %575, %585 : vector<16x128xf32>
    %587 = arith.addf %573, %586 : vector<16x128xf32>
    %c21_284 = arith.constant 21 : index
    %c0_285 = arith.constant 0 : index
    %c0_286 = arith.constant 0 : index
    %588 = vector.load %arg3[%c21_284, %c0_285, %c0_286] : memref<64x16x128xf32, #tpu.memory_space<vmem>>, vector<1x16x128xf32>
    %589 = vector.shape_cast %588 : vector<1x16x128xf32> to vector<16x128xf32>
    %590 = arith.subf %589, %515 : vector<16x128xf32>
    %591 = math.exp %590 : vector<16x128xf32>
    %592 = arith.addf %578, %591 : vector<16x128xf32>
    %cst_287 = arith.constant 5.000000e+00 : f32
    %593 = vector.broadcast %cst_287 : f32 to vector<16x128xf32>
    %594 = arith.subf %468, %593 : vector<16x128xf32>
    %595 = math.absf %594 : vector<16x128xf32>
    %cst_288 = arith.constant 1.000000e+00 : f32
    %596 = vector.broadcast %cst_288 : f32 to vector<16x128xf32>
    %597 = arith.subf %596, %595 : vector<16x128xf32>
    %cst_289 = arith.constant 0.000000e+00 : f32
    %598 = vector.broadcast %cst_289 : f32 to vector<16x128xf32>
    %599 = arith.maximumf %597, %598 : vector<16x128xf32>
    %600 = arith.mulf %589, %599 : vector<16x128xf32>
    %601 = arith.addf %587, %600 : vector<16x128xf32>
    %c22_290 = arith.constant 22 : index
    %c0_291 = arith.constant 0 : index
    %c0_292 = arith.constant 0 : index
    %602 = vector.load %arg3[%c22_290, %c0_291, %c0_292] : memref<64x16x128xf32, #tpu.memory_space<vmem>>, vector<1x16x128xf32>
    %603 = vector.shape_cast %602 : vector<1x16x128xf32> to vector<16x128xf32>
    %604 = arith.subf %603, %515 : vector<16x128xf32>
    %605 = math.exp %604 : vector<16x128xf32>
    %606 = arith.addf %592, %605 : vector<16x128xf32>
    %cst_293 = arith.constant 6.000000e+00 : f32
    %607 = vector.broadcast %cst_293 : f32 to vector<16x128xf32>
    %608 = arith.subf %468, %607 : vector<16x128xf32>
    %609 = math.absf %608 : vector<16x128xf32>
    %cst_294 = arith.constant 1.000000e+00 : f32
    %610 = vector.broadcast %cst_294 : f32 to vector<16x128xf32>
    %611 = arith.subf %610, %609 : vector<16x128xf32>
    %cst_295 = arith.constant 0.000000e+00 : f32
    %612 = vector.broadcast %cst_295 : f32 to vector<16x128xf32>
    %613 = arith.maximumf %611, %612 : vector<16x128xf32>
    %614 = arith.mulf %603, %613 : vector<16x128xf32>
    %615 = arith.addf %601, %614 : vector<16x128xf32>
    %c23_296 = arith.constant 23 : index
    %c0_297 = arith.constant 0 : index
    %c0_298 = arith.constant 0 : index
    %616 = vector.load %arg3[%c23_296, %c0_297, %c0_298] : memref<64x16x128xf32, #tpu.memory_space<vmem>>, vector<1x16x128xf32>
    %617 = vector.shape_cast %616 : vector<1x16x128xf32> to vector<16x128xf32>
    %618 = arith.subf %617, %515 : vector<16x128xf32>
    %619 = math.exp %618 : vector<16x128xf32>
    %620 = arith.addf %606, %619 : vector<16x128xf32>
    %cst_299 = arith.constant 7.000000e+00 : f32
    %621 = vector.broadcast %cst_299 : f32 to vector<16x128xf32>
    %622 = arith.subf %468, %621 : vector<16x128xf32>
    %623 = math.absf %622 : vector<16x128xf32>
    %cst_300 = arith.constant 1.000000e+00 : f32
    %624 = vector.broadcast %cst_300 : f32 to vector<16x128xf32>
    %625 = arith.subf %624, %623 : vector<16x128xf32>
    %cst_301 = arith.constant 0.000000e+00 : f32
    %626 = vector.broadcast %cst_301 : f32 to vector<16x128xf32>
    %627 = arith.maximumf %625, %626 : vector<16x128xf32>
    %628 = arith.mulf %617, %627 : vector<16x128xf32>
    %629 = arith.addf %615, %628 : vector<16x128xf32>
    %c24_302 = arith.constant 24 : index
    %c0_303 = arith.constant 0 : index
    %c0_304 = arith.constant 0 : index
    %630 = vector.load %arg3[%c24_302, %c0_303, %c0_304] : memref<64x16x128xf32, #tpu.memory_space<vmem>>, vector<1x16x128xf32>
    %631 = vector.shape_cast %630 : vector<1x16x128xf32> to vector<16x128xf32>
    %632 = arith.subf %631, %515 : vector<16x128xf32>
    %633 = math.exp %632 : vector<16x128xf32>
    %634 = arith.addf %620, %633 : vector<16x128xf32>
    %cst_305 = arith.constant 8.000000e+00 : f32
    %635 = vector.broadcast %cst_305 : f32 to vector<16x128xf32>
    %636 = arith.subf %468, %635 : vector<16x128xf32>
    %637 = math.absf %636 : vector<16x128xf32>
    %cst_306 = arith.constant 1.000000e+00 : f32
    %638 = vector.broadcast %cst_306 : f32 to vector<16x128xf32>
    %639 = arith.subf %638, %637 : vector<16x128xf32>
    %cst_307 = arith.constant 0.000000e+00 : f32
    %640 = vector.broadcast %cst_307 : f32 to vector<16x128xf32>
    %641 = arith.maximumf %639, %640 : vector<16x128xf32>
    %642 = arith.mulf %631, %641 : vector<16x128xf32>
    %643 = arith.addf %629, %642 : vector<16x128xf32>
    %c25_308 = arith.constant 25 : index
    %c0_309 = arith.constant 0 : index
    %c0_310 = arith.constant 0 : index
    %644 = vector.load %arg3[%c25_308, %c0_309, %c0_310] : memref<64x16x128xf32, #tpu.memory_space<vmem>>, vector<1x16x128xf32>
    %645 = vector.shape_cast %644 : vector<1x16x128xf32> to vector<16x128xf32>
    %646 = arith.subf %645, %515 : vector<16x128xf32>
    %647 = math.exp %646 : vector<16x128xf32>
    %648 = arith.addf %634, %647 : vector<16x128xf32>
    %cst_311 = arith.constant 9.000000e+00 : f32
    %649 = vector.broadcast %cst_311 : f32 to vector<16x128xf32>
    %650 = arith.subf %468, %649 : vector<16x128xf32>
    %651 = math.absf %650 : vector<16x128xf32>
    %cst_312 = arith.constant 1.000000e+00 : f32
    %652 = vector.broadcast %cst_312 : f32 to vector<16x128xf32>
    %653 = arith.subf %652, %651 : vector<16x128xf32>
    %cst_313 = arith.constant 0.000000e+00 : f32
    %654 = vector.broadcast %cst_313 : f32 to vector<16x128xf32>
    %655 = arith.maximumf %653, %654 : vector<16x128xf32>
    %656 = arith.mulf %645, %655 : vector<16x128xf32>
    %657 = arith.addf %643, %656 : vector<16x128xf32>
    %c26_314 = arith.constant 26 : index
    %c0_315 = arith.constant 0 : index
    %c0_316 = arith.constant 0 : index
    %658 = vector.load %arg3[%c26_314, %c0_315, %c0_316] : memref<64x16x128xf32, #tpu.memory_space<vmem>>, vector<1x16x128xf32>
    %659 = vector.shape_cast %658 : vector<1x16x128xf32> to vector<16x128xf32>
    %660 = arith.subf %659, %515 : vector<16x128xf32>
    %661 = math.exp %660 : vector<16x128xf32>
    %662 = arith.addf %648, %661 : vector<16x128xf32>
    %cst_317 = arith.constant 1.000000e+01 : f32
    %663 = vector.broadcast %cst_317 : f32 to vector<16x128xf32>
    %664 = arith.subf %468, %663 : vector<16x128xf32>
    %665 = math.absf %664 : vector<16x128xf32>
    %cst_318 = arith.constant 1.000000e+00 : f32
    %666 = vector.broadcast %cst_318 : f32 to vector<16x128xf32>
    %667 = arith.subf %666, %665 : vector<16x128xf32>
    %cst_319 = arith.constant 0.000000e+00 : f32
    %668 = vector.broadcast %cst_319 : f32 to vector<16x128xf32>
    %669 = arith.maximumf %667, %668 : vector<16x128xf32>
    %670 = arith.mulf %659, %669 : vector<16x128xf32>
    %671 = arith.addf %657, %670 : vector<16x128xf32>
    %c27_320 = arith.constant 27 : index
    %c0_321 = arith.constant 0 : index
    %c0_322 = arith.constant 0 : index
    %672 = vector.load %arg3[%c27_320, %c0_321, %c0_322] : memref<64x16x128xf32, #tpu.memory_space<vmem>>, vector<1x16x128xf32>
    %673 = vector.shape_cast %672 : vector<1x16x128xf32> to vector<16x128xf32>
    %674 = arith.subf %673, %515 : vector<16x128xf32>
    %675 = math.exp %674 : vector<16x128xf32>
    %676 = arith.addf %662, %675 : vector<16x128xf32>
    %cst_323 = arith.constant 1.100000e+01 : f32
    %677 = vector.broadcast %cst_323 : f32 to vector<16x128xf32>
    %678 = arith.subf %468, %677 : vector<16x128xf32>
    %679 = math.absf %678 : vector<16x128xf32>
    %cst_324 = arith.constant 1.000000e+00 : f32
    %680 = vector.broadcast %cst_324 : f32 to vector<16x128xf32>
    %681 = arith.subf %680, %679 : vector<16x128xf32>
    %cst_325 = arith.constant 0.000000e+00 : f32
    %682 = vector.broadcast %cst_325 : f32 to vector<16x128xf32>
    %683 = arith.maximumf %681, %682 : vector<16x128xf32>
    %684 = arith.mulf %673, %683 : vector<16x128xf32>
    %685 = arith.addf %671, %684 : vector<16x128xf32>
    %c28_326 = arith.constant 28 : index
    %c0_327 = arith.constant 0 : index
    %c0_328 = arith.constant 0 : index
    %686 = vector.load %arg3[%c28_326, %c0_327, %c0_328] : memref<64x16x128xf32, #tpu.memory_space<vmem>>, vector<1x16x128xf32>
    %687 = vector.shape_cast %686 : vector<1x16x128xf32> to vector<16x128xf32>
    %688 = arith.subf %687, %515 : vector<16x128xf32>
    %689 = math.exp %688 : vector<16x128xf32>
    %690 = arith.addf %676, %689 : vector<16x128xf32>
    %cst_329 = arith.constant 1.200000e+01 : f32
    %691 = vector.broadcast %cst_329 : f32 to vector<16x128xf32>
    %692 = arith.subf %468, %691 : vector<16x128xf32>
    %693 = math.absf %692 : vector<16x128xf32>
    %cst_330 = arith.constant 1.000000e+00 : f32
    %694 = vector.broadcast %cst_330 : f32 to vector<16x128xf32>
    %695 = arith.subf %694, %693 : vector<16x128xf32>
    %cst_331 = arith.constant 0.000000e+00 : f32
    %696 = vector.broadcast %cst_331 : f32 to vector<16x128xf32>
    %697 = arith.maximumf %695, %696 : vector<16x128xf32>
    %698 = arith.mulf %687, %697 : vector<16x128xf32>
    %699 = arith.addf %685, %698 : vector<16x128xf32>
    %c29_332 = arith.constant 29 : index
    %c0_333 = arith.constant 0 : index
    %c0_334 = arith.constant 0 : index
    %700 = vector.load %arg3[%c29_332, %c0_333, %c0_334] : memref<64x16x128xf32, #tpu.memory_space<vmem>>, vector<1x16x128xf32>
    %701 = vector.shape_cast %700 : vector<1x16x128xf32> to vector<16x128xf32>
    %702 = arith.subf %701, %515 : vector<16x128xf32>
    %703 = math.exp %702 : vector<16x128xf32>
    %704 = arith.addf %690, %703 : vector<16x128xf32>
    %cst_335 = arith.constant 1.300000e+01 : f32
    %705 = vector.broadcast %cst_335 : f32 to vector<16x128xf32>
    %706 = arith.subf %468, %705 : vector<16x128xf32>
    %707 = math.absf %706 : vector<16x128xf32>
    %cst_336 = arith.constant 1.000000e+00 : f32
    %708 = vector.broadcast %cst_336 : f32 to vector<16x128xf32>
    %709 = arith.subf %708, %707 : vector<16x128xf32>
    %cst_337 = arith.constant 0.000000e+00 : f32
    %710 = vector.broadcast %cst_337 : f32 to vector<16x128xf32>
    %711 = arith.maximumf %709, %710 : vector<16x128xf32>
    %712 = arith.mulf %701, %711 : vector<16x128xf32>
    %713 = arith.addf %699, %712 : vector<16x128xf32>
    %c30_338 = arith.constant 30 : index
    %c0_339 = arith.constant 0 : index
    %c0_340 = arith.constant 0 : index
    %714 = vector.load %arg3[%c30_338, %c0_339, %c0_340] : memref<64x16x128xf32, #tpu.memory_space<vmem>>, vector<1x16x128xf32>
    %715 = vector.shape_cast %714 : vector<1x16x128xf32> to vector<16x128xf32>
    %716 = arith.subf %715, %515 : vector<16x128xf32>
    %717 = math.exp %716 : vector<16x128xf32>
    %718 = arith.addf %704, %717 : vector<16x128xf32>
    %cst_341 = arith.constant 1.400000e+01 : f32
    %719 = vector.broadcast %cst_341 : f32 to vector<16x128xf32>
    %720 = arith.subf %468, %719 : vector<16x128xf32>
    %721 = math.absf %720 : vector<16x128xf32>
    %cst_342 = arith.constant 1.000000e+00 : f32
    %722 = vector.broadcast %cst_342 : f32 to vector<16x128xf32>
    %723 = arith.subf %722, %721 : vector<16x128xf32>
    %cst_343 = arith.constant 0.000000e+00 : f32
    %724 = vector.broadcast %cst_343 : f32 to vector<16x128xf32>
    %725 = arith.maximumf %723, %724 : vector<16x128xf32>
    %726 = arith.mulf %715, %725 : vector<16x128xf32>
    %727 = arith.addf %713, %726 : vector<16x128xf32>
    %c31_344 = arith.constant 31 : index
    %c0_345 = arith.constant 0 : index
    %c0_346 = arith.constant 0 : index
    %728 = vector.load %arg3[%c31_344, %c0_345, %c0_346] : memref<64x16x128xf32, #tpu.memory_space<vmem>>, vector<1x16x128xf32>
    %729 = vector.shape_cast %728 : vector<1x16x128xf32> to vector<16x128xf32>
    %730 = arith.subf %729, %515 : vector<16x128xf32>
    %731 = math.exp %730 : vector<16x128xf32>
    %732 = arith.addf %718, %731 : vector<16x128xf32>
    %cst_347 = arith.constant 1.500000e+01 : f32
    %733 = vector.broadcast %cst_347 : f32 to vector<16x128xf32>
    %734 = arith.subf %468, %733 : vector<16x128xf32>
    %735 = math.absf %734 : vector<16x128xf32>
    %cst_348 = arith.constant 1.000000e+00 : f32
    %736 = vector.broadcast %cst_348 : f32 to vector<16x128xf32>
    %737 = arith.subf %736, %735 : vector<16x128xf32>
    %cst_349 = arith.constant 0.000000e+00 : f32
    %738 = vector.broadcast %cst_349 : f32 to vector<16x128xf32>
    %739 = arith.maximumf %737, %738 : vector<16x128xf32>
    %740 = arith.mulf %729, %739 : vector<16x128xf32>
    %741 = arith.addf %727, %740 : vector<16x128xf32>
    %742 = math.log %732 : vector<16x128xf32>
    %743 = arith.addf %515, %742 : vector<16x128xf32>
    %744 = arith.addf %459, %743 : vector<16x128xf32>
    %745 = arith.subf %744, %741 : vector<16x128xf32>
    %c6_350 = arith.constant 6 : index
    %c0_351 = arith.constant 0 : index
    %c0_352 = arith.constant 0 : index
    %746 = vector.load %arg2[%c6_350, %c0_351, %c0_352] : memref<11x16x128xf32, #tpu.memory_space<vmem>>, vector<1x16x128xf32>
    %747 = vector.shape_cast %746 : vector<1x16x128xf32> to vector<16x128xf32>
    %c8_353 = arith.constant 8 : index
    %c0_354 = arith.constant 0 : index
    %c0_355 = arith.constant 0 : index
    %748 = vector.load %arg2[%c8_353, %c0_354, %c0_355] : memref<11x16x128xf32, #tpu.memory_space<vmem>>, vector<1x16x128xf32>
    %749 = vector.shape_cast %748 : vector<1x16x128xf32> to vector<16x128xf32>
    %750 = arith.subf %747, %749 : vector<16x128xf32>
    %cst_356 = arith.constant 0.000000e+00 : f32
    %cst_357 = arith.constant 1.499000e+01 : f32
    %751 = vector.broadcast %cst_356 : f32 to vector<16x128xf32>
    %752 = arith.maximumf %751, %750 : vector<16x128xf32>
    %753 = vector.broadcast %cst_357 : f32 to vector<16x128xf32>
    %754 = arith.minimumf %753, %752 : vector<16x128xf32>
    %c32 = arith.constant 32 : index
    %c0_358 = arith.constant 0 : index
    %c0_359 = arith.constant 0 : index
    %755 = vector.load %arg3[%c32, %c0_358, %c0_359] : memref<64x16x128xf32, #tpu.memory_space<vmem>>, vector<1x16x128xf32>
    %756 = vector.shape_cast %755 : vector<1x16x128xf32> to vector<16x128xf32>
    %c33 = arith.constant 33 : index
    %c0_360 = arith.constant 0 : index
    %c0_361 = arith.constant 0 : index
    %757 = vector.load %arg3[%c33, %c0_360, %c0_361] : memref<64x16x128xf32, #tpu.memory_space<vmem>>, vector<1x16x128xf32>
    %758 = vector.shape_cast %757 : vector<1x16x128xf32> to vector<16x128xf32>
    %759 = arith.maximumf %756, %758 : vector<16x128xf32>
    %c34 = arith.constant 34 : index
    %c0_362 = arith.constant 0 : index
    %c0_363 = arith.constant 0 : index
    %760 = vector.load %arg3[%c34, %c0_362, %c0_363] : memref<64x16x128xf32, #tpu.memory_space<vmem>>, vector<1x16x128xf32>
    %761 = vector.shape_cast %760 : vector<1x16x128xf32> to vector<16x128xf32>
    %762 = arith.maximumf %759, %761 : vector<16x128xf32>
    %c35 = arith.constant 35 : index
    %c0_364 = arith.constant 0 : index
    %c0_365 = arith.constant 0 : index
    %763 = vector.load %arg3[%c35, %c0_364, %c0_365] : memref<64x16x128xf32, #tpu.memory_space<vmem>>, vector<1x16x128xf32>
    %764 = vector.shape_cast %763 : vector<1x16x128xf32> to vector<16x128xf32>
    %765 = arith.maximumf %762, %764 : vector<16x128xf32>
    %c36 = arith.constant 36 : index
    %c0_366 = arith.constant 0 : index
    %c0_367 = arith.constant 0 : index
    %766 = vector.load %arg3[%c36, %c0_366, %c0_367] : memref<64x16x128xf32, #tpu.memory_space<vmem>>, vector<1x16x128xf32>
    %767 = vector.shape_cast %766 : vector<1x16x128xf32> to vector<16x128xf32>
    %768 = arith.maximumf %765, %767 : vector<16x128xf32>
    %c37 = arith.constant 37 : index
    %c0_368 = arith.constant 0 : index
    %c0_369 = arith.constant 0 : index
    %769 = vector.load %arg3[%c37, %c0_368, %c0_369] : memref<64x16x128xf32, #tpu.memory_space<vmem>>, vector<1x16x128xf32>
    %770 = vector.shape_cast %769 : vector<1x16x128xf32> to vector<16x128xf32>
    %771 = arith.maximumf %768, %770 : vector<16x128xf32>
    %c38 = arith.constant 38 : index
    %c0_370 = arith.constant 0 : index
    %c0_371 = arith.constant 0 : index
    %772 = vector.load %arg3[%c38, %c0_370, %c0_371] : memref<64x16x128xf32, #tpu.memory_space<vmem>>, vector<1x16x128xf32>
    %773 = vector.shape_cast %772 : vector<1x16x128xf32> to vector<16x128xf32>
    %774 = arith.maximumf %771, %773 : vector<16x128xf32>
    %c39 = arith.constant 39 : index
    %c0_372 = arith.constant 0 : index
    %c0_373 = arith.constant 0 : index
    %775 = vector.load %arg3[%c39, %c0_372, %c0_373] : memref<64x16x128xf32, #tpu.memory_space<vmem>>, vector<1x16x128xf32>
    %776 = vector.shape_cast %775 : vector<1x16x128xf32> to vector<16x128xf32>
    %777 = arith.maximumf %774, %776 : vector<16x128xf32>
    %c40 = arith.constant 40 : index
    %c0_374 = arith.constant 0 : index
    %c0_375 = arith.constant 0 : index
    %778 = vector.load %arg3[%c40, %c0_374, %c0_375] : memref<64x16x128xf32, #tpu.memory_space<vmem>>, vector<1x16x128xf32>
    %779 = vector.shape_cast %778 : vector<1x16x128xf32> to vector<16x128xf32>
    %780 = arith.maximumf %777, %779 : vector<16x128xf32>
    %c41 = arith.constant 41 : index
    %c0_376 = arith.constant 0 : index
    %c0_377 = arith.constant 0 : index
    %781 = vector.load %arg3[%c41, %c0_376, %c0_377] : memref<64x16x128xf32, #tpu.memory_space<vmem>>, vector<1x16x128xf32>
    %782 = vector.shape_cast %781 : vector<1x16x128xf32> to vector<16x128xf32>
    %783 = arith.maximumf %780, %782 : vector<16x128xf32>
    %c42 = arith.constant 42 : index
    %c0_378 = arith.constant 0 : index
    %c0_379 = arith.constant 0 : index
    %784 = vector.load %arg3[%c42, %c0_378, %c0_379] : memref<64x16x128xf32, #tpu.memory_space<vmem>>, vector<1x16x128xf32>
    %785 = vector.shape_cast %784 : vector<1x16x128xf32> to vector<16x128xf32>
    %786 = arith.maximumf %783, %785 : vector<16x128xf32>
    %c43 = arith.constant 43 : index
    %c0_380 = arith.constant 0 : index
    %c0_381 = arith.constant 0 : index
    %787 = vector.load %arg3[%c43, %c0_380, %c0_381] : memref<64x16x128xf32, #tpu.memory_space<vmem>>, vector<1x16x128xf32>
    %788 = vector.shape_cast %787 : vector<1x16x128xf32> to vector<16x128xf32>
    %789 = arith.maximumf %786, %788 : vector<16x128xf32>
    %c44 = arith.constant 44 : index
    %c0_382 = arith.constant 0 : index
    %c0_383 = arith.constant 0 : index
    %790 = vector.load %arg3[%c44, %c0_382, %c0_383] : memref<64x16x128xf32, #tpu.memory_space<vmem>>, vector<1x16x128xf32>
    %791 = vector.shape_cast %790 : vector<1x16x128xf32> to vector<16x128xf32>
    %792 = arith.maximumf %789, %791 : vector<16x128xf32>
    %c45 = arith.constant 45 : index
    %c0_384 = arith.constant 0 : index
    %c0_385 = arith.constant 0 : index
    %793 = vector.load %arg3[%c45, %c0_384, %c0_385] : memref<64x16x128xf32, #tpu.memory_space<vmem>>, vector<1x16x128xf32>
    %794 = vector.shape_cast %793 : vector<1x16x128xf32> to vector<16x128xf32>
    %795 = arith.maximumf %792, %794 : vector<16x128xf32>
    %c46 = arith.constant 46 : index
    %c0_386 = arith.constant 0 : index
    %c0_387 = arith.constant 0 : index
    %796 = vector.load %arg3[%c46, %c0_386, %c0_387] : memref<64x16x128xf32, #tpu.memory_space<vmem>>, vector<1x16x128xf32>
    %797 = vector.shape_cast %796 : vector<1x16x128xf32> to vector<16x128xf32>
    %798 = arith.maximumf %795, %797 : vector<16x128xf32>
    %c47 = arith.constant 47 : index
    %c0_388 = arith.constant 0 : index
    %c0_389 = arith.constant 0 : index
    %799 = vector.load %arg3[%c47, %c0_388, %c0_389] : memref<64x16x128xf32, #tpu.memory_space<vmem>>, vector<1x16x128xf32>
    %800 = vector.shape_cast %799 : vector<1x16x128xf32> to vector<16x128xf32>
    %801 = arith.maximumf %798, %800 : vector<16x128xf32>
    %cst_390 = arith.constant 0.000000e+00 : f32
    %802 = vector.broadcast %cst_390 : f32 to vector<16x128xf32>
    %cst_391 = arith.constant 0.000000e+00 : f32
    %803 = vector.broadcast %cst_391 : f32 to vector<16x128xf32>
    %c32_392 = arith.constant 32 : index
    %c0_393 = arith.constant 0 : index
    %c0_394 = arith.constant 0 : index
    %804 = vector.load %arg3[%c32_392, %c0_393, %c0_394] : memref<64x16x128xf32, #tpu.memory_space<vmem>>, vector<1x16x128xf32>
    %805 = vector.shape_cast %804 : vector<1x16x128xf32> to vector<16x128xf32>
    %806 = arith.subf %805, %801 : vector<16x128xf32>
    %807 = math.exp %806 : vector<16x128xf32>
    %808 = arith.addf %802, %807 : vector<16x128xf32>
    %cst_395 = arith.constant 0.000000e+00 : f32
    %809 = vector.broadcast %cst_395 : f32 to vector<16x128xf32>
    %810 = arith.subf %754, %809 : vector<16x128xf32>
    %811 = math.absf %810 : vector<16x128xf32>
    %cst_396 = arith.constant 1.000000e+00 : f32
    %812 = vector.broadcast %cst_396 : f32 to vector<16x128xf32>
    %813 = arith.subf %812, %811 : vector<16x128xf32>
    %cst_397 = arith.constant 0.000000e+00 : f32
    %814 = vector.broadcast %cst_397 : f32 to vector<16x128xf32>
    %815 = arith.maximumf %813, %814 : vector<16x128xf32>
    %816 = arith.mulf %805, %815 : vector<16x128xf32>
    %817 = arith.addf %803, %816 : vector<16x128xf32>
    %c33_398 = arith.constant 33 : index
    %c0_399 = arith.constant 0 : index
    %c0_400 = arith.constant 0 : index
    %818 = vector.load %arg3[%c33_398, %c0_399, %c0_400] : memref<64x16x128xf32, #tpu.memory_space<vmem>>, vector<1x16x128xf32>
    %819 = vector.shape_cast %818 : vector<1x16x128xf32> to vector<16x128xf32>
    %820 = arith.subf %819, %801 : vector<16x128xf32>
    %821 = math.exp %820 : vector<16x128xf32>
    %822 = arith.addf %808, %821 : vector<16x128xf32>
    %cst_401 = arith.constant 1.000000e+00 : f32
    %823 = vector.broadcast %cst_401 : f32 to vector<16x128xf32>
    %824 = arith.subf %754, %823 : vector<16x128xf32>
    %825 = math.absf %824 : vector<16x128xf32>
    %cst_402 = arith.constant 1.000000e+00 : f32
    %826 = vector.broadcast %cst_402 : f32 to vector<16x128xf32>
    %827 = arith.subf %826, %825 : vector<16x128xf32>
    %cst_403 = arith.constant 0.000000e+00 : f32
    %828 = vector.broadcast %cst_403 : f32 to vector<16x128xf32>
    %829 = arith.maximumf %827, %828 : vector<16x128xf32>
    %830 = arith.mulf %819, %829 : vector<16x128xf32>
    %831 = arith.addf %817, %830 : vector<16x128xf32>
    %c34_404 = arith.constant 34 : index
    %c0_405 = arith.constant 0 : index
    %c0_406 = arith.constant 0 : index
    %832 = vector.load %arg3[%c34_404, %c0_405, %c0_406] : memref<64x16x128xf32, #tpu.memory_space<vmem>>, vector<1x16x128xf32>
    %833 = vector.shape_cast %832 : vector<1x16x128xf32> to vector<16x128xf32>
    %834 = arith.subf %833, %801 : vector<16x128xf32>
    %835 = math.exp %834 : vector<16x128xf32>
    %836 = arith.addf %822, %835 : vector<16x128xf32>
    %cst_407 = arith.constant 2.000000e+00 : f32
    %837 = vector.broadcast %cst_407 : f32 to vector<16x128xf32>
    %838 = arith.subf %754, %837 : vector<16x128xf32>
    %839 = math.absf %838 : vector<16x128xf32>
    %cst_408 = arith.constant 1.000000e+00 : f32
    %840 = vector.broadcast %cst_408 : f32 to vector<16x128xf32>
    %841 = arith.subf %840, %839 : vector<16x128xf32>
    %cst_409 = arith.constant 0.000000e+00 : f32
    %842 = vector.broadcast %cst_409 : f32 to vector<16x128xf32>
    %843 = arith.maximumf %841, %842 : vector<16x128xf32>
    %844 = arith.mulf %833, %843 : vector<16x128xf32>
    %845 = arith.addf %831, %844 : vector<16x128xf32>
    %c35_410 = arith.constant 35 : index
    %c0_411 = arith.constant 0 : index
    %c0_412 = arith.constant 0 : index
    %846 = vector.load %arg3[%c35_410, %c0_411, %c0_412] : memref<64x16x128xf32, #tpu.memory_space<vmem>>, vector<1x16x128xf32>
    %847 = vector.shape_cast %846 : vector<1x16x128xf32> to vector<16x128xf32>
    %848 = arith.subf %847, %801 : vector<16x128xf32>
    %849 = math.exp %848 : vector<16x128xf32>
    %850 = arith.addf %836, %849 : vector<16x128xf32>
    %cst_413 = arith.constant 3.000000e+00 : f32
    %851 = vector.broadcast %cst_413 : f32 to vector<16x128xf32>
    %852 = arith.subf %754, %851 : vector<16x128xf32>
    %853 = math.absf %852 : vector<16x128xf32>
    %cst_414 = arith.constant 1.000000e+00 : f32
    %854 = vector.broadcast %cst_414 : f32 to vector<16x128xf32>
    %855 = arith.subf %854, %853 : vector<16x128xf32>
    %cst_415 = arith.constant 0.000000e+00 : f32
    %856 = vector.broadcast %cst_415 : f32 to vector<16x128xf32>
    %857 = arith.maximumf %855, %856 : vector<16x128xf32>
    %858 = arith.mulf %847, %857 : vector<16x128xf32>
    %859 = arith.addf %845, %858 : vector<16x128xf32>
    %c36_416 = arith.constant 36 : index
    %c0_417 = arith.constant 0 : index
    %c0_418 = arith.constant 0 : index
    %860 = vector.load %arg3[%c36_416, %c0_417, %c0_418] : memref<64x16x128xf32, #tpu.memory_space<vmem>>, vector<1x16x128xf32>
    %861 = vector.shape_cast %860 : vector<1x16x128xf32> to vector<16x128xf32>
    %862 = arith.subf %861, %801 : vector<16x128xf32>
    %863 = math.exp %862 : vector<16x128xf32>
    %864 = arith.addf %850, %863 : vector<16x128xf32>
    %cst_419 = arith.constant 4.000000e+00 : f32
    %865 = vector.broadcast %cst_419 : f32 to vector<16x128xf32>
    %866 = arith.subf %754, %865 : vector<16x128xf32>
    %867 = math.absf %866 : vector<16x128xf32>
    %cst_420 = arith.constant 1.000000e+00 : f32
    %868 = vector.broadcast %cst_420 : f32 to vector<16x128xf32>
    %869 = arith.subf %868, %867 : vector<16x128xf32>
    %cst_421 = arith.constant 0.000000e+00 : f32
    %870 = vector.broadcast %cst_421 : f32 to vector<16x128xf32>
    %871 = arith.maximumf %869, %870 : vector<16x128xf32>
    %872 = arith.mulf %861, %871 : vector<16x128xf32>
    %873 = arith.addf %859, %872 : vector<16x128xf32>
    %c37_422 = arith.constant 37 : index
    %c0_423 = arith.constant 0 : index
    %c0_424 = arith.constant 0 : index
    %874 = vector.load %arg3[%c37_422, %c0_423, %c0_424] : memref<64x16x128xf32, #tpu.memory_space<vmem>>, vector<1x16x128xf32>
    %875 = vector.shape_cast %874 : vector<1x16x128xf32> to vector<16x128xf32>
    %876 = arith.subf %875, %801 : vector<16x128xf32>
    %877 = math.exp %876 : vector<16x128xf32>
    %878 = arith.addf %864, %877 : vector<16x128xf32>
    %cst_425 = arith.constant 5.000000e+00 : f32
    %879 = vector.broadcast %cst_425 : f32 to vector<16x128xf32>
    %880 = arith.subf %754, %879 : vector<16x128xf32>
    %881 = math.absf %880 : vector<16x128xf32>
    %cst_426 = arith.constant 1.000000e+00 : f32
    %882 = vector.broadcast %cst_426 : f32 to vector<16x128xf32>
    %883 = arith.subf %882, %881 : vector<16x128xf32>
    %cst_427 = arith.constant 0.000000e+00 : f32
    %884 = vector.broadcast %cst_427 : f32 to vector<16x128xf32>
    %885 = arith.maximumf %883, %884 : vector<16x128xf32>
    %886 = arith.mulf %875, %885 : vector<16x128xf32>
    %887 = arith.addf %873, %886 : vector<16x128xf32>
    %c38_428 = arith.constant 38 : index
    %c0_429 = arith.constant 0 : index
    %c0_430 = arith.constant 0 : index
    %888 = vector.load %arg3[%c38_428, %c0_429, %c0_430] : memref<64x16x128xf32, #tpu.memory_space<vmem>>, vector<1x16x128xf32>
    %889 = vector.shape_cast %888 : vector<1x16x128xf32> to vector<16x128xf32>
    %890 = arith.subf %889, %801 : vector<16x128xf32>
    %891 = math.exp %890 : vector<16x128xf32>
    %892 = arith.addf %878, %891 : vector<16x128xf32>
    %cst_431 = arith.constant 6.000000e+00 : f32
    %893 = vector.broadcast %cst_431 : f32 to vector<16x128xf32>
    %894 = arith.subf %754, %893 : vector<16x128xf32>
    %895 = math.absf %894 : vector<16x128xf32>
    %cst_432 = arith.constant 1.000000e+00 : f32
    %896 = vector.broadcast %cst_432 : f32 to vector<16x128xf32>
    %897 = arith.subf %896, %895 : vector<16x128xf32>
    %cst_433 = arith.constant 0.000000e+00 : f32
    %898 = vector.broadcast %cst_433 : f32 to vector<16x128xf32>
    %899 = arith.maximumf %897, %898 : vector<16x128xf32>
    %900 = arith.mulf %889, %899 : vector<16x128xf32>
    %901 = arith.addf %887, %900 : vector<16x128xf32>
    %c39_434 = arith.constant 39 : index
    %c0_435 = arith.constant 0 : index
    %c0_436 = arith.constant 0 : index
    %902 = vector.load %arg3[%c39_434, %c0_435, %c0_436] : memref<64x16x128xf32, #tpu.memory_space<vmem>>, vector<1x16x128xf32>
    %903 = vector.shape_cast %902 : vector<1x16x128xf32> to vector<16x128xf32>
    %904 = arith.subf %903, %801 : vector<16x128xf32>
    %905 = math.exp %904 : vector<16x128xf32>
    %906 = arith.addf %892, %905 : vector<16x128xf32>
    %cst_437 = arith.constant 7.000000e+00 : f32
    %907 = vector.broadcast %cst_437 : f32 to vector<16x128xf32>
    %908 = arith.subf %754, %907 : vector<16x128xf32>
    %909 = math.absf %908 : vector<16x128xf32>
    %cst_438 = arith.constant 1.000000e+00 : f32
    %910 = vector.broadcast %cst_438 : f32 to vector<16x128xf32>
    %911 = arith.subf %910, %909 : vector<16x128xf32>
    %cst_439 = arith.constant 0.000000e+00 : f32
    %912 = vector.broadcast %cst_439 : f32 to vector<16x128xf32>
    %913 = arith.maximumf %911, %912 : vector<16x128xf32>
    %914 = arith.mulf %903, %913 : vector<16x128xf32>
    %915 = arith.addf %901, %914 : vector<16x128xf32>
    %c40_440 = arith.constant 40 : index
    %c0_441 = arith.constant 0 : index
    %c0_442 = arith.constant 0 : index
    %916 = vector.load %arg3[%c40_440, %c0_441, %c0_442] : memref<64x16x128xf32, #tpu.memory_space<vmem>>, vector<1x16x128xf32>
    %917 = vector.shape_cast %916 : vector<1x16x128xf32> to vector<16x128xf32>
    %918 = arith.subf %917, %801 : vector<16x128xf32>
    %919 = math.exp %918 : vector<16x128xf32>
    %920 = arith.addf %906, %919 : vector<16x128xf32>
    %cst_443 = arith.constant 8.000000e+00 : f32
    %921 = vector.broadcast %cst_443 : f32 to vector<16x128xf32>
    %922 = arith.subf %754, %921 : vector<16x128xf32>
    %923 = math.absf %922 : vector<16x128xf32>
    %cst_444 = arith.constant 1.000000e+00 : f32
    %924 = vector.broadcast %cst_444 : f32 to vector<16x128xf32>
    %925 = arith.subf %924, %923 : vector<16x128xf32>
    %cst_445 = arith.constant 0.000000e+00 : f32
    %926 = vector.broadcast %cst_445 : f32 to vector<16x128xf32>
    %927 = arith.maximumf %925, %926 : vector<16x128xf32>
    %928 = arith.mulf %917, %927 : vector<16x128xf32>
    %929 = arith.addf %915, %928 : vector<16x128xf32>
    %c41_446 = arith.constant 41 : index
    %c0_447 = arith.constant 0 : index
    %c0_448 = arith.constant 0 : index
    %930 = vector.load %arg3[%c41_446, %c0_447, %c0_448] : memref<64x16x128xf32, #tpu.memory_space<vmem>>, vector<1x16x128xf32>
    %931 = vector.shape_cast %930 : vector<1x16x128xf32> to vector<16x128xf32>
    %932 = arith.subf %931, %801 : vector<16x128xf32>
    %933 = math.exp %932 : vector<16x128xf32>
    %934 = arith.addf %920, %933 : vector<16x128xf32>
    %cst_449 = arith.constant 9.000000e+00 : f32
    %935 = vector.broadcast %cst_449 : f32 to vector<16x128xf32>
    %936 = arith.subf %754, %935 : vector<16x128xf32>
    %937 = math.absf %936 : vector<16x128xf32>
    %cst_450 = arith.constant 1.000000e+00 : f32
    %938 = vector.broadcast %cst_450 : f32 to vector<16x128xf32>
    %939 = arith.subf %938, %937 : vector<16x128xf32>
    %cst_451 = arith.constant 0.000000e+00 : f32
    %940 = vector.broadcast %cst_451 : f32 to vector<16x128xf32>
    %941 = arith.maximumf %939, %940 : vector<16x128xf32>
    %942 = arith.mulf %931, %941 : vector<16x128xf32>
    %943 = arith.addf %929, %942 : vector<16x128xf32>
    %c42_452 = arith.constant 42 : index
    %c0_453 = arith.constant 0 : index
    %c0_454 = arith.constant 0 : index
    %944 = vector.load %arg3[%c42_452, %c0_453, %c0_454] : memref<64x16x128xf32, #tpu.memory_space<vmem>>, vector<1x16x128xf32>
    %945 = vector.shape_cast %944 : vector<1x16x128xf32> to vector<16x128xf32>
    %946 = arith.subf %945, %801 : vector<16x128xf32>
    %947 = math.exp %946 : vector<16x128xf32>
    %948 = arith.addf %934, %947 : vector<16x128xf32>
    %cst_455 = arith.constant 1.000000e+01 : f32
    %949 = vector.broadcast %cst_455 : f32 to vector<16x128xf32>
    %950 = arith.subf %754, %949 : vector<16x128xf32>
    %951 = math.absf %950 : vector<16x128xf32>
    %cst_456 = arith.constant 1.000000e+00 : f32
    %952 = vector.broadcast %cst_456 : f32 to vector<16x128xf32>
    %953 = arith.subf %952, %951 : vector<16x128xf32>
    %cst_457 = arith.constant 0.000000e+00 : f32
    %954 = vector.broadcast %cst_457 : f32 to vector<16x128xf32>
    %955 = arith.maximumf %953, %954 : vector<16x128xf32>
    %956 = arith.mulf %945, %955 : vector<16x128xf32>
    %957 = arith.addf %943, %956 : vector<16x128xf32>
    %c43_458 = arith.constant 43 : index
    %c0_459 = arith.constant 0 : index
    %c0_460 = arith.constant 0 : index
    %958 = vector.load %arg3[%c43_458, %c0_459, %c0_460] : memref<64x16x128xf32, #tpu.memory_space<vmem>>, vector<1x16x128xf32>
    %959 = vector.shape_cast %958 : vector<1x16x128xf32> to vector<16x128xf32>
    %960 = arith.subf %959, %801 : vector<16x128xf32>
    %961 = math.exp %960 : vector<16x128xf32>
    %962 = arith.addf %948, %961 : vector<16x128xf32>
    %cst_461 = arith.constant 1.100000e+01 : f32
    %963 = vector.broadcast %cst_461 : f32 to vector<16x128xf32>
    %964 = arith.subf %754, %963 : vector<16x128xf32>
    %965 = math.absf %964 : vector<16x128xf32>
    %cst_462 = arith.constant 1.000000e+00 : f32
    %966 = vector.broadcast %cst_462 : f32 to vector<16x128xf32>
    %967 = arith.subf %966, %965 : vector<16x128xf32>
    %cst_463 = arith.constant 0.000000e+00 : f32
    %968 = vector.broadcast %cst_463 : f32 to vector<16x128xf32>
    %969 = arith.maximumf %967, %968 : vector<16x128xf32>
    %970 = arith.mulf %959, %969 : vector<16x128xf32>
    %971 = arith.addf %957, %970 : vector<16x128xf32>
    %c44_464 = arith.constant 44 : index
    %c0_465 = arith.constant 0 : index
    %c0_466 = arith.constant 0 : index
    %972 = vector.load %arg3[%c44_464, %c0_465, %c0_466] : memref<64x16x128xf32, #tpu.memory_space<vmem>>, vector<1x16x128xf32>
    %973 = vector.shape_cast %972 : vector<1x16x128xf32> to vector<16x128xf32>
    %974 = arith.subf %973, %801 : vector<16x128xf32>
    %975 = math.exp %974 : vector<16x128xf32>
    %976 = arith.addf %962, %975 : vector<16x128xf32>
    %cst_467 = arith.constant 1.200000e+01 : f32
    %977 = vector.broadcast %cst_467 : f32 to vector<16x128xf32>
    %978 = arith.subf %754, %977 : vector<16x128xf32>
    %979 = math.absf %978 : vector<16x128xf32>
    %cst_468 = arith.constant 1.000000e+00 : f32
    %980 = vector.broadcast %cst_468 : f32 to vector<16x128xf32>
    %981 = arith.subf %980, %979 : vector<16x128xf32>
    %cst_469 = arith.constant 0.000000e+00 : f32
    %982 = vector.broadcast %cst_469 : f32 to vector<16x128xf32>
    %983 = arith.maximumf %981, %982 : vector<16x128xf32>
    %984 = arith.mulf %973, %983 : vector<16x128xf32>
    %985 = arith.addf %971, %984 : vector<16x128xf32>
    %c45_470 = arith.constant 45 : index
    %c0_471 = arith.constant 0 : index
    %c0_472 = arith.constant 0 : index
    %986 = vector.load %arg3[%c45_470, %c0_471, %c0_472] : memref<64x16x128xf32, #tpu.memory_space<vmem>>, vector<1x16x128xf32>
    %987 = vector.shape_cast %986 : vector<1x16x128xf32> to vector<16x128xf32>
    %988 = arith.subf %987, %801 : vector<16x128xf32>
    %989 = math.exp %988 : vector<16x128xf32>
    %990 = arith.addf %976, %989 : vector<16x128xf32>
    %cst_473 = arith.constant 1.300000e+01 : f32
    %991 = vector.broadcast %cst_473 : f32 to vector<16x128xf32>
    %992 = arith.subf %754, %991 : vector<16x128xf32>
    %993 = math.absf %992 : vector<16x128xf32>
    %cst_474 = arith.constant 1.000000e+00 : f32
    %994 = vector.broadcast %cst_474 : f32 to vector<16x128xf32>
    %995 = arith.subf %994, %993 : vector<16x128xf32>
    %cst_475 = arith.constant 0.000000e+00 : f32
    %996 = vector.broadcast %cst_475 : f32 to vector<16x128xf32>
    %997 = arith.maximumf %995, %996 : vector<16x128xf32>
    %998 = arith.mulf %987, %997 : vector<16x128xf32>
    %999 = arith.addf %985, %998 : vector<16x128xf32>
    %c46_476 = arith.constant 46 : index
    %c0_477 = arith.constant 0 : index
    %c0_478 = arith.constant 0 : index
    %1000 = vector.load %arg3[%c46_476, %c0_477, %c0_478] : memref<64x16x128xf32, #tpu.memory_space<vmem>>, vector<1x16x128xf32>
    %1001 = vector.shape_cast %1000 : vector<1x16x128xf32> to vector<16x128xf32>
    %1002 = arith.subf %1001, %801 : vector<16x128xf32>
    %1003 = math.exp %1002 : vector<16x128xf32>
    %1004 = arith.addf %990, %1003 : vector<16x128xf32>
    %cst_479 = arith.constant 1.400000e+01 : f32
    %1005 = vector.broadcast %cst_479 : f32 to vector<16x128xf32>
    %1006 = arith.subf %754, %1005 : vector<16x128xf32>
    %1007 = math.absf %1006 : vector<16x128xf32>
    %cst_480 = arith.constant 1.000000e+00 : f32
    %1008 = vector.broadcast %cst_480 : f32 to vector<16x128xf32>
    %1009 = arith.subf %1008, %1007 : vector<16x128xf32>
    %cst_481 = arith.constant 0.000000e+00 : f32
    %1010 = vector.broadcast %cst_481 : f32 to vector<16x128xf32>
    %1011 = arith.maximumf %1009, %1010 : vector<16x128xf32>
    %1012 = arith.mulf %1001, %1011 : vector<16x128xf32>
    %1013 = arith.addf %999, %1012 : vector<16x128xf32>
    %c47_482 = arith.constant 47 : index
    %c0_483 = arith.constant 0 : index
    %c0_484 = arith.constant 0 : index
    %1014 = vector.load %arg3[%c47_482, %c0_483, %c0_484] : memref<64x16x128xf32, #tpu.memory_space<vmem>>, vector<1x16x128xf32>
    %1015 = vector.shape_cast %1014 : vector<1x16x128xf32> to vector<16x128xf32>
    %1016 = arith.subf %1015, %801 : vector<16x128xf32>
    %1017 = math.exp %1016 : vector<16x128xf32>
    %1018 = arith.addf %1004, %1017 : vector<16x128xf32>
    %cst_485 = arith.constant 1.500000e+01 : f32
    %1019 = vector.broadcast %cst_485 : f32 to vector<16x128xf32>
    %1020 = arith.subf %754, %1019 : vector<16x128xf32>
    %1021 = math.absf %1020 : vector<16x128xf32>
    %cst_486 = arith.constant 1.000000e+00 : f32
    %1022 = vector.broadcast %cst_486 : f32 to vector<16x128xf32>
    %1023 = arith.subf %1022, %1021 : vector<16x128xf32>
    %cst_487 = arith.constant 0.000000e+00 : f32
    %1024 = vector.broadcast %cst_487 : f32 to vector<16x128xf32>
    %1025 = arith.maximumf %1023, %1024 : vector<16x128xf32>
    %1026 = arith.mulf %1015, %1025 : vector<16x128xf32>
    %1027 = arith.addf %1013, %1026 : vector<16x128xf32>
    %1028 = math.log %1018 : vector<16x128xf32>
    %1029 = arith.addf %801, %1028 : vector<16x128xf32>
    %1030 = arith.addf %745, %1029 : vector<16x128xf32>
    %1031 = arith.subf %1030, %1027 : vector<16x128xf32>
    %c7_488 = arith.constant 7 : index
    %c0_489 = arith.constant 0 : index
    %c0_490 = arith.constant 0 : index
    %1032 = vector.load %arg2[%c7_488, %c0_489, %c0_490] : memref<11x16x128xf32, #tpu.memory_space<vmem>>, vector<1x16x128xf32>
    %1033 = vector.shape_cast %1032 : vector<1x16x128xf32> to vector<16x128xf32>
    %c9_491 = arith.constant 9 : index
    %c0_492 = arith.constant 0 : index
    %c0_493 = arith.constant 0 : index
    %1034 = vector.load %arg2[%c9_491, %c0_492, %c0_493] : memref<11x16x128xf32, #tpu.memory_space<vmem>>, vector<1x16x128xf32>
    %1035 = vector.shape_cast %1034 : vector<1x16x128xf32> to vector<16x128xf32>
    %1036 = arith.subf %1033, %1035 : vector<16x128xf32>
    %cst_494 = arith.constant 0.000000e+00 : f32
    %cst_495 = arith.constant 1.499000e+01 : f32
    %1037 = vector.broadcast %cst_494 : f32 to vector<16x128xf32>
    %1038 = arith.maximumf %1037, %1036 : vector<16x128xf32>
    %1039 = vector.broadcast %cst_495 : f32 to vector<16x128xf32>
    %1040 = arith.minimumf %1039, %1038 : vector<16x128xf32>
    %c48 = arith.constant 48 : index
    %c0_496 = arith.constant 0 : index
    %c0_497 = arith.constant 0 : index
    %1041 = vector.load %arg3[%c48, %c0_496, %c0_497] : memref<64x16x128xf32, #tpu.memory_space<vmem>>, vector<1x16x128xf32>
    %1042 = vector.shape_cast %1041 : vector<1x16x128xf32> to vector<16x128xf32>
    %c49 = arith.constant 49 : index
    %c0_498 = arith.constant 0 : index
    %c0_499 = arith.constant 0 : index
    %1043 = vector.load %arg3[%c49, %c0_498, %c0_499] : memref<64x16x128xf32, #tpu.memory_space<vmem>>, vector<1x16x128xf32>
    %1044 = vector.shape_cast %1043 : vector<1x16x128xf32> to vector<16x128xf32>
    %1045 = arith.maximumf %1042, %1044 : vector<16x128xf32>
    %c50 = arith.constant 50 : index
    %c0_500 = arith.constant 0 : index
    %c0_501 = arith.constant 0 : index
    %1046 = vector.load %arg3[%c50, %c0_500, %c0_501] : memref<64x16x128xf32, #tpu.memory_space<vmem>>, vector<1x16x128xf32>
    %1047 = vector.shape_cast %1046 : vector<1x16x128xf32> to vector<16x128xf32>
    %1048 = arith.maximumf %1045, %1047 : vector<16x128xf32>
    %c51 = arith.constant 51 : index
    %c0_502 = arith.constant 0 : index
    %c0_503 = arith.constant 0 : index
    %1049 = vector.load %arg3[%c51, %c0_502, %c0_503] : memref<64x16x128xf32, #tpu.memory_space<vmem>>, vector<1x16x128xf32>
    %1050 = vector.shape_cast %1049 : vector<1x16x128xf32> to vector<16x128xf32>
    %1051 = arith.maximumf %1048, %1050 : vector<16x128xf32>
    %c52 = arith.constant 52 : index
    %c0_504 = arith.constant 0 : index
    %c0_505 = arith.constant 0 : index
    %1052 = vector.load %arg3[%c52, %c0_504, %c0_505] : memref<64x16x128xf32, #tpu.memory_space<vmem>>, vector<1x16x128xf32>
    %1053 = vector.shape_cast %1052 : vector<1x16x128xf32> to vector<16x128xf32>
    %1054 = arith.maximumf %1051, %1053 : vector<16x128xf32>
    %c53 = arith.constant 53 : index
    %c0_506 = arith.constant 0 : index
    %c0_507 = arith.constant 0 : index
    %1055 = vector.load %arg3[%c53, %c0_506, %c0_507] : memref<64x16x128xf32, #tpu.memory_space<vmem>>, vector<1x16x128xf32>
    %1056 = vector.shape_cast %1055 : vector<1x16x128xf32> to vector<16x128xf32>
    %1057 = arith.maximumf %1054, %1056 : vector<16x128xf32>
    %c54 = arith.constant 54 : index
    %c0_508 = arith.constant 0 : index
    %c0_509 = arith.constant 0 : index
    %1058 = vector.load %arg3[%c54, %c0_508, %c0_509] : memref<64x16x128xf32, #tpu.memory_space<vmem>>, vector<1x16x128xf32>
    %1059 = vector.shape_cast %1058 : vector<1x16x128xf32> to vector<16x128xf32>
    %1060 = arith.maximumf %1057, %1059 : vector<16x128xf32>
    %c55 = arith.constant 55 : index
    %c0_510 = arith.constant 0 : index
    %c0_511 = arith.constant 0 : index
    %1061 = vector.load %arg3[%c55, %c0_510, %c0_511] : memref<64x16x128xf32, #tpu.memory_space<vmem>>, vector<1x16x128xf32>
    %1062 = vector.shape_cast %1061 : vector<1x16x128xf32> to vector<16x128xf32>
    %1063 = arith.maximumf %1060, %1062 : vector<16x128xf32>
    %c56 = arith.constant 56 : index
    %c0_512 = arith.constant 0 : index
    %c0_513 = arith.constant 0 : index
    %1064 = vector.load %arg3[%c56, %c0_512, %c0_513] : memref<64x16x128xf32, #tpu.memory_space<vmem>>, vector<1x16x128xf32>
    %1065 = vector.shape_cast %1064 : vector<1x16x128xf32> to vector<16x128xf32>
    %1066 = arith.maximumf %1063, %1065 : vector<16x128xf32>
    %c57 = arith.constant 57 : index
    %c0_514 = arith.constant 0 : index
    %c0_515 = arith.constant 0 : index
    %1067 = vector.load %arg3[%c57, %c0_514, %c0_515] : memref<64x16x128xf32, #tpu.memory_space<vmem>>, vector<1x16x128xf32>
    %1068 = vector.shape_cast %1067 : vector<1x16x128xf32> to vector<16x128xf32>
    %1069 = arith.maximumf %1066, %1068 : vector<16x128xf32>
    %c58 = arith.constant 58 : index
    %c0_516 = arith.constant 0 : index
    %c0_517 = arith.constant 0 : index
    %1070 = vector.load %arg3[%c58, %c0_516, %c0_517] : memref<64x16x128xf32, #tpu.memory_space<vmem>>, vector<1x16x128xf32>
    %1071 = vector.shape_cast %1070 : vector<1x16x128xf32> to vector<16x128xf32>
    %1072 = arith.maximumf %1069, %1071 : vector<16x128xf32>
    %c59 = arith.constant 59 : index
    %c0_518 = arith.constant 0 : index
    %c0_519 = arith.constant 0 : index
    %1073 = vector.load %arg3[%c59, %c0_518, %c0_519] : memref<64x16x128xf32, #tpu.memory_space<vmem>>, vector<1x16x128xf32>
    %1074 = vector.shape_cast %1073 : vector<1x16x128xf32> to vector<16x128xf32>
    %1075 = arith.maximumf %1072, %1074 : vector<16x128xf32>
    %c60 = arith.constant 60 : index
    %c0_520 = arith.constant 0 : index
    %c0_521 = arith.constant 0 : index
    %1076 = vector.load %arg3[%c60, %c0_520, %c0_521] : memref<64x16x128xf32, #tpu.memory_space<vmem>>, vector<1x16x128xf32>
    %1077 = vector.shape_cast %1076 : vector<1x16x128xf32> to vector<16x128xf32>
    %1078 = arith.maximumf %1075, %1077 : vector<16x128xf32>
    %c61 = arith.constant 61 : index
    %c0_522 = arith.constant 0 : index
    %c0_523 = arith.constant 0 : index
    %1079 = vector.load %arg3[%c61, %c0_522, %c0_523] : memref<64x16x128xf32, #tpu.memory_space<vmem>>, vector<1x16x128xf32>
    %1080 = vector.shape_cast %1079 : vector<1x16x128xf32> to vector<16x128xf32>
    %1081 = arith.maximumf %1078, %1080 : vector<16x128xf32>
    %c62 = arith.constant 62 : index
    %c0_524 = arith.constant 0 : index
    %c0_525 = arith.constant 0 : index
    %1082 = vector.load %arg3[%c62, %c0_524, %c0_525] : memref<64x16x128xf32, #tpu.memory_space<vmem>>, vector<1x16x128xf32>
    %1083 = vector.shape_cast %1082 : vector<1x16x128xf32> to vector<16x128xf32>
    %1084 = arith.maximumf %1081, %1083 : vector<16x128xf32>
    %c63 = arith.constant 63 : index
    %c0_526 = arith.constant 0 : index
    %c0_527 = arith.constant 0 : index
    %1085 = vector.load %arg3[%c63, %c0_526, %c0_527] : memref<64x16x128xf32, #tpu.memory_space<vmem>>, vector<1x16x128xf32>
    %1086 = vector.shape_cast %1085 : vector<1x16x128xf32> to vector<16x128xf32>
    %1087 = arith.maximumf %1084, %1086 : vector<16x128xf32>
    %cst_528 = arith.constant 0.000000e+00 : f32
    %1088 = vector.broadcast %cst_528 : f32 to vector<16x128xf32>
    %cst_529 = arith.constant 0.000000e+00 : f32
    %1089 = vector.broadcast %cst_529 : f32 to vector<16x128xf32>
    %c48_530 = arith.constant 48 : index
    %c0_531 = arith.constant 0 : index
    %c0_532 = arith.constant 0 : index
    %1090 = vector.load %arg3[%c48_530, %c0_531, %c0_532] : memref<64x16x128xf32, #tpu.memory_space<vmem>>, vector<1x16x128xf32>
    %1091 = vector.shape_cast %1090 : vector<1x16x128xf32> to vector<16x128xf32>
    %1092 = arith.subf %1091, %1087 : vector<16x128xf32>
    %1093 = math.exp %1092 : vector<16x128xf32>
    %1094 = arith.addf %1088, %1093 : vector<16x128xf32>
    %cst_533 = arith.constant 0.000000e+00 : f32
    %1095 = vector.broadcast %cst_533 : f32 to vector<16x128xf32>
    %1096 = arith.subf %1040, %1095 : vector<16x128xf32>
    %1097 = math.absf %1096 : vector<16x128xf32>
    %cst_534 = arith.constant 1.000000e+00 : f32
    %1098 = vector.broadcast %cst_534 : f32 to vector<16x128xf32>
    %1099 = arith.subf %1098, %1097 : vector<16x128xf32>
    %cst_535 = arith.constant 0.000000e+00 : f32
    %1100 = vector.broadcast %cst_535 : f32 to vector<16x128xf32>
    %1101 = arith.maximumf %1099, %1100 : vector<16x128xf32>
    %1102 = arith.mulf %1091, %1101 : vector<16x128xf32>
    %1103 = arith.addf %1089, %1102 : vector<16x128xf32>
    %c49_536 = arith.constant 49 : index
    %c0_537 = arith.constant 0 : index
    %c0_538 = arith.constant 0 : index
    %1104 = vector.load %arg3[%c49_536, %c0_537, %c0_538] : memref<64x16x128xf32, #tpu.memory_space<vmem>>, vector<1x16x128xf32>
    %1105 = vector.shape_cast %1104 : vector<1x16x128xf32> to vector<16x128xf32>
    %1106 = arith.subf %1105, %1087 : vector<16x128xf32>
    %1107 = math.exp %1106 : vector<16x128xf32>
    %1108 = arith.addf %1094, %1107 : vector<16x128xf32>
    %cst_539 = arith.constant 1.000000e+00 : f32
    %1109 = vector.broadcast %cst_539 : f32 to vector<16x128xf32>
    %1110 = arith.subf %1040, %1109 : vector<16x128xf32>
    %1111 = math.absf %1110 : vector<16x128xf32>
    %cst_540 = arith.constant 1.000000e+00 : f32
    %1112 = vector.broadcast %cst_540 : f32 to vector<16x128xf32>
    %1113 = arith.subf %1112, %1111 : vector<16x128xf32>
    %cst_541 = arith.constant 0.000000e+00 : f32
    %1114 = vector.broadcast %cst_541 : f32 to vector<16x128xf32>
    %1115 = arith.maximumf %1113, %1114 : vector<16x128xf32>
    %1116 = arith.mulf %1105, %1115 : vector<16x128xf32>
    %1117 = arith.addf %1103, %1116 : vector<16x128xf32>
    %c50_542 = arith.constant 50 : index
    %c0_543 = arith.constant 0 : index
    %c0_544 = arith.constant 0 : index
    %1118 = vector.load %arg3[%c50_542, %c0_543, %c0_544] : memref<64x16x128xf32, #tpu.memory_space<vmem>>, vector<1x16x128xf32>
    %1119 = vector.shape_cast %1118 : vector<1x16x128xf32> to vector<16x128xf32>
    %1120 = arith.subf %1119, %1087 : vector<16x128xf32>
    %1121 = math.exp %1120 : vector<16x128xf32>
    %1122 = arith.addf %1108, %1121 : vector<16x128xf32>
    %cst_545 = arith.constant 2.000000e+00 : f32
    %1123 = vector.broadcast %cst_545 : f32 to vector<16x128xf32>
    %1124 = arith.subf %1040, %1123 : vector<16x128xf32>
    %1125 = math.absf %1124 : vector<16x128xf32>
    %cst_546 = arith.constant 1.000000e+00 : f32
    %1126 = vector.broadcast %cst_546 : f32 to vector<16x128xf32>
    %1127 = arith.subf %1126, %1125 : vector<16x128xf32>
    %cst_547 = arith.constant 0.000000e+00 : f32
    %1128 = vector.broadcast %cst_547 : f32 to vector<16x128xf32>
    %1129 = arith.maximumf %1127, %1128 : vector<16x128xf32>
    %1130 = arith.mulf %1119, %1129 : vector<16x128xf32>
    %1131 = arith.addf %1117, %1130 : vector<16x128xf32>
    %c51_548 = arith.constant 51 : index
    %c0_549 = arith.constant 0 : index
    %c0_550 = arith.constant 0 : index
    %1132 = vector.load %arg3[%c51_548, %c0_549, %c0_550] : memref<64x16x128xf32, #tpu.memory_space<vmem>>, vector<1x16x128xf32>
    %1133 = vector.shape_cast %1132 : vector<1x16x128xf32> to vector<16x128xf32>
    %1134 = arith.subf %1133, %1087 : vector<16x128xf32>
    %1135 = math.exp %1134 : vector<16x128xf32>
    %1136 = arith.addf %1122, %1135 : vector<16x128xf32>
    %cst_551 = arith.constant 3.000000e+00 : f32
    %1137 = vector.broadcast %cst_551 : f32 to vector<16x128xf32>
    %1138 = arith.subf %1040, %1137 : vector<16x128xf32>
    %1139 = math.absf %1138 : vector<16x128xf32>
    %cst_552 = arith.constant 1.000000e+00 : f32
    %1140 = vector.broadcast %cst_552 : f32 to vector<16x128xf32>
    %1141 = arith.subf %1140, %1139 : vector<16x128xf32>
    %cst_553 = arith.constant 0.000000e+00 : f32
    %1142 = vector.broadcast %cst_553 : f32 to vector<16x128xf32>
    %1143 = arith.maximumf %1141, %1142 : vector<16x128xf32>
    %1144 = arith.mulf %1133, %1143 : vector<16x128xf32>
    %1145 = arith.addf %1131, %1144 : vector<16x128xf32>
    %c52_554 = arith.constant 52 : index
    %c0_555 = arith.constant 0 : index
    %c0_556 = arith.constant 0 : index
    %1146 = vector.load %arg3[%c52_554, %c0_555, %c0_556] : memref<64x16x128xf32, #tpu.memory_space<vmem>>, vector<1x16x128xf32>
    %1147 = vector.shape_cast %1146 : vector<1x16x128xf32> to vector<16x128xf32>
    %1148 = arith.subf %1147, %1087 : vector<16x128xf32>
    %1149 = math.exp %1148 : vector<16x128xf32>
    %1150 = arith.addf %1136, %1149 : vector<16x128xf32>
    %cst_557 = arith.constant 4.000000e+00 : f32
    %1151 = vector.broadcast %cst_557 : f32 to vector<16x128xf32>
    %1152 = arith.subf %1040, %1151 : vector<16x128xf32>
    %1153 = math.absf %1152 : vector<16x128xf32>
    %cst_558 = arith.constant 1.000000e+00 : f32
    %1154 = vector.broadcast %cst_558 : f32 to vector<16x128xf32>
    %1155 = arith.subf %1154, %1153 : vector<16x128xf32>
    %cst_559 = arith.constant 0.000000e+00 : f32
    %1156 = vector.broadcast %cst_559 : f32 to vector<16x128xf32>
    %1157 = arith.maximumf %1155, %1156 : vector<16x128xf32>
    %1158 = arith.mulf %1147, %1157 : vector<16x128xf32>
    %1159 = arith.addf %1145, %1158 : vector<16x128xf32>
    %c53_560 = arith.constant 53 : index
    %c0_561 = arith.constant 0 : index
    %c0_562 = arith.constant 0 : index
    %1160 = vector.load %arg3[%c53_560, %c0_561, %c0_562] : memref<64x16x128xf32, #tpu.memory_space<vmem>>, vector<1x16x128xf32>
    %1161 = vector.shape_cast %1160 : vector<1x16x128xf32> to vector<16x128xf32>
    %1162 = arith.subf %1161, %1087 : vector<16x128xf32>
    %1163 = math.exp %1162 : vector<16x128xf32>
    %1164 = arith.addf %1150, %1163 : vector<16x128xf32>
    %cst_563 = arith.constant 5.000000e+00 : f32
    %1165 = vector.broadcast %cst_563 : f32 to vector<16x128xf32>
    %1166 = arith.subf %1040, %1165 : vector<16x128xf32>
    %1167 = math.absf %1166 : vector<16x128xf32>
    %cst_564 = arith.constant 1.000000e+00 : f32
    %1168 = vector.broadcast %cst_564 : f32 to vector<16x128xf32>
    %1169 = arith.subf %1168, %1167 : vector<16x128xf32>
    %cst_565 = arith.constant 0.000000e+00 : f32
    %1170 = vector.broadcast %cst_565 : f32 to vector<16x128xf32>
    %1171 = arith.maximumf %1169, %1170 : vector<16x128xf32>
    %1172 = arith.mulf %1161, %1171 : vector<16x128xf32>
    %1173 = arith.addf %1159, %1172 : vector<16x128xf32>
    %c54_566 = arith.constant 54 : index
    %c0_567 = arith.constant 0 : index
    %c0_568 = arith.constant 0 : index
    %1174 = vector.load %arg3[%c54_566, %c0_567, %c0_568] : memref<64x16x128xf32, #tpu.memory_space<vmem>>, vector<1x16x128xf32>
    %1175 = vector.shape_cast %1174 : vector<1x16x128xf32> to vector<16x128xf32>
    %1176 = arith.subf %1175, %1087 : vector<16x128xf32>
    %1177 = math.exp %1176 : vector<16x128xf32>
    %1178 = arith.addf %1164, %1177 : vector<16x128xf32>
    %cst_569 = arith.constant 6.000000e+00 : f32
    %1179 = vector.broadcast %cst_569 : f32 to vector<16x128xf32>
    %1180 = arith.subf %1040, %1179 : vector<16x128xf32>
    %1181 = math.absf %1180 : vector<16x128xf32>
    %cst_570 = arith.constant 1.000000e+00 : f32
    %1182 = vector.broadcast %cst_570 : f32 to vector<16x128xf32>
    %1183 = arith.subf %1182, %1181 : vector<16x128xf32>
    %cst_571 = arith.constant 0.000000e+00 : f32
    %1184 = vector.broadcast %cst_571 : f32 to vector<16x128xf32>
    %1185 = arith.maximumf %1183, %1184 : vector<16x128xf32>
    %1186 = arith.mulf %1175, %1185 : vector<16x128xf32>
    %1187 = arith.addf %1173, %1186 : vector<16x128xf32>
    %c55_572 = arith.constant 55 : index
    %c0_573 = arith.constant 0 : index
    %c0_574 = arith.constant 0 : index
    %1188 = vector.load %arg3[%c55_572, %c0_573, %c0_574] : memref<64x16x128xf32, #tpu.memory_space<vmem>>, vector<1x16x128xf32>
    %1189 = vector.shape_cast %1188 : vector<1x16x128xf32> to vector<16x128xf32>
    %1190 = arith.subf %1189, %1087 : vector<16x128xf32>
    %1191 = math.exp %1190 : vector<16x128xf32>
    %1192 = arith.addf %1178, %1191 : vector<16x128xf32>
    %cst_575 = arith.constant 7.000000e+00 : f32
    %1193 = vector.broadcast %cst_575 : f32 to vector<16x128xf32>
    %1194 = arith.subf %1040, %1193 : vector<16x128xf32>
    %1195 = math.absf %1194 : vector<16x128xf32>
    %cst_576 = arith.constant 1.000000e+00 : f32
    %1196 = vector.broadcast %cst_576 : f32 to vector<16x128xf32>
    %1197 = arith.subf %1196, %1195 : vector<16x128xf32>
    %cst_577 = arith.constant 0.000000e+00 : f32
    %1198 = vector.broadcast %cst_577 : f32 to vector<16x128xf32>
    %1199 = arith.maximumf %1197, %1198 : vector<16x128xf32>
    %1200 = arith.mulf %1189, %1199 : vector<16x128xf32>
    %1201 = arith.addf %1187, %1200 : vector<16x128xf32>
    %c56_578 = arith.constant 56 : index
    %c0_579 = arith.constant 0 : index
    %c0_580 = arith.constant 0 : index
    %1202 = vector.load %arg3[%c56_578, %c0_579, %c0_580] : memref<64x16x128xf32, #tpu.memory_space<vmem>>, vector<1x16x128xf32>
    %1203 = vector.shape_cast %1202 : vector<1x16x128xf32> to vector<16x128xf32>
    %1204 = arith.subf %1203, %1087 : vector<16x128xf32>
    %1205 = math.exp %1204 : vector<16x128xf32>
    %1206 = arith.addf %1192, %1205 : vector<16x128xf32>
    %cst_581 = arith.constant 8.000000e+00 : f32
    %1207 = vector.broadcast %cst_581 : f32 to vector<16x128xf32>
    %1208 = arith.subf %1040, %1207 : vector<16x128xf32>
    %1209 = math.absf %1208 : vector<16x128xf32>
    %cst_582 = arith.constant 1.000000e+00 : f32
    %1210 = vector.broadcast %cst_582 : f32 to vector<16x128xf32>
    %1211 = arith.subf %1210, %1209 : vector<16x128xf32>
    %cst_583 = arith.constant 0.000000e+00 : f32
    %1212 = vector.broadcast %cst_583 : f32 to vector<16x128xf32>
    %1213 = arith.maximumf %1211, %1212 : vector<16x128xf32>
    %1214 = arith.mulf %1203, %1213 : vector<16x128xf32>
    %1215 = arith.addf %1201, %1214 : vector<16x128xf32>
    %c57_584 = arith.constant 57 : index
    %c0_585 = arith.constant 0 : index
    %c0_586 = arith.constant 0 : index
    %1216 = vector.load %arg3[%c57_584, %c0_585, %c0_586] : memref<64x16x128xf32, #tpu.memory_space<vmem>>, vector<1x16x128xf32>
    %1217 = vector.shape_cast %1216 : vector<1x16x128xf32> to vector<16x128xf32>
    %1218 = arith.subf %1217, %1087 : vector<16x128xf32>
    %1219 = math.exp %1218 : vector<16x128xf32>
    %1220 = arith.addf %1206, %1219 : vector<16x128xf32>
    %cst_587 = arith.constant 9.000000e+00 : f32
    %1221 = vector.broadcast %cst_587 : f32 to vector<16x128xf32>
    %1222 = arith.subf %1040, %1221 : vector<16x128xf32>
    %1223 = math.absf %1222 : vector<16x128xf32>
    %cst_588 = arith.constant 1.000000e+00 : f32
    %1224 = vector.broadcast %cst_588 : f32 to vector<16x128xf32>
    %1225 = arith.subf %1224, %1223 : vector<16x128xf32>
    %cst_589 = arith.constant 0.000000e+00 : f32
    %1226 = vector.broadcast %cst_589 : f32 to vector<16x128xf32>
    %1227 = arith.maximumf %1225, %1226 : vector<16x128xf32>
    %1228 = arith.mulf %1217, %1227 : vector<16x128xf32>
    %1229 = arith.addf %1215, %1228 : vector<16x128xf32>
    %c58_590 = arith.constant 58 : index
    %c0_591 = arith.constant 0 : index
    %c0_592 = arith.constant 0 : index
    %1230 = vector.load %arg3[%c58_590, %c0_591, %c0_592] : memref<64x16x128xf32, #tpu.memory_space<vmem>>, vector<1x16x128xf32>
    %1231 = vector.shape_cast %1230 : vector<1x16x128xf32> to vector<16x128xf32>
    %1232 = arith.subf %1231, %1087 : vector<16x128xf32>
    %1233 = math.exp %1232 : vector<16x128xf32>
    %1234 = arith.addf %1220, %1233 : vector<16x128xf32>
    %cst_593 = arith.constant 1.000000e+01 : f32
    %1235 = vector.broadcast %cst_593 : f32 to vector<16x128xf32>
    %1236 = arith.subf %1040, %1235 : vector<16x128xf32>
    %1237 = math.absf %1236 : vector<16x128xf32>
    %cst_594 = arith.constant 1.000000e+00 : f32
    %1238 = vector.broadcast %cst_594 : f32 to vector<16x128xf32>
    %1239 = arith.subf %1238, %1237 : vector<16x128xf32>
    %cst_595 = arith.constant 0.000000e+00 : f32
    %1240 = vector.broadcast %cst_595 : f32 to vector<16x128xf32>
    %1241 = arith.maximumf %1239, %1240 : vector<16x128xf32>
    %1242 = arith.mulf %1231, %1241 : vector<16x128xf32>
    %1243 = arith.addf %1229, %1242 : vector<16x128xf32>
    %c59_596 = arith.constant 59 : index
    %c0_597 = arith.constant 0 : index
    %c0_598 = arith.constant 0 : index
    %1244 = vector.load %arg3[%c59_596, %c0_597, %c0_598] : memref<64x16x128xf32, #tpu.memory_space<vmem>>, vector<1x16x128xf32>
    %1245 = vector.shape_cast %1244 : vector<1x16x128xf32> to vector<16x128xf32>
    %1246 = arith.subf %1245, %1087 : vector<16x128xf32>
    %1247 = math.exp %1246 : vector<16x128xf32>
    %1248 = arith.addf %1234, %1247 : vector<16x128xf32>
    %cst_599 = arith.constant 1.100000e+01 : f32
    %1249 = vector.broadcast %cst_599 : f32 to vector<16x128xf32>
    %1250 = arith.subf %1040, %1249 : vector<16x128xf32>
    %1251 = math.absf %1250 : vector<16x128xf32>
    %cst_600 = arith.constant 1.000000e+00 : f32
    %1252 = vector.broadcast %cst_600 : f32 to vector<16x128xf32>
    %1253 = arith.subf %1252, %1251 : vector<16x128xf32>
    %cst_601 = arith.constant 0.000000e+00 : f32
    %1254 = vector.broadcast %cst_601 : f32 to vector<16x128xf32>
    %1255 = arith.maximumf %1253, %1254 : vector<16x128xf32>
    %1256 = arith.mulf %1245, %1255 : vector<16x128xf32>
    %1257 = arith.addf %1243, %1256 : vector<16x128xf32>
    %c60_602 = arith.constant 60 : index
    %c0_603 = arith.constant 0 : index
    %c0_604 = arith.constant 0 : index
    %1258 = vector.load %arg3[%c60_602, %c0_603, %c0_604] : memref<64x16x128xf32, #tpu.memory_space<vmem>>, vector<1x16x128xf32>
    %1259 = vector.shape_cast %1258 : vector<1x16x128xf32> to vector<16x128xf32>
    %1260 = arith.subf %1259, %1087 : vector<16x128xf32>
    %1261 = math.exp %1260 : vector<16x128xf32>
    %1262 = arith.addf %1248, %1261 : vector<16x128xf32>
    %cst_605 = arith.constant 1.200000e+01 : f32
    %1263 = vector.broadcast %cst_605 : f32 to vector<16x128xf32>
    %1264 = arith.subf %1040, %1263 : vector<16x128xf32>
    %1265 = math.absf %1264 : vector<16x128xf32>
    %cst_606 = arith.constant 1.000000e+00 : f32
    %1266 = vector.broadcast %cst_606 : f32 to vector<16x128xf32>
    %1267 = arith.subf %1266, %1265 : vector<16x128xf32>
    %cst_607 = arith.constant 0.000000e+00 : f32
    %1268 = vector.broadcast %cst_607 : f32 to vector<16x128xf32>
    %1269 = arith.maximumf %1267, %1268 : vector<16x128xf32>
    %1270 = arith.mulf %1259, %1269 : vector<16x128xf32>
    %1271 = arith.addf %1257, %1270 : vector<16x128xf32>
    %c61_608 = arith.constant 61 : index
    %c0_609 = arith.constant 0 : index
    %c0_610 = arith.constant 0 : index
    %1272 = vector.load %arg3[%c61_608, %c0_609, %c0_610] : memref<64x16x128xf32, #tpu.memory_space<vmem>>, vector<1x16x128xf32>
    %1273 = vector.shape_cast %1272 : vector<1x16x128xf32> to vector<16x128xf32>
    %1274 = arith.subf %1273, %1087 : vector<16x128xf32>
    %1275 = math.exp %1274 : vector<16x128xf32>
    %1276 = arith.addf %1262, %1275 : vector<16x128xf32>
    %cst_611 = arith.constant 1.300000e+01 : f32
    %1277 = vector.broadcast %cst_611 : f32 to vector<16x128xf32>
    %1278 = arith.subf %1040, %1277 : vector<16x128xf32>
    %1279 = math.absf %1278 : vector<16x128xf32>
    %cst_612 = arith.constant 1.000000e+00 : f32
    %1280 = vector.broadcast %cst_612 : f32 to vector<16x128xf32>
    %1281 = arith.subf %1280, %1279 : vector<16x128xf32>
    %cst_613 = arith.constant 0.000000e+00 : f32
    %1282 = vector.broadcast %cst_613 : f32 to vector<16x128xf32>
    %1283 = arith.maximumf %1281, %1282 : vector<16x128xf32>
    %1284 = arith.mulf %1273, %1283 : vector<16x128xf32>
    %1285 = arith.addf %1271, %1284 : vector<16x128xf32>
    %c62_614 = arith.constant 62 : index
    %c0_615 = arith.constant 0 : index
    %c0_616 = arith.constant 0 : index
    %1286 = vector.load %arg3[%c62_614, %c0_615, %c0_616] : memref<64x16x128xf32, #tpu.memory_space<vmem>>, vector<1x16x128xf32>
    %1287 = vector.shape_cast %1286 : vector<1x16x128xf32> to vector<16x128xf32>
    %1288 = arith.subf %1287, %1087 : vector<16x128xf32>
    %1289 = math.exp %1288 : vector<16x128xf32>
    %1290 = arith.addf %1276, %1289 : vector<16x128xf32>
    %cst_617 = arith.constant 1.400000e+01 : f32
    %1291 = vector.broadcast %cst_617 : f32 to vector<16x128xf32>
    %1292 = arith.subf %1040, %1291 : vector<16x128xf32>
    %1293 = math.absf %1292 : vector<16x128xf32>
    %cst_618 = arith.constant 1.000000e+00 : f32
    %1294 = vector.broadcast %cst_618 : f32 to vector<16x128xf32>
    %1295 = arith.subf %1294, %1293 : vector<16x128xf32>
    %cst_619 = arith.constant 0.000000e+00 : f32
    %1296 = vector.broadcast %cst_619 : f32 to vector<16x128xf32>
    %1297 = arith.maximumf %1295, %1296 : vector<16x128xf32>
    %1298 = arith.mulf %1287, %1297 : vector<16x128xf32>
    %1299 = arith.addf %1285, %1298 : vector<16x128xf32>
    %c63_620 = arith.constant 63 : index
    %c0_621 = arith.constant 0 : index
    %c0_622 = arith.constant 0 : index
    %1300 = vector.load %arg3[%c63_620, %c0_621, %c0_622] : memref<64x16x128xf32, #tpu.memory_space<vmem>>, vector<1x16x128xf32>
    %1301 = vector.shape_cast %1300 : vector<1x16x128xf32> to vector<16x128xf32>
    %1302 = arith.subf %1301, %1087 : vector<16x128xf32>
    %1303 = math.exp %1302 : vector<16x128xf32>
    %1304 = arith.addf %1290, %1303 : vector<16x128xf32>
    %cst_623 = arith.constant 1.500000e+01 : f32
    %1305 = vector.broadcast %cst_623 : f32 to vector<16x128xf32>
    %1306 = arith.subf %1040, %1305 : vector<16x128xf32>
    %1307 = math.absf %1306 : vector<16x128xf32>
    %cst_624 = arith.constant 1.000000e+00 : f32
    %1308 = vector.broadcast %cst_624 : f32 to vector<16x128xf32>
    %1309 = arith.subf %1308, %1307 : vector<16x128xf32>
    %cst_625 = arith.constant 0.000000e+00 : f32
    %1310 = vector.broadcast %cst_625 : f32 to vector<16x128xf32>
    %1311 = arith.maximumf %1309, %1310 : vector<16x128xf32>
    %1312 = arith.mulf %1301, %1311 : vector<16x128xf32>
    %1313 = arith.addf %1299, %1312 : vector<16x128xf32>
    %1314 = math.log %1304 : vector<16x128xf32>
    %1315 = arith.addf %1087, %1314 : vector<16x128xf32>
    %1316 = arith.addf %1031, %1315 : vector<16x128xf32>
    %1317 = arith.subf %1316, %1313 : vector<16x128xf32>
    %c0_626 = arith.constant 0 : index
    %c0_627 = arith.constant 0 : index
    %1318 = vector.load %arg5[%c0_626, %c0_627] : memref<16x128xf32, #tpu.memory_space<vmem>>, vector<16x128xf32>
    %cst_628 = arith.constant 2.500000e-01 : f32
    %1319 = vector.broadcast %cst_628 : f32 to vector<16x128xf32>
    %1320 = arith.mulf %1317, %1319 : vector<16x128xf32>
    %1321 = arith.mulf %1320, %4 : vector<16x128xf32>
    %1322 = arith.addf %1318, %1321 : vector<16x128xf32>
    %c0_629 = arith.constant 0 : index
    %c0_630 = arith.constant 0 : index
    %1323 = vector.load %arg5[%c0_629, %c0_630] : memref<16x128xf32, #tpu.memory_space<vmem>>, vector<16x128xf32>
    tpu.vector_store %arg5[%c0_629, %c0_630], %1322 {strides = array<i32>} : memref<16x128xf32, #tpu.memory_space<vmem>>, vector<16x128xf32>,
    return
  }
  func.func @transform_0(%arg0: i32, %arg1: i32) -> (i32, i32, i32) {
    %c1_i32 = arith.constant 1 : i32
    %0 = arith.muli %arg0, %c1_i32 : i32
    %1 = arith.addi %0, %arg1 : i32
    %c0_i32 = arith.constant 0 : i32
    %c0_i32_0 = arith.constant 0 : i32
    %c0_i32_1 = arith.constant 0 : i32
    return %c0_i32, %1, %c0_i32_0 : i32, i32, i32
  }
  func.func @transform_1(%arg0: i32, %arg1: i32) -> (i32, i32, i32) {
    %c1_i32 = arith.constant 1 : i32
    %0 = arith.muli %arg0, %c1_i32 : i32
    %1 = arith.addi %0, %arg1 : i32
    %c0_i32 = arith.constant 0 : i32
    %c0_i32_0 = arith.constant 0 : i32
    %c0_i32_1 = arith.constant 0 : i32
    return %c0_i32, %1, %c0_i32_0 : i32, i32, i32
  }
  func.func @transform_2(%arg0: i32, %arg1: i32) -> (i32, i32) {
    %c0_i32 = arith.constant 0 : i32
    %c0_i32_0 = arith.constant 0 : i32
    return %arg0, %c0_i32 : i32, i32
  }
  func.func @transform_3(%arg0: i32, %arg1: i32) -> (i32, i32) {
    %c0_i32 = arith.constant 0 : i32
    %c0_i32_0 = arith.constant 0 : i32
    return %arg0, %c0_i32 : i32, i32
  }
}

</mosaic_0001>

<llo_original>
// kernel: bbox_loss.1
$region0: #{bbox_loss.1}
  #allocation0 [shape = 'u32[]', space=smem, size = 0x4, offset = 0x4, fixed_abs, tag = 'smem constant byte address 0x4 - core index']
  #allocation1 [shape = 'u32[72,128]{1,0:T(1,128)}', space=vmem, size = 0x9000, scoped, tag = 'internal scratch']
  %s0 = inlined_call_operand.vmem [shape: f32[11,32,128], index: 0, kind: input, shape index: {}]
  %s1 = inlined_call_operand.vmem [shape: f32[64,32,128], index: 1, kind: input, shape index: {}]
  %s2 = inlined_call_operand.vmem [shape: f32[32,128], index: 2, kind: output, shape index: {0}]
  %s3 = inlined_call_operand.vmem [shape: f32[32,128], index: 3, kind: output, shape index: {1}]
  %4 = xla_tuple %s2, %s3
  %s5 = sld [smem:[#allocation0]]
  $region129: #{bbox_loss.1} parent=0
    _
  %s7 = ssub.s32 1, %s5
  %s8 = scalar_select 0, %s7, %s5
  $region1: #{bbox_loss.1} parent=0
    #allocation2 [shape = 'u8[180224]{0}', space=vmem, size = 0x2c000, scoped, tag = 'input window, operand 0']
    #allocation3 [shape = 'u8[1048576]{0}', space=vmem, size = 0x100000, scoped, tag = 'input window, operand 1']
    loop: start=0, step=1, limit=4
    $region2: #{bbox_loss.1} parent=1 // loop_pre_header
      _
    $region3: #{bbox_loss.1} parent=1 // loop_header
      %s10 = sphi 0, %s14
      %p11 = scmp.ge.s32.totalorder %s10, 4
      %s17 = sphi 0, %s29
      %s18 = sphi 0, %s25
      %s19 = sphi 0, %s17
      %s20 = sphi 0, %s18
      %s21 = sphi 0, %s19
      %s22 = sphi 0, %s20
      %s34 = sphi 0, %s36
      %s37 = sphi 0, %s34
      %s38 = sphi 0, %s37
      %s54 = sphi 0, %s38
      %s62 = sphi 0, %s64
      %s65 = sphi 0, %s62
      %s66 = sphi 0, %s65
      %s82 = sphi 0, %s66
      %s88 = sphi 0, %s90
      %s91 = sphi 0, %s88
      %s92 = sphi 0, %s91
      %s108 = sphi 0, %s92
      %s114 = sphi 0, %s116
      %s117 = sphi 0, %s114
      %s118 = sphi 0, %s117
      %s134 = sphi 0, %s118
    $region4: #{bbox_loss.1} parent=1 // loop_header_branch
      %13 = sbr.rel (%p11) target = $region8
    $region5: #{bbox_loss.1} parent=1 // loop_body
      %s15 = ssub.s32 %s10, 1
      %s16 = ssub.s32 %s10, 2
      %s23 = sadd.s32 1, %s18
      %p24 = scmp.ge.s32.totalorder %s23, 1
      %s25 = scalar_select %p24, 0, %s23
      %s26 = sadd.s32 1, %s17
      %s27 = scalar_select %p24, %s26, %s17
      %p28 = scmp.ge.s32.totalorder %s27, 2
      %s29 = scalar_select %p28, 0, %s27
      %s30 = sadd.s32 %s17, %s18
      %s31 = sadd.s32 %s29, %s25
      %s32 = ssub.s32 %s30, %s31
      %p33 = scmp.eq.s32.totalorder %s32, 0
      %s35 = sadd.s32 %s34, 1
      %s36 = scalar_select %p33, %s34, %s35
      %p39 = pneg %p33
      %p40 = scmp.eq.s32.totalorder %s10, 1
      %p41 = por %p39, %p40
      %p42 = scmp.ne.s32.totalorder %s34, %s37
      %p43 = scmp.eq.s32.totalorder %s10, 0
      %p44 = por %p42, %p43
      %p45 = scmp.ne.s32.totalorder %s34, %s37
      %p46 = scmp.eq.s32.totalorder %s15, 1
      %p47 = por %p45, %p46
      %p48 = scmp.ne.s32.totalorder %s37, %s38
      %p49 = scmp.eq.s32.totalorder %s15, 0
      %p50 = por %p48, %p49
      %p51 = scmp.ne.s32.totalorder %s37, %s38
      %p52 = scmp.eq.s32.totalorder %s16, 1
      %p53 = por %p51, %p52
      %p55 = scmp.ne.s32.totalorder %s38, %s54
      %p56 = scmp.eq.s32.totalorder %s16, 0
      %p57 = por %p55, %p56
      %s58 = sadd.s32 %s17, %s18
      %s59 = sadd.s32 %s29, %s25
      %s60 = ssub.s32 %s58, %s59
      %p61 = scmp.eq.s32.totalorder %s60, 0
      %s63 = sadd.s32 %s62, 1
      %s64 = scalar_select %p61, %s62, %s63
      %p67 = pneg %p61
      %p68 = scmp.eq.s32.totalorder %s10, 1
      %p69 = por %p67, %p68
      %p70 = scmp.ne.s32.totalorder %s62, %s65
      %p71 = scmp.eq.s32.totalorder %s10, 0
      %p72 = por %p70, %p71
      %p73 = scmp.ne.s32.totalorder %s62, %s65
      %p74 = scmp.eq.s32.totalorder %s15, 1
      %p75 = por %p73, %p74
      %p76 = scmp.ne.s32.totalorder %s65, %s66
      %p77 = scmp.eq.s32.totalorder %s15, 0
      %p78 = por %p76, %p77
      %p79 = scmp.ne.s32.totalorder %s65, %s66
      %p80 = scmp.eq.s32.totalorder %s16, 1
      %p81 = por %p79, %p80
      %p83 = scmp.ne.s32.totalorder %s66, %s82
      %p84 = scmp.eq.s32.totalorder %s16, 0
      %p85 = por %p83, %p84
      %s86 = ssub.s32 %s17, %s29
      %p87 = scmp.eq.s32.totalorder %s86, 0
      %s89 = sadd.s32 %s88, 1
      %s90 = scalar_select %p87, %s88, %s89
      %p93 = pneg %p87
      %p94 = scmp.eq.s32.totalorder %s10, 1
      %p95 = por %p93, %p94
      %p96 = scmp.ne.s32.totalorder %s88, %s91
      %p97 = scmp.eq.s32.totalorder %s10, 0
      %p98 = por %p96, %p97
      %p99 = scmp.ne.s32.totalorder %s88, %s91
      %p100 = scmp.eq.s32.totalorder %s15, 1
      %p101 = por %p99, %p100
      %p102 = scmp.ne.s32.totalorder %s91, %s92
      %p103 = scmp.eq.s32.totalorder %s15, 0
      %p104 = por %p102, %p103
      %p105 = scmp.ne.s32.totalorder %s91, %s92
      %p106 = scmp.eq.s32.totalorder %s16, 1
      %p107 = por %p105, %p106
      %p109 = scmp.ne.s32.totalorder %s92, %s108
      %p110 = scmp.eq.s32.totalorder %s16, 0
      %p111 = por %p109, %p110
      %s112 = ssub.s32 %s17, %s29
      %p113 = scmp.eq.s32.totalorder %s112, 0
      %s115 = sadd.s32 %s114, 1
      %s116 = scalar_select %p113, %s114, %s115
      %p119 = pneg %p113
      %p120 = scmp.eq.s32.totalorder %s10, 1
      %p121 = por %p119, %p120
      %p122 = scmp.ne.s32.totalorder %s114, %s117
      %p123 = scmp.eq.s32.totalorder %s10, 0
      %p124 = por %p122, %p123
      %p125 = scmp.ne.s32.totalorder %s114, %s117
      %p126 = scmp.eq.s32.totalorder %s15, 1
      %p127 = por %p125, %p126
      %p128 = scmp.ne.s32.totalorder %s117, %s118
      %p129 = scmp.eq.s32.totalorder %s15, 0
      %p130 = por %p128, %p129
      %p131 = scmp.ne.s32.totalorder %s117, %s118
      %p132 = scmp.eq.s32.totalorder %s16, 1
      %p133 = por %p131, %p132
      %p135 = scmp.ne.s32.totalorder %s118, %s134
      %p136 = scmp.eq.s32.totalorder %s16, 0
      %p137 = por %p135, %p136
      %p138 = scmp.le.s32.totalorder 1, %s10
      %p139 = scmp.lt.s32.totalorder %s10, 3
      %p140 = pnand %p138, %p139
      %p141 = pneg %p140
      // Predicated region
      $region9: #{bbox_loss.1} parent=5 // pred_check
        _
      $region10: #{bbox_loss.1} parent=5 // pred_check_branch
        %143 = sbr.rel (%p140) target = $region12
      $region11: #{bbox_loss.1} parent=5 // pred_region
        %s144 = ssub.s32 %s10, 1
      $region12: #{bbox_loss.1} parent=5 // pred_fallthru
        _
      %p145 = scmp.lt.s32.totalorder %s10, 2
      // Predicated region
      $region13: #{bbox_loss.1} parent=5 // pred_check
        %p146 = pneg %p145
      $region14: #{bbox_loss.1} parent=5 // pred_check_branch
        %148 = sbr.rel (%p146) target = $region16
      $region15: #{bbox_loss.1} parent=5 // pred_region
        // Predicated region
        $region17: #{bbox_loss.1} parent=15 // pred_check
          %p149 = pneg %p44
        $region18: #{bbox_loss.1} parent=15 // pred_check_branch
          %151 = sbr.rel (%p149) target = $region20
        $region19: #{bbox_loss.1} parent=15 // pred_region
          %s152 = sand.u32 %s34, 1
          %s153 = sand.u32 %s34, 1
          %s154 = smul.addr %s153, 176
          %s155 = scalar_lea.vmem [#allocation2], %s154
          %s156 = sadd.s32 %s17, %s18
          %s157 = smul.u32 2, %s156
          %s158 = smul.addr %s157, 8
          %s159 = scalar_lea.vmem %s0, %s158
          // Predicated region
          $region21: #{bbox_loss.1} parent=19 // pred_check
            _
          $region22: #{bbox_loss.1} parent=19 // pred_check_branch
            %161 = sbr.rel (0) target = $region24
          $region23: #{bbox_loss.1} parent=19 // pred_region
            // Predicated region
            $region25: #{bbox_loss.1} parent=23 // pred_check
              _
            $region26: #{bbox_loss.1} parent=23 // pred_check_branch
              %163 = sbr.rel (0) target = $region28
            $region27: #{bbox_loss.1} parent=23 // pred_region
              // Predicated region
              $region40: #{bbox_loss.1} parent=27 // pred_check
                _
              $region41: #{bbox_loss.1} parent=27 // pred_check_branch
                %221 = sbr.rel (0) target = $region43
              $region42: #{bbox_loss.1} parent=27 // pred_region
                loop: start=0, step=1, limit=1
                $region44: #{bbox_loss.1} parent=42 // loop_pre_header
                  _
                $region45: #{bbox_loss.1} parent=42 // loop_header
                  %s223 = sphi 0, %s227
                  %p224 = scmp.ge.s32.totalorder %s223, 1
                  %s228 = sphi %s159, %s159
                  %s229 = sphi %s155, %s155
                $region46: #{bbox_loss.1} parent=42 // loop_header_branch
                  %226 = sbr.rel (%p224) target = $region50
                $region47: #{bbox_loss.1} parent=42 // loop_body
                  %v230 = vld [vmem:[%s228] sm:$0xff]
                  %231 = vst [vmem:[%s229] sm:$0xff] %v230
                  %v232 = vld [vmem:[%s228 + $0x8] sm:$0xff]
                  %233 = vst [vmem:[%s229 + $0x8] sm:$0xff] %v232
                  %v234 = vld [vmem:[%s228 + $0x20] sm:$0xff]
                  %235 = vst [vmem:[%s229 + $0x10] sm:$0xff] %v234
                  %v236 = vld [vmem:[%s228 + $0x28] sm:$0xff]
                  %237 = vst [vmem:[%s229 + $0x18] sm:$0xff] %v236
                  %v238 = vld [vmem:[%s228 + $0x40] sm:$0xff]
                  %239 = vst [vmem:[%s229 + $0x20] sm:$0xff] %v238
                  %v240 = vld [vmem:[%s228 + $0x48] sm:$0xff]
                  %241 = vst [vmem:[%s229 + $0x28] sm:$0xff] %v240
                  %v242 = vld [vmem:[%s228 + $0x60] sm:$0xff]
                  %243 = vst [vmem:[%s229 + $0x30] sm:$0xff] %v242
                  %v244 = vld [vmem:[%s228 + $0x68] sm:$0xff]
                  %245 = vst [vmem:[%s229 + $0x38] sm:$0xff] %v244
                  %v246 = vld [vmem:[%s228 + $0x80] sm:$0xff]
                  %247 = vst [vmem:[%s229 + $0x40] sm:$0xff] %v246
                  %v248 = vld [vmem:[%s228 + $0x88] sm:$0xff]
                  %249 = vst [vmem:[%s229 + $0x48] sm:$0xff] %v248
                  %v250 = vld [vmem:[%s228 + $0xa0] sm:$0xff]
                  %251 = vst [vmem:[%s229 + $0x50] sm:$0xff] %v250
                  %v252 = vld [vmem:[%s228 + $0xa8] sm:$0xff]
                  %253 = vst [vmem:[%s229 + $0x58] sm:$0xff] %v252
                  %v254 = vld [vmem:[%s228 + $0xc0] sm:$0xff]
                  %255 = vst [vmem:[%s229 + $0x60] sm:$0xff] %v254
                  %v256 = vld [vmem:[%s228 + $0xc8] sm:$0xff]
                  %257 = vst [vmem:[%s229 + $0x68] sm:$0xff] %v256
                  %v258 = vld [vmem:[%s228 + $0xe0] sm:$0xff]
                  %259 = vst [vmem:[%s229 + $0x70] sm:$0xff] %v258
                  %v260 = vld [vmem:[%s228 + $0xe8] sm:$0xff]
                  %261 = vst [vmem:[%s229 + $0x78] sm:$0xff] %v260
                  %v262 = vld [vmem:[%s228 + $0x100] sm:$0xff]
                  %263 = vst [vmem:[%s229 + $0x80] sm:$0xff] %v262
                  %v264 = vld [vmem:[%s228 + $0x108] sm:$0xff]
                  %265 = vst [vmem:[%s229 + $0x88] sm:$0xff] %v264
                  %v266 = vld [vmem:[%s228 + $0x120] sm:$0xff]
                  %267 = vst [vmem:[%s229 + $0x90] sm:$0xff] %v266
                  %v268 = vld [vmem:[%s228 + $0x128] sm:$0xff]
                  %269 = vst [vmem:[%s229 + $0x98] sm:$0xff] %v268
                  %v270 = vld [vmem:[%s228 + $0x140] sm:$0xff]
                  %271 = vst [vmem:[%s229 + $0xa0] sm:$0xff] %v270
                  %v272 = vld [vmem:[%s228 + $0x148] sm:$0xff]
                  %273 = vst [vmem:[%s229 + $0xa8] sm:$0xff] %v272
                $region48: #{bbox_loss.1} parent=42 // loop_footer
                  %s227 = sadd.s32 1, %s223
                $region49: #{bbox_loss.1} parent=42 // loop_footer_branch
                  %222 = sbr.rel target = $region45
                $region50: #{bbox_loss.1} parent=42 // loop_exit
                  _
              $region43: #{bbox_loss.1} parent=27 // pred_fallthru
                _
              // Predicated region
              $region51: #{bbox_loss.1} parent=27 // pred_check
                _
              $region52: #{bbox_loss.1} parent=27 // pred_check_branch
                %275 = sbr.rel target = $region54
              $region53: #{bbox_loss.1} parent=27 // pred_region
                _
              $region54: #{bbox_loss.1} parent=27 // pred_fallthru
                _
            $region28: #{bbox_loss.1} parent=23 // pred_fallthru
              _
            // Predicated region
            $region29: #{bbox_loss.1} parent=23 // pred_check
              _
            $region30: #{bbox_loss.1} parent=23 // pred_check_branch
              %165 = sbr.rel target = $region32
            $region31: #{bbox_loss.1} parent=23 // pred_region
              %s167 = ssub.s32 256, 1
              loop: start=0, step=1, limit=1
              $region33: #{bbox_loss.1} parent=31 // loop_pre_header
                _
              $region34: #{bbox_loss.1} parent=31 // loop_header
                %s169 = sphi 0, %s173
                %p170 = scmp.ge.s32.totalorder %s169, 1
                %s174 = sphi %s159, %s159
                %s175 = sphi %s155, %s155
              $region35: #{bbox_loss.1} parent=31 // loop_header_branch
                %172 = sbr.rel (%p170) target = $region39
              $region36: #{bbox_loss.1} parent=31 // loop_body
                %v176 = vld [vmem:[%s174] sm:%s167]
                %177 = vst [vmem:[%s175] sm:%s167] %v176
                %v178 = vld [vmem:[%s174 + $0x8] sm:%s167]
                %179 = vst [vmem:[%s175 + $0x8] sm:%s167] %v178
                %v180 = vld [vmem:[%s174 + $0x20] sm:%s167]
                %181 = vst [vmem:[%s175 + $0x10] sm:%s167] %v180
                %v182 = vld [vmem:[%s174 + $0x28] sm:%s167]
                %183 = vst [vmem:[%s175 + $0x18] sm:%s167] %v182
                %v184 = vld [vmem:[%s174 + $0x40] sm:%s167]
                %185 = vst [vmem:[%s175 + $0x20] sm:%s167] %v184
                %v186 = vld [vmem:[%s174 + $0x48] sm:%s167]
                %187 = vst [vmem:[%s175 + $0x28] sm:%s167] %v186
                %v188 = vld [vmem:[%s174 + $0x60] sm:%s167]
                %189 = vst [vmem:[%s175 + $0x30] sm:%s167] %v188
                %v190 = vld [vmem:[%s174 + $0x68] sm:%s167]
                %191 = vst [vmem:[%s175 + $0x38] sm:%s167] %v190
                %v192 = vld [vmem:[%s174 + $0x80] sm:%s167]
                %193 = vst [vmem:[%s175 + $0x40] sm:%s167] %v192
                %v194 = vld [vmem:[%s174 + $0x88] sm:%s167]
                %195 = vst [vmem:[%s175 + $0x48] sm:%s167] %v194
                %v196 = vld [vmem:[%s174 + $0xa0] sm:%s167]
                %197 = vst [vmem:[%s175 + $0x50] sm:%s167] %v196
                %v198 = vld [vmem:[%s174 + $0xa8] sm:%s167]
                %199 = vst [vmem:[%s175 + $0x58] sm:%s167] %v198
                %v200 = vld [vmem:[%s174 + $0xc0] sm:%s167]
                %201 = vst [vmem:[%s175 + $0x60] sm:%s167] %v200
                %v202 = vld [vmem:[%s174 + $0xc8] sm:%s167]
                %203 = vst [vmem:[%s175 + $0x68] sm:%s167] %v202
                %v204 = vld [vmem:[%s174 + $0xe0] sm:%s167]
                %205 = vst [vmem:[%s175 + $0x70] sm:%s167] %v204
                %v206 = vld [vmem:[%s174 + $0xe8] sm:%s167]
                %207 = vst [vmem:[%s175 + $0x78] sm:%s167] %v206
                %v208 = vld [vmem:[%s174 + $0x100] sm:%s167]
                %209 = vst [vmem:[%s175 + $0x80] sm:%s167] %v208
                %v210 = vld [vmem:[%s174 + $0x108] sm:%s167]
                %211 = vst [vmem:[%s175 + $0x88] sm:%s167] %v210
                %v212 = vld [vmem:[%s174 + $0x120] sm:%s167]
                %213 = vst [vmem:[%s175 + $0x90] sm:%s167] %v212
                %v214 = vld [vmem:[%s174 + $0x128] sm:%s167]
                %215 = vst [vmem:[%s175 + $0x98] sm:%s167] %v214
                %v216 = vld [vmem:[%s174 + $0x140] sm:%s167]
                %217 = vst [vmem:[%s175 + $0xa0] sm:%s167] %v216
                %v218 = vld [vmem:[%s174 + $0x148] sm:%s167]
                %219 = vst [vmem:[%s175 + $0xa8] sm:%s167] %v218
              $region37: #{bbox_loss.1} parent=31 // loop_footer
                %s173 = sadd.s32 1, %s169
              $region38: #{bbox_loss.1} parent=31 // loop_footer_branch
                %168 = sbr.rel target = $region34
              $region39: #{bbox_loss.1} parent=31 // loop_exit
                _
            $region32: #{bbox_loss.1} parent=23 // pred_fallthru
              _
          $region24: #{bbox_loss.1} parent=19 // pred_fallthru
            _
          %276 = vnop
        $region20: #{bbox_loss.1} parent=15 // pred_fallthru
          _
        // Predicated region
        $region55: #{bbox_loss.1} parent=15 // pred_check
          %p277 = pneg %p72
        $region56: #{bbox_loss.1} parent=15 // pred_check_branch
          %279 = sbr.rel (%p277) target = $region58
        $region57: #{bbox_loss.1} parent=15 // pred_region
          %s280 = sand.u32 %s62, 1
          %s281 = sand.u32 %s62, 1
          %s282 = smul.addr %s281, 1024
          %s283 = scalar_lea.vmem [#allocation3], %s282
          %s284 = sadd.s32 %s17, %s18
          %s285 = smul.u32 2, %s284
          %s286 = smul.addr %s285, 8
          %s287 = scalar_lea.vmem %s1, %s286
          // Predicated region
          $region59: #{bbox_loss.1} parent=57 // pred_check
            _
          $region60: #{bbox_loss.1} parent=57 // pred_check_branch
            %289 = sbr.rel (0) target = $region62
          $region61: #{bbox_loss.1} parent=57 // pred_region
            // Predicated region
            $region63: #{bbox_loss.1} parent=61 // pred_check
              _
            $region64: #{bbox_loss.1} parent=61 // pred_check_branch
              %291 = sbr.rel (0) target = $region66
            $region65: #{bbox_loss.1} parent=61 // pred_region
              // Predicated region
              $region78: #{bbox_loss.1} parent=65 // pred_check
                _
              $region79: #{bbox_loss.1} parent=65 // pred_check_branch
                %561 = sbr.rel (0) target = $region81
              $region80: #{bbox_loss.1} parent=65 // pred_region
                loop: start=0, step=1, limit=1
                $region82: #{bbox_loss.1} parent=80 // loop_pre_header
                  _
                $region83: #{bbox_loss.1} parent=80 // loop_header
                  %s563 = sphi 0, %s567
                  %p564 = scmp.ge.s32.totalorder %s563, 1
                  %s568 = sphi %s287, %s287
                  %s569 = sphi %s283, %s283
                $region84: #{bbox_loss.1} parent=80 // loop_header_branch
                  %566 = sbr.rel (%p564) target = $region88
                $region85: #{bbox_loss.1} parent=80 // loop_body
                  %v570 = vld [vmem:[%s568] sm:$0xff]
                  %571 = vst [vmem:[%s569] sm:$0xff] %v570
                  %v572 = vld [vmem:[%s568 + $0x8] sm:$0xff]
                  %573 = vst [vmem:[%s569 + $0x8] sm:$0xff] %v572
                  %v574 = vld [vmem:[%s568 + $0x20] sm:$0xff]
                  %575 = vst [vmem:[%s569 + $0x10] sm:$0xff] %v574
                  %v576 = vld [vmem:[%s568 + $0x28] sm:$0xff]
                  %577 = vst [vmem:[%s569 + $0x18] sm:$0xff] %v576
                  %v578 = vld [vmem:[%s568 + $0x40] sm:$0xff]
                  %579 = vst [vmem:[%s569 + $0x20] sm:$0xff] %v578
                  %v580 = vld [vmem:[%s568 + $0x48] sm:$0xff]
                  %581 = vst [vmem:[%s569 + $0x28] sm:$0xff] %v580
                  %v582 = vld [vmem:[%s568 + $0x60] sm:$0xff]
                  %583 = vst [vmem:[%s569 + $0x30] sm:$0xff] %v582
                  %v584 = vld [vmem:[%s568 + $0x68] sm:$0xff]
                  %585 = vst [vmem:[%s569 + $0x38] sm:$0xff] %v584
                  %v586 = vld [vmem:[%s568 + $0x80] sm:$0xff]
                  %587 = vst [vmem:[%s569 + $0x40] sm:$0xff] %v586
                  %v588 = vld [vmem:[%s568 + $0x88] sm:$0xff]
                  %589 = vst [vmem:[%s569 + $0x48] sm:$0xff] %v588
                  %v590 = vld [vmem:[%s568 + $0xa0] sm:$0xff]
                  %591 = vst [vmem:[%s569 + $0x50] sm:$0xff] %v590
                  %v592 = vld [vmem:[%s568 + $0xa8] sm:$0xff]
                  %593 = vst [vmem:[%s569 + $0x58] sm:$0xff] %v592
                  %v594 = vld [vmem:[%s568 + $0xc0] sm:$0xff]
                  %595 = vst [vmem:[%s569 + $0x60] sm:$0xff] %v594
                  %v596 = vld [vmem:[%s568 + $0xc8] sm:$0xff]
                  %597 = vst [vmem:[%s569 + $0x68] sm:$0xff] %v596
                  %v598 = vld [vmem:[%s568 + $0xe0] sm:$0xff]
                  %599 = vst [vmem:[%s569 + $0x70] sm:$0xff] %v598
                  %v600 = vld [vmem:[%s568 + $0xe8] sm:$0xff]
                  %601 = vst [vmem:[%s569 + $0x78] sm:$0xff] %v600
                  %v602 = vld [vmem:[%s568 + $0x100] sm:$0xff]
                  %603 = vst [vmem:[%s569 + $0x80] sm:$0xff] %v602
                  %v604 = vld [vmem:[%s568 + $0x108] sm:$0xff]
                  %605 = vst [vmem:[%s569 + $0x88] sm:$0xff] %v604
                  %v606 = vld [vmem:[%s568 + $0x120] sm:$0xff]
                  %607 = vst [vmem:[%s569 + $0x90] sm:$0xff] %v606
                  %v608 = vld [vmem:[%s568 + $0x128] sm:$0xff]
                  %609 = vst [vmem:[%s569 + $0x98] sm:$0xff] %v608
                  %v610 = vld [vmem:[%s568 + $0x140] sm:$0xff]
                  %611 = vst [vmem:[%s569 + $0xa0] sm:$0xff] %v610
                  %v612 = vld [vmem:[%s568 + $0x148] sm:$0xff]
                  %613 = vst [vmem:[%s569 + $0xa8] sm:$0xff] %v612
                  %v614 = vld [vmem:[%s568 + $0x160] sm:$0xff]
                  %615 = vst [vmem:[%s569 + $0xb0] sm:$0xff] %v614
                  %v616 = vld [vmem:[%s568 + $0x168] sm:$0xff]
                  %617 = vst [vmem:[%s569 + $0xb8] sm:$0xff] %v616
                  %v618 = vld [vmem:[%s568 + $0x180] sm:$0xff]
                  %619 = vst [vmem:[%s569 + $0xc0] sm:$0xff] %v618
                  %v620 = vld [vmem:[%s568 + $0x188] sm:$0xff]
                  %621 = vst [vmem:[%s569 + $0xc8] sm:$0xff] %v620
                  %v622 = vld [vmem:[%s568 + $0x1a0] sm:$0xff]
                  %623 = vst [vmem:[%s569 + $0xd0] sm:$0xff] %v622
                  %v624 = vld [vmem:[%s568 + $0x1a8] sm:$0xff]
                  %625 = vst [vmem:[%s569 + $0xd8] sm:$0xff] %v624
                  %v626 = vld [vmem:[%s568 + $0x1c0] sm:$0xff]
                  %627 = vst [vmem:[%s569 + $0xe0] sm:$0xff] %v626
                  %v628 = vld [vmem:[%s568 + $0x1c8] sm:$0xff]
                  %629 = vst [vmem:[%s569 + $0xe8] sm:$0xff] %v628
                  %v630 = vld [vmem:[%s568 + $0x1e0] sm:$0xff]
                  %631 = vst [vmem:[%s569 + $0xf0] sm:$0xff] %v630
                  %v632 = vld [vmem:[%s568 + $0x1e8] sm:$0xff]
                  %633 = vst [vmem:[%s569 + $0xf8] sm:$0xff] %v632
                  %v634 = vld [vmem:[%s568 + $0x200] sm:$0xff]
                  %635 = vst [vmem:[%s569 + $0x100] sm:$0xff] %v634
                  %v636 = vld [vmem:[%s568 + $0x208] sm:$0xff]
                  %637 = vst [vmem:[%s569 + $0x108] sm:$0xff] %v636
                  %v638 = vld [vmem:[%s568 + $0x220] sm:$0xff]
                  %639 = vst [vmem:[%s569 + $0x110] sm:$0xff] %v638
                  %v640 = vld [vmem:[%s568 + $0x228] sm:$0xff]
                  %641 = vst [vmem:[%s569 + $0x118] sm:$0xff] %v640
                  %v642 = vld [vmem:[%s568 + $0x240] sm:$0xff]
                  %643 = vst [vmem:[%s569 + $0x120] sm:$0xff] %v642
                  %v644 = vld [vmem:[%s568 + $0x248] sm:$0xff]
                  %645 = vst [vmem:[%s569 + $0x128] sm:$0xff] %v644
                  %v646 = vld [vmem:[%s568 + $0x260] sm:$0xff]
                  %647 = vst [vmem:[%s569 + $0x130] sm:$0xff] %v646
                  %v648 = vld [vmem:[%s568 + $0x268] sm:$0xff]
                  %649 = vst [vmem:[%s569 + $0x138] sm:$0xff] %v648
                  %v650 = vld [vmem:[%s568 + $0x280] sm:$0xff]
                  %651 = vst [vmem:[%s569 + $0x140] sm:$0xff] %v650
                  %v652 = vld [vmem:[%s568 + $0x288] sm:$0xff]
                  %653 = vst [vmem:[%s569 + $0x148] sm:$0xff] %v652
                  %v654 = vld [vmem:[%s568 + $0x2a0] sm:$0xff]
                  %655 = vst [vmem:[%s569 + $0x150] sm:$0xff] %v654
                  %v656 = vld [vmem:[%s568 + $0x2a8] sm:$0xff]
                  %657 = vst [vmem:[%s569 + $0x158] sm:$0xff] %v656
                  %v658 = vld [vmem:[%s568 + $0x2c0] sm:$0xff]
                  %659 = vst [vmem:[%s569 + $0x160] sm:$0xff] %v658
                  %v660 = vld [vmem:[%s568 + $0x2c8] sm:$0xff]
                  %661 = vst [vmem:[%s569 + $0x168] sm:$0xff] %v660
                  %v662 = vld [vmem:[%s568 + $0x2e0] sm:$0xff]
                  %663 = vst [vmem:[%s569 + $0x170] sm:$0xff] %v662
                  %v664 = vld [vmem:[%s568 + $0x2e8] sm:$0xff]
                  %665 = vst [vmem:[%s569 + $0x178] sm:$0xff] %v664
                  %v666 = vld [vmem:[%s568 + $0x300] sm:$0xff]
                  %667 = vst [vmem:[%s569 + $0x180] sm:$0xff] %v666
                  %v668 = vld [vmem:[%s568 + $0x308] sm:$0xff]
                  %669 = vst [vmem:[%s569 + $0x188] sm:$0xff] %v668
                  %v670 = vld [vmem:[%s568 + $0x320] sm:$0xff]
                  %671 = vst [vmem:[%s569 + $0x190] sm:$0xff] %v670
                  %v672 = vld [vmem:[%s568 + $0x328] sm:$0xff]
                  %673 = vst [vmem:[%s569 + $0x198] sm:$0xff] %v672
                  %v674 = vld [vmem:[%s568 + $0x340] sm:$0xff]
                  %675 = vst [vmem:[%s569 + $0x1a0] sm:$0xff] %v674
                  %v676 = vld [vmem:[%s568 + $0x348] sm:$0xff]
                  %677 = vst [vmem:[%s569 + $0x1a8] sm:$0xff] %v676
                  %v678 = vld [vmem:[%s568 + $0x360] sm:$0xff]
                  %679 = vst [vmem:[%s569 + $0x1b0] sm:$0xff] %v678
                  %v680 = vld [vmem:[%s568 + $0x368] sm:$0xff]
                  %681 = vst [vmem:[%s569 + $0x1b8] sm:$0xff] %v680
                  %v682 = vld [vmem:[%s568 + $0x380] sm:$0xff]
                  %683 = vst [vmem:[%s569 + $0x1c0] sm:$0xff] %v682
                  %v684 = vld [vmem:[%s568 + $0x388] sm:$0xff]
                  %685 = vst [vmem:[%s569 + $0x1c8] sm:$0xff] %v684
                  %v686 = vld [vmem:[%s568 + $0x3a0] sm:$0xff]
                  %687 = vst [vmem:[%s569 + $0x1d0] sm:$0xff] %v686
                  %v688 = vld [vmem:[%s568 + $0x3a8] sm:$0xff]
                  %689 = vst [vmem:[%s569 + $0x1d8] sm:$0xff] %v688
                  %v690 = vld [vmem:[%s568 + $0x3c0] sm:$0xff]
                  %691 = vst [vmem:[%s569 + $0x1e0] sm:$0xff] %v690
                  %v692 = vld [vmem:[%s568 + $0x3c8] sm:$0xff]
                  %693 = vst [vmem:[%s569 + $0x1e8] sm:$0xff] %v692
                  %v694 = vld [vmem:[%s568 + $0x3e0] sm:$0xff]
                  %695 = vst [vmem:[%s569 + $0x1f0] sm:$0xff] %v694
                  %v696 = vld [vmem:[%s568 + $0x3e8] sm:$0xff]
                  %697 = vst [vmem:[%s569 + $0x1f8] sm:$0xff] %v696
                  %v698 = vld [vmem:[%s568 + $0x400] sm:$0xff]
                  %699 = vst [vmem:[%s569 + $0x200] sm:$0xff] %v698
                  %v700 = vld [vmem:[%s568 + $0x408] sm:$0xff]
                  %701 = vst [vmem:[%s569 + $0x208] sm:$0xff] %v700
                  %v702 = vld [vmem:[%s568 + $0x420] sm:$0xff]
                  %703 = vst [vmem:[%s569 + $0x210] sm:$0xff] %v702
                  %v704 = vld [vmem:[%s568 + $0x428] sm:$0xff]
                  %705 = vst [vmem:[%s569 + $0x218] sm:$0xff] %v704
                  %v706 = vld [vmem:[%s568 + $0x440] sm:$0xff]
                  %707 = vst [vmem:[%s569 + $0x220] sm:$0xff] %v706
                  %v708 = vld [vmem:[%s568 + $0x448] sm:$0xff]
                  %709 = vst [vmem:[%s569 + $0x228] sm:$0xff] %v708
                  %v710 = vld [vmem:[%s568 + $0x460] sm:$0xff]
                  %711 = vst [vmem:[%s569 + $0x230] sm:$0xff] %v710
                  %v712 = vld [vmem:[%s568 + $0x468] sm:$0xff]
                  %713 = vst [vmem:[%s569 + $0x238] sm:$0xff] %v712
                  %v714 = vld [vmem:[%s568 + $0x480] sm:$0xff]
                  %715 = vst [vmem:[%s569 + $0x240] sm:$0xff] %v714
                  %v716 = vld [vmem:[%s568 + $0x488] sm:$0xff]
                  %717 = vst [vmem:[%s569 + $0x248] sm:$0xff] %v716
                  %v718 = vld [vmem:[%s568 + $0x4a0] sm:$0xff]
                  %719 = vst [vmem:[%s569 + $0x250] sm:$0xff] %v718
                  %v720 = vld [vmem:[%s568 + $0x4a8] sm:$0xff]
                  %721 = vst [vmem:[%s569 + $0x258] sm:$0xff] %v720
                  %v722 = vld [vmem:[%s568 + $0x4c0] sm:$0xff]
                  %723 = vst [vmem:[%s569 + $0x260] sm:$0xff] %v722
                  %v724 = vld [vmem:[%s568 + $0x4c8] sm:$0xff]
                  %725 = vst [vmem:[%s569 + $0x268] sm:$0xff] %v724
                  %v726 = vld [vmem:[%s568 + $0x4e0] sm:$0xff]
                  %727 = vst [vmem:[%s569 + $0x270] sm:$0xff] %v726
                  %v728 = vld [vmem:[%s568 + $0x4e8] sm:$0xff]
                  %729 = vst [vmem:[%s569 + $0x278] sm:$0xff] %v728
                  %v730 = vld [vmem:[%s568 + $0x500] sm:$0xff]
                  %731 = vst [vmem:[%s569 + $0x280] sm:$0xff] %v730
                  %v732 = vld [vmem:[%s568 + $0x508] sm:$0xff]
                  %733 = vst [vmem:[%s569 + $0x288] sm:$0xff] %v732
                  %v734 = vld [vmem:[%s568 + $0x520] sm:$0xff]
                  %735 = vst [vmem:[%s569 + $0x290] sm:$0xff] %v734
                  %v736 = vld [vmem:[%s568 + $0x528] sm:$0xff]
                  %737 = vst [vmem:[%s569 + $0x298] sm:$0xff] %v736
                  %v738 = vld [vmem:[%s568 + $0x540] sm:$0xff]
                  %739 = vst [vmem:[%s569 + $0x2a0] sm:$0xff] %v738
                  %v740 = vld [vmem:[%s568 + $0x548] sm:$0xff]
                  %741 = vst [vmem:[%s569 + $0x2a8] sm:$0xff] %v740
                  %v742 = vld [vmem:[%s568 + $0x560] sm:$0xff]
                  %743 = vst [vmem:[%s569 + $0x2b0] sm:$0xff] %v742
                  %v744 = vld [vmem:[%s568 + $0x568] sm:$0xff]
                  %745 = vst [vmem:[%s569 + $0x2b8] sm:$0xff] %v744
                  %v746 = vld [vmem:[%s568 + $0x580] sm:$0xff]
                  %747 = vst [vmem:[%s569 + $0x2c0] sm:$0xff] %v746
                  %v748 = vld [vmem:[%s568 + $0x588] sm:$0xff]
                  %749 = vst [vmem:[%s569 + $0x2c8] sm:$0xff] %v748
                  %v750 = vld [vmem:[%s568 + $0x5a0] sm:$0xff]
                  %751 = vst [vmem:[%s569 + $0x2d0] sm:$0xff] %v750
                  %v752 = vld [vmem:[%s568 + $0x5a8] sm:$0xff]
                  %753 = vst [vmem:[%s569 + $0x2d8] sm:$0xff] %v752
                  %v754 = vld [vmem:[%s568 + $0x5c0] sm:$0xff]
                  %755 = vst [vmem:[%s569 + $0x2e0] sm:$0xff] %v754
                  %v756 = vld [vmem:[%s568 + $0x5c8] sm:$0xff]
                  %757 = vst [vmem:[%s569 + $0x2e8] sm:$0xff] %v756
                  %v758 = vld [vmem:[%s568 + $0x5e0] sm:$0xff]
                  %759 = vst [vmem:[%s569 + $0x2f0] sm:$0xff] %v758
                  %v760 = vld [vmem:[%s568 + $0x5e8] sm:$0xff]
                  %761 = vst [vmem:[%s569 + $0x2f8] sm:$0xff] %v760
                  %v762 = vld [vmem:[%s568 + $0x600] sm:$0xff]
                  %763 = vst [vmem:[%s569 + $0x300] sm:$0xff] %v762
                  %v764 = vld [vmem:[%s568 + $0x608] sm:$0xff]
                  %765 = vst [vmem:[%s569 + $0x308] sm:$0xff] %v764
                  %v766 = vld [vmem:[%s568 + $0x620] sm:$0xff]
                  %767 = vst [vmem:[%s569 + $0x310] sm:$0xff] %v766
                  %v768 = vld [vmem:[%s568 + $0x628] sm:$0xff]
                  %769 = vst [vmem:[%s569 + $0x318] sm:$0xff] %v768
                  %v770 = vld [vmem:[%s568 + $0x640] sm:$0xff]
                  %771 = vst [vmem:[%s569 + $0x320] sm:$0xff] %v770
                  %v772 = vld [vmem:[%s568 + $0x648] sm:$0xff]
                  %773 = vst [vmem:[%s569 + $0x328] sm:$0xff] %v772
                  %v774 = vld [vmem:[%s568 + $0x660] sm:$0xff]
                  %775 = vst [vmem:[%s569 + $0x330] sm:$0xff] %v774
                  %v776 = vld [vmem:[%s568 + $0x668] sm:$0xff]
                  %777 = vst [vmem:[%s569 + $0x338] sm:$0xff] %v776
                  %v778 = vld [vmem:[%s568 + $0x680] sm:$0xff]
                  %779 = vst [vmem:[%s569 + $0x340] sm:$0xff] %v778
                  %v780 = vld [vmem:[%s568 + $0x688] sm:$0xff]
                  %781 = vst [vmem:[%s569 + $0x348] sm:$0xff] %v780
                  %v782 = vld [vmem:[%s568 + $0x6a0] sm:$0xff]
                  %783 = vst [vmem:[%s569 + $0x350] sm:$0xff] %v782
                  %v784 = vld [vmem:[%s568 + $0x6a8] sm:$0xff]
                  %785 = vst [vmem:[%s569 + $0x358] sm:$0xff] %v784
                  %v786 = vld [vmem:[%s568 + $0x6c0] sm:$0xff]
                  %787 = vst [vmem:[%s569 + $0x360] sm:$0xff] %v786
                  %v788 = vld [vmem:[%s568 + $0x6c8] sm:$0xff]
                  %789 = vst [vmem:[%s569 + $0x368] sm:$0xff] %v788
                  %v790 = vld [vmem:[%s568 + $0x6e0] sm:$0xff]
                  %791 = vst [vmem:[%s569 + $0x370] sm:$0xff] %v790
                  %v792 = vld [vmem:[%s568 + $0x6e8] sm:$0xff]
                  %793 = vst [vmem:[%s569 + $0x378] sm:$0xff] %v792
                  %v794 = vld [vmem:[%s568 + $0x700] sm:$0xff]
                  %795 = vst [vmem:[%s569 + $0x380] sm:$0xff] %v794
                  %v796 = vld [vmem:[%s568 + $0x708] sm:$0xff]
                  %797 = vst [vmem:[%s569 + $0x388] sm:$0xff] %v796
                  %v798 = vld [vmem:[%s568 + $0x720] sm:$0xff]
                  %799 = vst [vmem:[%s569 + $0x390] sm:$0xff] %v798
                  %v800 = vld [vmem:[%s568 + $0x728] sm:$0xff]
                  %801 = vst [vmem:[%s569 + $0x398] sm:$0xff] %v800
                  %v802 = vld [vmem:[%s568 + $0x740] sm:$0xff]
                  %803 = vst [vmem:[%s569 + $0x3a0] sm:$0xff] %v802
                  %v804 = vld [vmem:[%s568 + $0x748] sm:$0xff]
                  %805 = vst [vmem:[%s569 + $0x3a8] sm:$0xff] %v804
                  %v806 = vld [vmem:[%s568 + $0x760] sm:$0xff]
                  %807 = vst [vmem:[%s569 + $0x3b0] sm:$0xff] %v806
                  %v808 = vld [vmem:[%s568 + $0x768] sm:$0xff]
                  %809 = vst [vmem:[%s569 + $0x3b8] sm:$0xff] %v808
                  %v810 = vld [vmem:[%s568 + $0x780] sm:$0xff]
                  %811 = vst [vmem:[%s569 + $0x3c0] sm:$0xff] %v810
                  %v812 = vld [vmem:[%s568 + $0x788] sm:$0xff]
                  %813 = vst [vmem:[%s569 + $0x3c8] sm:$0xff] %v812
                  %v814 = vld [vmem:[%s568 + $0x7a0] sm:$0xff]
                  %815 = vst [vmem:[%s569 + $0x3d0] sm:$0xff] %v814
                  %v816 = vld [vmem:[%s568 + $0x7a8] sm:$0xff]
                  %817 = vst [vmem:[%s569 + $0x3d8] sm:$0xff] %v816
                  %v818 = vld [vmem:[%s568 + $0x7c0] sm:$0xff]
                  %819 = vst [vmem:[%s569 + $0x3e0] sm:$0xff] %v818
                  %v820 = vld [vmem:[%s568 + $0x7c8] sm:$0xff]
                  %821 = vst [vmem:[%s569 + $0x3e8] sm:$0xff] %v820
                  %v822 = vld [vmem:[%s568 + $0x7e0] sm:$0xff]
                  %823 = vst [vmem:[%s569 + $0x3f0] sm:$0xff] %v822
                  %v824 = vld [vmem:[%s568 + $0x7e8] sm:$0xff]
                  %825 = vst [vmem:[%s569 + $0x3f8] sm:$0xff] %v824
                $region86: #{bbox_loss.1} parent=80 // loop_footer
                  %s567 = sadd.s32 1, %s563
                $region87: #{bbox_loss.1} parent=80 // loop_footer_branch
                  %562 = sbr.rel target = $region83
                $region88: #{bbox_loss.1} parent=80 // loop_exit
                  _
              $region81: #{bbox_loss.1} parent=65 // pred_fallthru
                _
              // Predicated region
              $region89: #{bbox_loss.1} parent=65 // pred_check
                _
              $region90: #{bbox_loss.1} parent=65 // pred_check_branch
                %827 = sbr.rel target = $region92
              $region91: #{bbox_loss.1} parent=65 // pred_region
                _
              $region92: #{bbox_loss.1} parent=65 // pred_fallthru
                _
            $region66: #{bbox_loss.1} parent=61 // pred_fallthru
              _
            // Predicated region
            $region67: #{bbox_loss.1} parent=61 // pred_check
              _
            $region68: #{bbox_loss.1} parent=61 // pred_check_branch
              %293 = sbr.rel target = $region70
            $region69: #{bbox_loss.1} parent=61 // pred_region
              %s295 = ssub.s32 256, 1
              loop: start=0, step=1, limit=1
              $region71: #{bbox_loss.1} parent=69 // loop_pre_header
                _
              $region72: #{bbox_loss.1} parent=69 // loop_header
                %s297 = sphi 0, %s301
                %p298 = scmp.ge.s32.totalorder %s297, 1
                %s302 = sphi %s287, %s287
                %s303 = sphi %s283, %s283
              $region73: #{bbox_loss.1} parent=69 // loop_header_branch
                %300 = sbr.rel (%p298) target = $region77
              $region74: #{bbox_loss.1} parent=69 // loop_body
                %v304 = vld [vmem:[%s302] sm:%s295]
                %305 = vst [vmem:[%s303] sm:%s295] %v304
                %v306 = vld [vmem:[%s302 + $0x8] sm:%s295]
                %307 = vst [vmem:[%s303 + $0x8] sm:%s295] %v306
                %v308 = vld [vmem:[%s302 + $0x20] sm:%s295]
                %309 = vst [vmem:[%s303 + $0x10] sm:%s295] %v308
                %v310 = vld [vmem:[%s302 + $0x28] sm:%s295]
                %311 = vst [vmem:[%s303 + $0x18] sm:%s295] %v310
                %v312 = vld [vmem:[%s302 + $0x40] sm:%s295]
                %313 = vst [vmem:[%s303 + $0x20] sm:%s295] %v312
                %v314 = vld [vmem:[%s302 + $0x48] sm:%s295]
                %315 = vst [vmem:[%s303 + $0x28] sm:%s295] %v314
                %v316 = vld [vmem:[%s302 + $0x60] sm:%s295]
                %317 = vst [vmem:[%s303 + $0x30] sm:%s295] %v316
                %v318 = vld [vmem:[%s302 + $0x68] sm:%s295]
                %319 = vst [vmem:[%s303 + $0x38] sm:%s295] %v318
                %v320 = vld [vmem:[%s302 + $0x80] sm:%s295]
                %321 = vst [vmem:[%s303 + $0x40] sm:%s295] %v320
                %v322 = vld [vmem:[%s302 + $0x88] sm:%s295]
                %323 = vst [vmem:[%s303 + $0x48] sm:%s295] %v322
                %v324 = vld [vmem:[%s302 + $0xa0] sm:%s295]
                %325 = vst [vmem:[%s303 + $0x50] sm:%s295] %v324
                %v326 = vld [vmem:[%s302 + $0xa8] sm:%s295]
                %327 = vst [vmem:[%s303 + $0x58] sm:%s295] %v326
                %v328 = vld [vmem:[%s302 + $0xc0] sm:%s295]
                %329 = vst [vmem:[%s303 + $0x60] sm:%s295] %v328
                %v330 = vld [vmem:[%s302 + $0xc8] sm:%s295]
                %331 = vst [vmem:[%s303 + $0x68] sm:%s295] %v330
                %v332 = vld [vmem:[%s302 + $0xe0] sm:%s295]
                %333 = vst [vmem:[%s303 + $0x70] sm:%s295] %v332
                %v334 = vld [vmem:[%s302 + $0xe8] sm:%s295]
                %335 = vst [vmem:[%s303 + $0x78] sm:%s295] %v334
                %v336 = vld [vmem:[%s302 + $0x100] sm:%s295]
                %337 = vst [vmem:[%s303 + $0x80] sm:%s295] %v336
                %v338 = vld [vmem:[%s302 + $0x108] sm:%s295]
                %339 = vst [vmem:[%s303 + $0x88] sm:%s295] %v338
                %v340 = vld [vmem:[%s302 + $0x120] sm:%s295]
                %341 = vst [vmem:[%s303 + $0x90] sm:%s295] %v340
                %v342 = vld [vmem:[%s302 + $0x128] sm:%s295]
                %343 = vst [vmem:[%s303 + $0x98] sm:%s295] %v342
                %v344 = vld [vmem:[%s302 + $0x140] sm:%s295]
                %345 = vst [vmem:[%s303 + $0xa0] sm:%s295] %v344
                %v346 = vld [vmem:[%s302 + $0x148] sm:%s295]
                %347 = vst [vmem:[%s303 + $0xa8] sm:%s295] %v346
                %v348 = vld [vmem:[%s302 + $0x160] sm:%s295]
                %349 = vst [vmem:[%s303 + $0xb0] sm:%s295] %v348
                %v350 = vld [vmem:[%s302 + $0x168] sm:%s295]
                %351 = vst [vmem:[%s303 + $0xb8] sm:%s295] %v350
                %v352 = vld [vmem:[%s302 + $0x180] sm:%s295]
                %353 = vst [vmem:[%s303 + $0xc0] sm:%s295] %v352
                %v354 = vld [vmem:[%s302 + $0x188] sm:%s295]
                %355 = vst [vmem:[%s303 + $0xc8] sm:%s295] %v354
                %v356 = vld [vmem:[%s302 + $0x1a0] sm:%s295]
                %357 = vst [vmem:[%s303 + $0xd0] sm:%s295] %v356
                %v358 = vld [vmem:[%s302 + $0x1a8] sm:%s295]
                %359 = vst [vmem:[%s303 + $0xd8] sm:%s295] %v358
                %v360 = vld [vmem:[%s302 + $0x1c0] sm:%s295]
                %361 = vst [vmem:[%s303 + $0xe0] sm:%s295] %v360
                %v362 = vld [vmem:[%s302 + $0x1c8] sm:%s295]
                %363 = vst [vmem:[%s303 + $0xe8] sm:%s295] %v362
                %v364 = vld [vmem:[%s302 + $0x1e0] sm:%s295]
                %365 = vst [vmem:[%s303 + $0xf0] sm:%s295] %v364
                %v366 = vld [vmem:[%s302 + $0x1e8] sm:%s295]
                %367 = vst [vmem:[%s303 + $0xf8] sm:%s295] %v366
                %v368 = vld [vmem:[%s302 + $0x200] sm:%s295]
                %369 = vst [vmem:[%s303 + $0x100] sm:%s295] %v368
                %v370 = vld [vmem:[%s302 + $0x208] sm:%s295]
                %371 = vst [vmem:[%s303 + $0x108] sm:%s295] %v370
                %v372 = vld [vmem:[%s302 + $0x220] sm:%s295]
                %373 = vst [vmem:[%s303 + $0x110] sm:%s295] %v372
                %v374 = vld [vmem:[%s302 + $0x228] sm:%s295]
                %375 = vst [vmem:[%s303 + $0x118] sm:%s295] %v374
                %v376 = vld [vmem:[%s302 + $0x240] sm:%s295]
                %377 = vst [vmem:[%s303 + $0x120] sm:%s295] %v376
                %v378 = vld [vmem:[%s302 + $0x248] sm:%s295]
                %379 = vst [vmem:[%s303 + $0x128] sm:%s295] %v378
                %v380 = vld [vmem:[%s302 + $0x260] sm:%s295]
                %381 = vst [vmem:[%s303 + $0x130] sm:%s295] %v380
                %v382 = vld [vmem:[%s302 + $0x268] sm:%s295]
                %383 = vst [vmem:[%s303 + $0x138] sm:%s295] %v382
                %v384 = vld [vmem:[%s302 + $0x280] sm:%s295]
                %385 = vst [vmem:[%s303 + $0x140] sm:%s295] %v384
                %v386 = vld [vmem:[%s302 + $0x288] sm:%s295]
                %387 = vst [vmem:[%s303 + $0x148] sm:%s295] %v386
                %v388 = vld [vmem:[%s302 + $0x2a0] sm:%s295]
                %389 = vst [vmem:[%s303 + $0x150] sm:%s295] %v388
                %v390 = vld [vmem:[%s302 + $0x2a8] sm:%s295]
                %391 = vst [vmem:[%s303 + $0x158] sm:%s295] %v390
                %v392 = vld [vmem:[%s302 + $0x2c0] sm:%s295]
                %393 = vst [vmem:[%s303 + $0x160] sm:%s295] %v392
                %v394 = vld [vmem:[%s302 + $0x2c8] sm:%s295]
                %395 = vst [vmem:[%s303 + $0x168] sm:%s295] %v394
                %v396 = vld [vmem:[%s302 + $0x2e0] sm:%s295]
                %397 = vst [vmem:[%s303 + $0x170] sm:%s295] %v396
                %v398 = vld [vmem:[%s302 + $0x2e8] sm:%s295]
                %399 = vst [vmem:[%s303 + $0x178] sm:%s295] %v398
                %v400 = vld [vmem:[%s302 + $0x300] sm:%s295]
                %401 = vst [vmem:[%s303 + $0x180] sm:%s295] %v400
                %v402 = vld [vmem:[%s302 + $0x308] sm:%s295]
                %403 = vst [vmem:[%s303 + $0x188] sm:%s295] %v402
                %v404 = vld [vmem:[%s302 + $0x320] sm:%s295]
                %405 = vst [vmem:[%s303 + $0x190] sm:%s295] %v404
                %v406 = vld [vmem:[%s302 + $0x328] sm:%s295]
                %407 = vst [vmem:[%s303 + $0x198] sm:%s295] %v406
                %v408 = vld [vmem:[%s302 + $0x340] sm:%s295]
                %409 = vst [vmem:[%s303 + $0x1a0] sm:%s295] %v408
                %v410 = vld [vmem:[%s302 + $0x348] sm:%s295]
                %411 = vst [vmem:[%s303 + $0x1a8] sm:%s295] %v410
                %v412 = vld [vmem:[%s302 + $0x360] sm:%s295]
                %413 = vst [vmem:[%s303 + $0x1b0] sm:%s295] %v412
                %v414 = vld [vmem:[%s302 + $0x368] sm:%s295]
                %415 = vst [vmem:[%s303 + $0x1b8] sm:%s295] %v414
                %v416 = vld [vmem:[%s302 + $0x380] sm:%s295]
                %417 = vst [vmem:[%s303 + $0x1c0] sm:%s295] %v416
                %v418 = vld [vmem:[%s302 + $0x388] sm:%s295]
                %419 = vst [vmem:[%s303 + $0x1c8] sm:%s295] %v418
                %v420 = vld [vmem:[%s302 + $0x3a0] sm:%s295]
                %421 = vst [vmem:[%s303 + $0x1d0] sm:%s295] %v420
                %v422 = vld [vmem:[%s302 + $0x3a8] sm:%s295]
                %423 = vst [vmem:[%s303 + $0x1d8] sm:%s295] %v422
                %v424 = vld [vmem:[%s302 + $0x3c0] sm:%s295]
                %425 = vst [vmem:[%s303 + $0x1e0] sm:%s295] %v424
                %v426 = vld [vmem:[%s302 + $0x3c8] sm:%s295]
                %427 = vst [vmem:[%s303 + $0x1e8] sm:%s295] %v426
                %v428 = vld [vmem:[%s302 + $0x3e0] sm:%s295]
                %429 = vst [vmem:[%s303 + $0x1f0] sm:%s295] %v428
                %v430 = vld [vmem:[%s302 + $0x3e8] sm:%s295]
                %431 = vst [vmem:[%s303 + $0x1f8] sm:%s295] %v430
                %v432 = vld [vmem:[%s302 + $0x400] sm:%s295]
                %433 = vst [vmem:[%s303 + $0x200] sm:%s295] %v432
                %v434 = vld [vmem:[%s302 + $0x408] sm:%s295]
                %435 = vst [vmem:[%s303 + $0x208] sm:%s295] %v434
                %v436 = vld [vmem:[%s302 + $0x420] sm:%s295]
                %437 = vst [vmem:[%s303 + $0x210] sm:%s295] %v436
                %v438 = vld [vmem:[%s302 + $0x428] sm:%s295]
                %439 = vst [vmem:[%s303 + $0x218] sm:%s295] %v438
                %v440 = vld [vmem:[%s302 + $0x440] sm:%s295]
                %441 = vst [vmem:[%s303 + $0x220] sm:%s295] %v440
                %v442 = vld [vmem:[%s302 + $0x448] sm:%s295]
                %443 = vst [vmem:[%s303 + $0x228] sm:%s295] %v442
                %v444 = vld [vmem:[%s302 + $0x460] sm:%s295]
                %445 = vst [vmem:[%s303 + $0x230] sm:%s295] %v444
                %v446 = vld [vmem:[%s302 + $0x468] sm:%s295]
                %447 = vst [vmem:[%s303 + $0x238] sm:%s295] %v446
                %v448 = vld [vmem:[%s302 + $0x480] sm:%s295]
                %449 = vst [vmem:[%s303 + $0x240] sm:%s295] %v448
                %v450 = vld [vmem:[%s302 + $0x488] sm:%s295]
                %451 = vst [vmem:[%s303 + $0x248] sm:%s295] %v450
                %v452 = vld [vmem:[%s302 + $0x4a0] sm:%s295]
                %453 = vst [vmem:[%s303 + $0x250] sm:%s295] %v452
                %v454 = vld [vmem:[%s302 + $0x4a8] sm:%s295]
                %455 = vst [vmem:[%s303 + $0x258] sm:%s295] %v454
                %v456 = vld [vmem:[%s302 + $0x4c0] sm:%s295]
                %457 = vst [vmem:[%s303 + $0x260] sm:%s295] %v456
                %v458 = vld [vmem:[%s302 + $0x4c8] sm:%s295]
                %459 = vst [vmem:[%s303 + $0x268] sm:%s295] %v458
                %v460 = vld [vmem:[%s302 + $0x4e0] sm:%s295]
                %461 = vst [vmem:[%s303 + $0x270] sm:%s295] %v460
                %v462 = vld [vmem:[%s302 + $0x4e8] sm:%s295]
                %463 = vst [vmem:[%s303 + $0x278] sm:%s295] %v462
                %v464 = vld [vmem:[%s302 + $0x500] sm:%s295]
                %465 = vst [vmem:[%s303 + $0x280] sm:%s295] %v464
                %v466 = vld [vmem:[%s302 + $0x508] sm:%s295]
                %467 = vst [vmem:[%s303 + $0x288] sm:%s295] %v466
                %v468 = vld [vmem:[%s302 + $0x520] sm:%s295]
                %469 = vst [vmem:[%s303 + $0x290] sm:%s295] %v468
                %v470 = vld [vmem:[%s302 + $0x528] sm:%s295]
                %471 = vst [vmem:[%s303 + $0x298] sm:%s295] %v470
                %v472 = vld [vmem:[%s302 + $0x540] sm:%s295]
                %473 = vst [vmem:[%s303 + $0x2a0] sm:%s295] %v472
                %v474 = vld [vmem:[%s302 + $0x548] sm:%s295]
                %475 = vst [vmem:[%s303 + $0x2a8] sm:%s295] %v474
                %v476 = vld [vmem:[%s302 + $0x560] sm:%s295]
                %477 = vst [vmem:[%s303 + $0x2b0] sm:%s295] %v476
                %v478 = vld [vmem:[%s302 + $0x568] sm:%s295]
                %479 = vst [vmem:[%s303 + $0x2b8] sm:%s295] %v478
                %v480 = vld [vmem:[%s302 + $0x580] sm:%s295]
                %481 = vst [vmem:[%s303 + $0x2c0] sm:%s295] %v480
                %v482 = vld [vmem:[%s302 + $0x588] sm:%s295]
                %483 = vst [vmem:[%s303 + $0x2c8] sm:%s295] %v482
                %v484 = vld [vmem:[%s302 + $0x5a0] sm:%s295]
                %485 = vst [vmem:[%s303 + $0x2d0] sm:%s295] %v484
                %v486 = vld [vmem:[%s302 + $0x5a8] sm:%s295]
                %487 = vst [vmem:[%s303 + $0x2d8] sm:%s295] %v486
                %v488 = vld [vmem:[%s302 + $0x5c0] sm:%s295]
                %489 = vst [vmem:[%s303 + $0x2e0] sm:%s295] %v488
                %v490 = vld [vmem:[%s302 + $0x5c8] sm:%s295]
                %491 = vst [vmem:[%s303 + $0x2e8] sm:%s295] %v490
                %v492 = vld [vmem:[%s302 + $0x5e0] sm:%s295]
                %493 = vst [vmem:[%s303 + $0x2f0] sm:%s295] %v492
                %v494 = vld [vmem:[%s302 + $0x5e8] sm:%s295]
                %495 = vst [vmem:[%s303 + $0x2f8] sm:%s295] %v494
                %v496 = vld [vmem:[%s302 + $0x600] sm:%s295]
                %497 = vst [vmem:[%s303 + $0x300] sm:%s295] %v496
                %v498 = vld [vmem:[%s302 + $0x608] sm:%s295]
                %499 = vst [vmem:[%s303 + $0x308] sm:%s295] %v498
                %v500 = vld [vmem:[%s302 + $0x620] sm:%s295]
                %501 = vst [vmem:[%s303 + $0x310] sm:%s295] %v500
                %v502 = vld [vmem:[%s302 + $0x628] sm:%s295]
                %503 = vst [vmem:[%s303 + $0x318] sm:%s295] %v502
                %v504 = vld [vmem:[%s302 + $0x640] sm:%s295]
                %505 = vst [vmem:[%s303 + $0x320] sm:%s295] %v504
                %v506 = vld [vmem:[%s302 + $0x648] sm:%s295]
                %507 = vst [vmem:[%s303 + $0x328] sm:%s295] %v506
                %v508 = vld [vmem:[%s302 + $0x660] sm:%s295]
                %509 = vst [vmem:[%s303 + $0x330] sm:%s295] %v508
                %v510 = vld [vmem:[%s302 + $0x668] sm:%s295]
                %511 = vst [vmem:[%s303 + $0x338] sm:%s295] %v510
                %v512 = vld [vmem:[%s302 + $0x680] sm:%s295]
                %513 = vst [vmem:[%s303 + $0x340] sm:%s295] %v512
                %v514 = vld [vmem:[%s302 + $0x688] sm:%s295]
                %515 = vst [vmem:[%s303 + $0x348] sm:%s295] %v514
                %v516 = vld [vmem:[%s302 + $0x6a0] sm:%s295]
                %517 = vst [vmem:[%s303 + $0x350] sm:%s295] %v516
                %v518 = vld [vmem:[%s302 + $0x6a8] sm:%s295]
                %519 = vst [vmem:[%s303 + $0x358] sm:%s295] %v518
                %v520 = vld [vmem:[%s302 + $0x6c0] sm:%s295]
                %521 = vst [vmem:[%s303 + $0x360] sm:%s295] %v520
                %v522 = vld [vmem:[%s302 + $0x6c8] sm:%s295]
                %523 = vst [vmem:[%s303 + $0x368] sm:%s295] %v522
                %v524 = vld [vmem:[%s302 + $0x6e0] sm:%s295]
                %525 = vst [vmem:[%s303 + $0x370] sm:%s295] %v524
                %v526 = vld [vmem:[%s302 + $0x6e8] sm:%s295]
                %527 = vst [vmem:[%s303 + $0x378] sm:%s295] %v526
                %v528 = vld [vmem:[%s302 + $0x700] sm:%s295]
                %529 = vst [vmem:[%s303 + $0x380] sm:%s295] %v528
                %v530 = vld [vmem:[%s302 + $0x708] sm:%s295]
                %531 = vst [vmem:[%s303 + $0x388] sm:%s295] %v530
                %v532 = vld [vmem:[%s302 + $0x720] sm:%s295]
                %533 = vst [vmem:[%s303 + $0x390] sm:%s295] %v532
                %v534 = vld [vmem:[%s302 + $0x728] sm:%s295]
                %535 = vst [vmem:[%s303 + $0x398] sm:%s295] %v534
                %v536 = vld [vmem:[%s302 + $0x740] sm:%s295]
                %537 = vst [vmem:[%s303 + $0x3a0] sm:%s295] %v536
                %v538 = vld [vmem:[%s302 + $0x748] sm:%s295]
                %539 = vst [vmem:[%s303 + $0x3a8] sm:%s295] %v538
                %v540 = vld [vmem:[%s302 + $0x760] sm:%s295]
                %541 = vst [vmem:[%s303 + $0x3b0] sm:%s295] %v540
                %v542 = vld [vmem:[%s302 + $0x768] sm:%s295]
                %543 = vst [vmem:[%s303 + $0x3b8] sm:%s295] %v542
                %v544 = vld [vmem:[%s302 + $0x780] sm:%s295]
                %545 = vst [vmem:[%s303 + $0x3c0] sm:%s295] %v544
                %v546 = vld [vmem:[%s302 + $0x788] sm:%s295]
                %547 = vst [vmem:[%s303 + $0x3c8] sm:%s295] %v546
                %v548 = vld [vmem:[%s302 + $0x7a0] sm:%s295]
                %549 = vst [vmem:[%s303 + $0x3d0] sm:%s295] %v548
                %v550 = vld [vmem:[%s302 + $0x7a8] sm:%s295]
                %551 = vst [vmem:[%s303 + $0x3d8] sm:%s295] %v550
                %v552 = vld [vmem:[%s302 + $0x7c0] sm:%s295]
                %553 = vst [vmem:[%s303 + $0x3e0] sm:%s295] %v552
                %v554 = vld [vmem:[%s302 + $0x7c8] sm:%s295]
                %555 = vst [vmem:[%s303 + $0x3e8] sm:%s295] %v554
                %v556 = vld [vmem:[%s302 + $0x7e0] sm:%s295]
                %557 = vst [vmem:[%s303 + $0x3f0] sm:%s295] %v556
                %v558 = vld [vmem:[%s302 + $0x7e8] sm:%s295]
                %559 = vst [vmem:[%s303 + $0x3f8] sm:%s295] %v558
              $region75: #{bbox_loss.1} parent=69 // loop_footer
                %s301 = sadd.s32 1, %s297
              $region76: #{bbox_loss.1} parent=69 // loop_footer_branch
                %296 = sbr.rel target = $region72
              $region77: #{bbox_loss.1} parent=69 // loop_exit
                _
            $region70: #{bbox_loss.1} parent=61 // pred_fallthru
              _
          $region62: #{bbox_loss.1} parent=57 // pred_fallthru
            _
          %828 = vnop
        $region58: #{bbox_loss.1} parent=15 // pred_fallthru
          _
      $region16: #{bbox_loss.1} parent=5 // pred_fallthru
        _
      %p829 = scmp.le.s32.totalorder 1, %s10
      %p830 = scmp.lt.s32.totalorder %s10, 3
      %p831 = pnand %p829, %p830
      %p832 = pneg %p831
      // Predicated region
      $region93: #{bbox_loss.1} parent=5 // pred_check
        _
      $region94: #{bbox_loss.1} parent=5 // pred_check_branch
        %834 = sbr.rel (%p831) target = $region96
      $region95: #{bbox_loss.1} parent=5 // pred_region
        %s835 = ssub.s32 %s10, 1
        %s836 = sand.u32 %s37, 1
        %s837 = sand.u32 %s37, 1
        %s838 = smul.addr %s837, 176
        %s839 = scalar_lea.vmem [#allocation2], %s838
        // Predicated region
        $region97: #{bbox_loss.1} parent=95 // pred_check
          %p840 = pneg %p50
        $region98: #{bbox_loss.1} parent=95 // pred_check_branch
          %842 = sbr.rel (%p840) target = $region100
        $region99: #{bbox_loss.1} parent=95 // pred_region
          _
        $region100: #{bbox_loss.1} parent=95 // pred_fallthru
          _
        %s843 = sand.u32 %s65, 1
        %s844 = sand.u32 %s65, 1
        %s845 = smul.addr %s844, 1024
        %s846 = scalar_lea.vmem [#allocation3], %s845
        // Predicated region
        $region101: #{bbox_loss.1} parent=95 // pred_check
          %p847 = pneg %p78
        $region102: #{bbox_loss.1} parent=95 // pred_check_branch
          %849 = sbr.rel (%p847) target = $region104
        $region103: #{bbox_loss.1} parent=95 // pred_region
          _
        $region104: #{bbox_loss.1} parent=95 // pred_fallthru
          _
        %s850 = sand.u32 %s37, 1
        %s851 = sand.u32 %s37, 1
        %s852 = smul.addr %s851, 176
        %s853 = scalar_lea.vmem [#allocation2], %s852
        %p854 = pneg %p50
        %p855 = pneg %p47
        %s856 = sand.u32 %s65, 1
        %s857 = sand.u32 %s65, 1
        %s858 = smul.addr %s857, 1024
        %s859 = scalar_lea.vmem [#allocation3], %s858
        %p860 = pneg %p78
        %p861 = pneg %p75
        %p862 = pneg %p104
        %p863 = pneg %p101
        %s864 = smul.u32 2, %s19
        %p865 = scmp.lt.s32.totalorder %s864, 3
        %s866 = scalar_select %p865, %s864, 3
        %s867 = smul.addr %s866, 8
        %s868 = scalar_lea.vmem %s2, %s867
        %p869 = pneg %p130
        %p870 = pneg %p127
        %s871 = smul.u32 2, %s19
        %p872 = scmp.lt.s32.totalorder %s871, 3
        %s873 = scalar_select %p872, %s871, 3
        %s874 = smul.addr %s873, 8
        %s875 = scalar_lea.vmem %s3, %s874
        %s876 = sadd.s32 %s19, %s20
        %s877 = smul.u32 2, %s876
        %s878 = sadd.s32 %s19, %s20
        %s879 = smul.u32 2, %s878
        %s880 = smul.u32 2, %s19
        %p881 = scmp.lt.s32.totalorder %s880, 3
        %s882 = scalar_select %p881, %s880, 3
        %s883 = smul.addr %s882, 8
        %s884 = scalar_lea.vmem %s2, %s883
        %s885 = smul.u32 2, %s19
        %s886 = smul.u32 2, %s19
        %p887 = scmp.lt.s32.totalorder %s886, 3
        %s888 = scalar_select %p887, %s886, 3
        %s889 = smul.addr %s888, 8
        %s890 = scalar_lea.vmem %s3, %s889
        %s891 = smul.u32 2, %s19
        %p892 = scmp.eq.s32.totalorder %s20, 0
        // Predicated region
        $region105: #{bbox_loss.1} parent=95 // pred_check
          %p893 = pneg %p892
        $region106: #{bbox_loss.1} parent=95 // pred_check_branch
          %895 = sbr.rel (%p893) target = $region108
        $region107: #{bbox_loss.1} parent=95 // pred_region
          %896 = vst [vmem:[%s884] sm:$0xff] 0.0
          %897 = vst [vmem:[%s884 + $0x8] sm:$0xff] 0.0
          %898 = vst [vmem:[%s890] sm:$0xff] 0.0
          %899 = vst [vmem:[%s890 + $0x8] sm:$0xff] 0.0
        $region108: #{bbox_loss.1} parent=95 // pred_fallthru
          _
        %s900 = scalar_lea.vmem %s839, 160 [#allocation2]
        %v901 = vld [vmem:[%s900] sm:$0xff]
        %v902 = vld [vmem:[%s900 + $0x8] sm:$0xff]
        %v903 = vld [vmem:[%s839] sm:$0xff]
        %v904 = vld [vmem:[%s839 + $0x8] sm:$0xff]
        %s905 = scalar_lea.vmem %s839, 16 [#allocation2]
        %v906 = vld [vmem:[%s905] sm:$0xff]
        %v907 = vld [vmem:[%s905 + $0x8] sm:$0xff]
        %s908 = scalar_lea.vmem %s839, 32 [#allocation2]
        %v909 = vld [vmem:[%s908] sm:$0xff]
        %v910 = vld [vmem:[%s908 + $0x8] sm:$0xff]
        %s911 = scalar_lea.vmem %s839, 48 [#allocation2]
        %v912 = vld [vmem:[%s911] sm:$0xff]
        %v913 = vld [vmem:[%s911 + $0x8] sm:$0xff]
        %s914 = scalar_lea.vmem %s839, 64 [#allocation2]
        %v915 = vld [vmem:[%s914] sm:$0xff]
        %v916 = vld [vmem:[%s914 + $0x8] sm:$0xff]
        %s917 = scalar_lea.vmem %s839, 80 [#allocation2]
        %v918 = vld [vmem:[%s917] sm:$0xff]
        %v919 = vld [vmem:[%s917 + $0x8] sm:$0xff]
        %s920 = scalar_lea.vmem %s839, 96 [#allocation2]
        %v921 = vld [vmem:[%s920] sm:$0xff]
        %v922 = vld [vmem:[%s920 + $0x8] sm:$0xff]
        %s923 = scalar_lea.vmem %s839, 112 [#allocation2]
        %v924 = vld [vmem:[%s923] sm:$0xff]
        %v925 = vld [vmem:[%s923 + $0x8] sm:$0xff]
        %v926 = vsub.f32 %v909, %v903
        %v927 = vsub.f32 %v910, %v904
        %v928 = vsub.f32 %v912, %v906
        %v929 = vsub.f32 %v913, %v907
        %v930 = vadd.f32 %v928, 1e-07
        %v931 = vadd.f32 %v929, 1e-07
        %v932 = vsub.f32 %v921, %v915
        %v933 = vsub.f32 %v922, %v916
        %v934 = vsub.f32 %v924, %v918
        %v935 = vsub.f32 %v925, %v919
        %v936 = vadd.f32 %v934, 1e-07
        %v937 = vadd.f32 %v935, 1e-07
        %v938 = vmin.f32 %v909, %v921
        %v939 = vmin.f32 %v910, %v922
        %v940 = vmax.f32 %v903, %v915
        %v941 = vmax.f32 %v904, %v916
        %v942 = vsub.f32 %v938, %v940
        %v943 = vsub.f32 %v939, %v941
        %v944 = vmax.f32 %v942, 0.0
        %v945 = vmax.f32 %v943, 0.0
        %v946 = vmin.f32 %v912, %v924
        %v947 = vmin.f32 %v913, %v925
        %v948 = vmax.f32 %v906, %v918
        %v949 = vmax.f32 %v907, %v919
        %v950 = vsub.f32 %v946, %v948
        %v951 = vsub.f32 %v947, %v949
        %v952 = vmax.f32 %v950, 0.0
        %v953 = vmax.f32 %v951, 0.0
        %v954 = vmul.f32 %v944, %v952
        %v955 = vmul.f32 %v945, %v953
        %v956 = vmul.f32 %v926, %v930
        %v957 = vmul.f32 %v927, %v931
        %v958 = vmul.f32 %v932, %v936
        %v959 = vmul.f32 %v933, %v937
        %v960 = vadd.f32 %v956, %v958
        %v961 = vadd.f32 %v957, %v959
        %v962 = vsub.f32 %v960, %v954
        %v963 = vsub.f32 %v961, %v955
        %v964 = vadd.f32 %v962, 1e-07
        %v965 = vadd.f32 %v963, 1e-07
        %v966 = vrcp.pop %v964
        %v967 = vmul.f32 %v964, %v966
        %v968 = vsub.f32 1.0, %v967
        %v969 = vmul.f32 %v966, %v968
        %v970 = vadd.f32 %v966, %v969
        %vm971 = vweird.f32 %v964
        %vm972 = vweird.f32 %v966
        %vm973 = vmor %vm971, %vm972
        %v974 = vsel %vm973, %v966, %v970
        %v975 = vand.u32 2147483647, %v964
        %vm976 = vcmp.eq.f32.partialorder %v975, 8.507059e+37
        %v977 = vand.u32 %v964, 2147483648
        %v978 = vor.u32 1.1754944e-38, %v977
        %v979 = vsel %vm976, %v978, %v974
        %v980 = vmul.f32 %v954, %v979
        %v981 = vrcp.pop %v965
        %v982 = vmul.f32 %v965, %v981
        %v983 = vsub.f32 1.0, %v982
        %v984 = vmul.f32 %v981, %v983
        %v985 = vadd.f32 %v981, %v984
        %vm986 = vweird.f32 %v965
        %vm987 = vweird.f32 %v981
        %vm988 = vmor %vm986, %vm987
        %v989 = vsel %vm988, %v981, %v985
        %v990 = vand.u32 2147483647, %v965
        %vm991 = vcmp.eq.f32.partialorder %v990, 8.507059e+37
        %v992 = vand.u32 %v965, 2147483648
        %v993 = vor.u32 1.1754944e-38, %v992
        %v994 = vsel %vm991, %v993, %v989
        %v995 = vmul.f32 %v955, %v994
        %v996 = vmax.f32 %v909, %v921
        %v997 = vmax.f32 %v910, %v922
        %v998 = vmin.f32 %v903, %v915
        %v999 = vmin.f32 %v904, %v916
        %v1000 = vsub.f32 %v996, %v998
        %v1001 = vsub.f32 %v997, %v999
        %v1002 = vmax.f32 %v912, %v924
        %v1003 = vmax.f32 %v913, %v925
        %v1004 = vmin.f32 %v906, %v918
        %v1005 = vmin.f32 %v907, %v919
        %v1006 = vsub.f32 %v1002, %v1004
        %v1007 = vsub.f32 %v1003, %v1005
        %v1008 = vmul.f32 %v1000, %v1000
        %v1009 = vmul.f32 %v1001, %v1001
        %v1010 = vmul.f32 %v1006, %v1006
        %v1011 = vmul.f32 %v1007, %v1007
        %v1012 = vadd.f32 %v1008, %v1010
        %v1013 = vadd.f32 %v1009, %v1011
        %v1014 = vadd.f32 %v1012, 1e-07
        %v1015 = vadd.f32 %v1013, 1e-07
        %v1016 = vadd.f32 %v915, %v921
        %v1017 = vadd.f32 %v916, %v922
        %v1018 = vsub.f32 %v1016, %v903
        %v1019 = vsub.f32 %v1017, %v904
        %v1020 = vsub.f32 %v1018, %v909
        %v1021 = vsub.f32 %v1019, %v910
        %v1022 = vmul.f32 %v1020, %v1020
        %v1023 = vmul.f32 %v1021, %v1021
        %v1024 = vadd.f32 %v918, %v924
        %v1025 = vadd.f32 %v919, %v925
        %v1026 = vsub.f32 %v1024, %v906
        %v1027 = vsub.f32 %v1025, %v907
        %v1028 = vsub.f32 %v1026, %v912
        %v1029 = vsub.f32 %v1027, %v913
        %v1030 = vmul.f32 %v1028, %v1028
        %v1031 = vmul.f32 %v1029, %v1029
        %v1032 = vadd.f32 %v1022, %v1030
        %v1033 = vadd.f32 %v1023, %v1031
        %v1034 = vmul.f32 %v1032, 0.25
        %v1035 = vmul.f32 %v1033, 0.25
        %v1036 = vrcp.pop %v936
        %v1037 = vmul.f32 %v936, %v1036
        %v1038 = vsub.f32 1.0, %v1037
        %v1039 = vmul.f32 %v1036, %v1038
        %v1040 = vadd.f32 %v1036, %v1039
        %vm1041 = vweird.f32 %v936
        %vm1042 = vweird.f32 %v1036
        %vm1043 = vmor %vm1041, %vm1042
        %v1044 = vsel %vm1043, %v1036, %v1040
        %v1045 = vand.u32 2147483647, %v936
        %vm1046 = vcmp.eq.f32.partialorder %v1045, 8.507059e+37
        %v1047 = vand.u32 %v936, 2147483648
        %v1048 = vor.u32 1.1754944e-38, %v1047
        %v1049 = vsel %vm1046, %v1048, %v1044
        %v1050 = vmul.f32 %v932, %v1049
        %v1051 = vrcp.pop %v937
        %v1052 = vmul.f32 %v937, %v1051
        %v1053 = vsub.f32 1.0, %v1052
        %v1054 = vmul.f32 %v1051, %v1053
        %v1055 = vadd.f32 %v1051, %v1054
        %vm1056 = vweird.f32 %v937
        %vm1057 = vweird.f32 %v1051
        %vm1058 = vmor %vm1056, %vm1057
        %v1059 = vsel %vm1058, %v1051, %v1055
        %v1060 = vand.u32 2147483647, %v937
        %vm1061 = vcmp.eq.f32.partialorder %v1060, 8.507059e+37
        %v1062 = vand.u32 %v937, 2147483648
        %v1063 = vor.u32 1.1754944e-38, %v1062
        %v1064 = vsel %vm1061, %v1063, %v1059
        %v1065 = vmul.f32 %v933, %v1064
        %vm1066 = vcmp.lt.f32.partialorder %v1050, 0.0
        %vm1067 = vcmp.lt.f32.partialorder %v1065, 0.0
        %v1068 = vsel %vm1066, -1.0, 1.0
        %v1069 = vsel %vm1067, -1.0, 1.0
        %v1070 = vand.u32 2147483647, %v1050
        %v1071 = vand.u32 2147483647, %v1065
        %vm1072 = vcmp.gt.f32.partialorder %v1070, 2.4142137
        %vm1073 = vcmp.gt.f32.partialorder %v1071, 2.4142137
        %vm1074 = vcmp.gt.f32.partialorder %v1070, 0.41421357
        %vm1075 = vcmp.gt.f32.partialorder %v1071, 0.41421357
        %v1076 = vmax.f32 %v1070, 1e-30
        %v1077 = vmax.f32 %v1071, 1e-30
        %v1078 = vrcp.pop %v1076
        %v1079 = vmul.f32 %v1076, %v1078
        %v1080 = vsub.f32 1.0, %v1079
        %v1081 = vmul.f32 %v1078, %v1080
        %v1082 = vadd.f32 %v1078, %v1081
        %vm1083 = vweird.f32 %v1076
        %vm1084 = vweird.f32 %v1078
        %vm1085 = vmor %vm1083, %vm1084
        %v1086 = vsel %vm1085, %v1078, %v1082
        %v1087 = vand.u32 2147483647, %v1076
        %vm1088 = vcmp.eq.f32.partialorder %v1087, 8.507059e+37
        %v1089 = vand.u32 %v1076, 2147483648
        %v1090 = vor.u32 1.1754944e-38, %v1089
        %v1091 = vsel %vm1088, %v1090, %v1086
        %v1092 = vmul.f32 -1.0, %v1091
        %v1093 = vrcp.pop %v1077
        %v1094 = vmul.f32 %v1077, %v1093
        %v1095 = vsub.f32 1.0, %v1094
        %v1096 = vmul.f32 %v1093, %v1095
        %v1097 = vadd.f32 %v1093, %v1096
        %vm1098 = vweird.f32 %v1077
        %vm1099 = vweird.f32 %v1093
        %vm1100 = vmor %vm1098, %vm1099
        %v1101 = vsel %vm1100, %v1093, %v1097
        %v1102 = vand.u32 2147483647, %v1077
        %vm1103 = vcmp.eq.f32.partialorder %v1102, 8.507059e+37
        %v1104 = vand.u32 %v1077, 2147483648
        %v1105 = vor.u32 1.1754944e-38, %v1104
        %v1106 = vsel %vm1103, %v1105, %v1101
        %v1107 = vmul.f32 -1.0, %v1106
        %v1108 = vsub.f32 %v1070, 1.0
        %v1109 = vsub.f32 %v1071, 1.0
        %v1110 = vadd.f32 %v1070, 1.0
        %v1111 = vadd.f32 %v1071, 1.0
        %v1112 = vrcp.pop %v1110
        %v1113 = vmul.f32 %v1110, %v1112
        %v1114 = vsub.f32 1.0, %v1113
        %v1115 = vmul.f32 %v1112, %v1114
        %v1116 = vadd.f32 %v1112, %v1115
        %vm1117 = vweird.f32 %v1110
        %vm1118 = vweird.f32 %v1112
        %vm1119 = vmor %vm1117, %vm1118
        %v1120 = vsel %vm1119, %v1112, %v1116
        %v1121 = vand.u32 2147483647, %v1110
        %vm1122 = vcmp.eq.f32.partialorder %v1121, 8.507059e+37
        %v1123 = vand.u32 %v1110, 2147483648
        %v1124 = vor.u32 1.1754944e-38, %v1123
        %v1125 = vsel %vm1122, %v1124, %v1120
        %v1126 = vmul.f32 %v1108, %v1125
        %v1127 = vrcp.pop %v1111
        %v1128 = vmul.f32 %v1111, %v1127
        %v1129 = vsub.f32 1.0, %v1128
        %v1130 = vmul.f32 %v1127, %v1129
        %v1131 = vadd.f32 %v1127, %v1130
        %vm1132 = vweird.f32 %v1111
        %vm1133 = vweird.f32 %v1127
        %vm1134 = vmor %vm1132, %vm1133
        %v1135 = vsel %vm1134, %v1127, %v1131
        %v1136 = vand.u32 2147483647, %v1111
        %vm1137 = vcmp.eq.f32.partialorder %v1136, 8.507059e+37
        %v1138 = vand.u32 %v1111, 2147483648
        %v1139 = vor.u32 1.1754944e-38, %v1138
        %v1140 = vsel %vm1137, %v1139, %v1135
        %v1141 = vmul.f32 %v1109, %v1140
        %v1142 = vsel %vm1074, %v1126, %v1070
        %v1143 = vsel %vm1075, %v1141, %v1071
        %v1144 = vsel %vm1072, %v1092, %v1142
        %v1145 = vsel %vm1073, %v1107, %v1143
        %v1146 = vsel %vm1074, 0.7853982, 0.0
        %v1147 = vsel %vm1075, 0.7853982, 0.0
        %v1148 = vsel %vm1072, 1.5707964, %v1146
        %v1149 = vsel %vm1073, 1.5707964, %v1147
        %v1150 = vmul.f32 %v1144, %v1144
        %v1151 = vmul.f32 %v1145, %v1145
        %v1152 = vmul.f32 %v1150, 0.080537446
        %v1153 = vmul.f32 %v1151, 0.080537446
        %v1154 = vsub.f32 %v1152, 0.13877685
        %v1155 = vsub.f32 %v1153, 0.13877685
        %v1156 = vmul.f32 %v1154, %v1150
        %v1157 = vmul.f32 %v1155, %v1151
        %v1158 = vadd.f32 %v1156, 0.19977711
        %v1159 = vadd.f32 %v1157, 0.19977711
        %v1160 = vmul.f32 %v1158, %v1150
        %v1161 = vmul.f32 %v1159, %v1151
        %v1162 = vsub.f32 %v1160, 0.3333295
        %v1163 = vsub.f32 %v1161, 0.3333295
        %v1164 = vadd.f32 %v1148, %v1144
        %v1165 = vadd.f32 %v1149, %v1145
        %v1166 = vmul.f32 %v1144, %v1150
        %v1167 = vmul.f32 %v1145, %v1151
        %v1168 = vmul.f32 %v1166, %v1162
        %v1169 = vmul.f32 %v1167, %v1163
        %v1170 = vadd.f32 %v1164, %v1168
        %v1171 = vadd.f32 %v1165, %v1169
        %v1172 = vmul.f32 %v1068, %v1170
        %v1173 = vmul.f32 %v1069, %v1171
        %v1174 = vrcp.pop %v930
        %v1175 = vmul.f32 %v930, %v1174
        %v1176 = vsub.f32 1.0, %v1175
        %v1177 = vmul.f32 %v1174, %v1176
        %v1178 = vadd.f32 %v1174, %v1177
        %vm1179 = vweird.f32 %v930
        %vm1180 = vweird.f32 %v1174
        %vm1181 = vmor %vm1179, %vm1180
        %v1182 = vsel %vm1181, %v1174, %v1178
        %v1183 = vand.u32 2147483647, %v930
        %vm1184 = vcmp.eq.f32.partialorder %v1183, 8.507059e+37
        %v1185 = vand.u32 %v930, 2147483648
        %v1186 = vor.u32 1.1754944e-38, %v1185
        %v1187 = vsel %vm1184, %v1186, %v1182
        %v1188 = vmul.f32 %v926, %v1187
        %v1189 = vrcp.pop %v931
        %v1190 = vmul.f32 %v931, %v1189
        %v1191 = vsub.f32 1.0, %v1190
        %v1192 = vmul.f32 %v1189, %v1191
        %v1193 = vadd.f32 %v1189, %v1192
        %vm1194 = vweird.f32 %v931
        %vm1195 = vweird.f32 %v1189
        %vm1196 = vmor %vm1194, %vm1195
        %v1197 = vsel %vm1196, %v1189, %v1193
        %v1198 = vand.u32 2147483647, %v931
        %vm1199 = vcmp.eq.f32.partialorder %v1198, 8.507059e+37
        %v1200 = vand.u32 %v931, 2147483648
        %v1201 = vor.u32 1.1754944e-38, %v1200
        %v1202 = vsel %vm1199, %v1201, %v1197
        %v1203 = vmul.f32 %v927, %v1202
        %vm1204 = vcmp.lt.f32.partialorder %v1188, 0.0
        %vm1205 = vcmp.lt.f32.partialorder %v1203, 0.0
        %v1206 = vsel %vm1204, -1.0, 1.0
        %v1207 = vsel %vm1205, -1.0, 1.0
        %v1208 = vand.u32 2147483647, %v1188
        %v1209 = vand.u32 2147483647, %v1203
        %vm1210 = vcmp.gt.f32.partialorder %v1208, 2.4142137
        %vm1211 = vcmp.gt.f32.partialorder %v1209, 2.4142137
        %vm1212 = vcmp.gt.f32.partialorder %v1208, 0.41421357
        %vm1213 = vcmp.gt.f32.partialorder %v1209, 0.41421357
        %v1214 = vmax.f32 %v1208, 1e-30
        %v1215 = vmax.f32 %v1209, 1e-30
        %v1216 = vrcp.pop %v1214
        %v1217 = vmul.f32 %v1214, %v1216
        %v1218 = vsub.f32 1.0, %v1217
        %v1219 = vmul.f32 %v1216, %v1218
        %v1220 = vadd.f32 %v1216, %v1219
        %vm1221 = vweird.f32 %v1214
        %vm1222 = vweird.f32 %v1216
        %vm1223 = vmor %vm1221, %vm1222
        %v1224 = vsel %vm1223, %v1216, %v1220
        %v1225 = vand.u32 2147483647, %v1214
        %vm1226 = vcmp.eq.f32.partialorder %v1225, 8.507059e+37
        %v1227 = vand.u32 %v1214, 2147483648
        %v1228 = vor.u32 1.1754944e-38, %v1227
        %v1229 = vsel %vm1226, %v1228, %v1224
        %v1230 = vmul.f32 -1.0, %v1229
        %v1231 = vrcp.pop %v1215
        %v1232 = vmul.f32 %v1215, %v1231
        %v1233 = vsub.f32 1.0, %v1232
        %v1234 = vmul.f32 %v1231, %v1233
        %v1235 = vadd.f32 %v1231, %v1234
        %vm1236 = vweird.f32 %v1215
        %vm1237 = vweird.f32 %v1231
        %vm1238 = vmor %vm1236, %vm1237
        %v1239 = vsel %vm1238, %v1231, %v1235
        %v1240 = vand.u32 2147483647, %v1215
        %vm1241 = vcmp.eq.f32.partialorder %v1240, 8.507059e+37
        %v1242 = vand.u32 %v1215, 2147483648
        %v1243 = vor.u32 1.1754944e-38, %v1242
        %v1244 = vsel %vm1241, %v1243, %v1239
        %v1245 = vmul.f32 -1.0, %v1244
        %v1246 = vsub.f32 %v1208, 1.0
        %v1247 = vsub.f32 %v1209, 1.0
        %v1248 = vadd.f32 %v1208, 1.0
        %v1249 = vadd.f32 %v1209, 1.0
        %v1250 = vrcp.pop %v1248
        %v1251 = vmul.f32 %v1248, %v1250
        %v1252 = vsub.f32 1.0, %v1251
        %v1253 = vmul.f32 %v1250, %v1252
        %v1254 = vadd.f32 %v1250, %v1253
        %vm1255 = vweird.f32 %v1248
        %vm1256 = vweird.f32 %v1250
        %vm1257 = vmor %vm1255, %vm1256
        %v1258 = vsel %vm1257, %v1250, %v1254
        %v1259 = vand.u32 2147483647, %v1248
        %vm1260 = vcmp.eq.f32.partialorder %v1259, 8.507059e+37
        %v1261 = vand.u32 %v1248, 2147483648
        %v1262 = vor.u32 1.1754944e-38, %v1261
        %v1263 = vsel %vm1260, %v1262, %v1258
        %v1264 = vmul.f32 %v1246, %v1263
        %v1265 = vrcp.pop %v1249
        %v1266 = vmul.f32 %v1249, %v1265
        %v1267 = vsub.f32 1.0, %v1266
        %v1268 = vmul.f32 %v1265, %v1267
        %v1269 = vadd.f32 %v1265, %v1268
        %vm1270 = vweird.f32 %v1249
        %vm1271 = vweird.f32 %v1265
        %vm1272 = vmor %vm1270, %vm1271
        %v1273 = vsel %vm1272, %v1265, %v1269
        %v1274 = vand.u32 2147483647, %v1249
        %vm1275 = vcmp.eq.f32.partialorder %v1274, 8.507059e+37
        %v1276 = vand.u32 %v1249, 2147483648
        %v1277 = vor.u32 1.1754944e-38, %v1276
        %v1278 = vsel %vm1275, %v1277, %v1273
        %v1279 = vmul.f32 %v1247, %v1278
        %v1280 = vsel %vm1212, %v1264, %v1208
        %v1281 = vsel %vm1213, %v1279, %v1209
        %v1282 = vsel %vm1210, %v1230, %v1280
        %v1283 = vsel %vm1211, %v1245, %v1281
        %v1284 = vsel %vm1212, 0.7853982, 0.0
        %v1285 = vsel %vm1213, 0.7853982, 0.0
        %v1286 = vsel %vm1210, 1.5707964, %v1284
        %v1287 = vsel %vm1211, 1.5707964, %v1285
        %v1288 = vmul.f32 %v1282, %v1282
        %v1289 = vmul.f32 %v1283, %v1283
        %v1290 = vmul.f32 %v1288, 0.080537446
        %v1291 = vmul.f32 %v1289, 0.080537446
        %v1292 = vsub.f32 %v1290, 0.13877685
        %v1293 = vsub.f32 %v1291, 0.13877685
        %v1294 = vmul.f32 %v1292, %v1288
        %v1295 = vmul.f32 %v1293, %v1289
        %v1296 = vadd.f32 %v1294, 0.19977711
        %v1297 = vadd.f32 %v1295, 0.19977711
        %v1298 = vmul.f32 %v1296, %v1288
        %v1299 = vmul.f32 %v1297, %v1289
        %v1300 = vsub.f32 %v1298, 0.3333295
        %v1301 = vsub.f32 %v1299, 0.3333295
        %v1302 = vadd.f32 %v1286, %v1282
        %v1303 = vadd.f32 %v1287, %v1283
        %v1304 = vmul.f32 %v1282, %v1288
        %v1305 = vmul.f32 %v1283, %v1289
        %v1306 = vmul.f32 %v1304, %v1300
        %v1307 = vmul.f32 %v1305, %v1301
        %v1308 = vadd.f32 %v1302, %v1306
        %v1309 = vadd.f32 %v1303, %v1307
        %v1310 = vmul.f32 %v1206, %v1308
        %v1311 = vmul.f32 %v1207, %v1309
        %v1312 = vsub.f32 %v1172, %v1310
        %v1313 = vsub.f32 %v1173, %v1311
        %v1314 = vmul.f32 %v1312, %v1312
        %v1315 = vmul.f32 %v1313, %v1313
        %v1316 = vmul.f32 %v1314, 0.40528473
        %v1317 = vmul.f32 %v1315, 0.40528473
        %v1318 = vsub.f32 %v1316, %v980
        %v1319 = vsub.f32 %v1317, %v995
        %v1320 = vadd.f32 %v1318, 1.0000001
        %v1321 = vadd.f32 %v1319, 1.0000001
        %v1322 = vrcp.pop %v1320
        %v1323 = vmul.f32 %v1320, %v1322
        %v1324 = vsub.f32 1.0, %v1323
        %v1325 = vmul.f32 %v1322, %v1324
        %v1326 = vadd.f32 %v1322, %v1325
        %vm1327 = vweird.f32 %v1320
        %vm1328 = vweird.f32 %v1322
        %vm1329 = vmor %vm1327, %vm1328
        %v1330 = vsel %vm1329, %v1322, %v1326
        %v1331 = vand.u32 2147483647, %v1320
        %vm1332 = vcmp.eq.f32.partialorder %v1331, 8.507059e+37
        %v1333 = vand.u32 %v1320, 2147483648
        %v1334 = vor.u32 1.1754944e-38, %v1333
        %v1335 = vsel %vm1332, %v1334, %v1330
        %v1336 = vmul.f32 %v1316, %v1335
        %v1337 = vrcp.pop %v1321
        %v1338 = vmul.f32 %v1321, %v1337
        %v1339 = vsub.f32 1.0, %v1338
        %v1340 = vmul.f32 %v1337, %v1339
        %v1341 = vadd.f32 %v1337, %v1340
        %vm1342 = vweird.f32 %v1321
        %vm1343 = vweird.f32 %v1337
        %vm1344 = vmor %vm1342, %vm1343
        %v1345 = vsel %vm1344, %v1337, %v1341
        %v1346 = vand.u32 2147483647, %v1321
        %vm1347 = vcmp.eq.f32.partialorder %v1346, 8.507059e+37
        %v1348 = vand.u32 %v1321, 2147483648
        %v1349 = vor.u32 1.1754944e-38, %v1348
        %v1350 = vsel %vm1347, %v1349, %v1345
        %v1351 = vmul.f32 %v1317, %v1350
        %v1352 = vrcp.pop %v1014
        %v1353 = vmul.f32 %v1014, %v1352
        %v1354 = vsub.f32 1.0, %v1353
        %v1355 = vmul.f32 %v1352, %v1354
        %v1356 = vadd.f32 %v1352, %v1355
        %vm1357 = vweird.f32 %v1014
        %vm1358 = vweird.f32 %v1352
        %vm1359 = vmor %vm1357, %vm1358
        %v1360 = vsel %vm1359, %v1352, %v1356
        %v1361 = vand.u32 2147483647, %v1014
        %vm1362 = vcmp.eq.f32.partialorder %v1361, 8.507059e+37
        %v1363 = vand.u32 %v1014, 2147483648
        %v1364 = vor.u32 1.1754944e-38, %v1363
        %v1365 = vsel %vm1362, %v1364, %v1360
        %v1366 = vmul.f32 %v1034, %v1365
        %v1367 = vrcp.pop %v1015
        %v1368 = vmul.f32 %v1015, %v1367
        %v1369 = vsub.f32 1.0, %v1368
        %v1370 = vmul.f32 %v1367, %v1369
        %v1371 = vadd.f32 %v1367, %v1370
        %vm1372 = vweird.f32 %v1015
        %vm1373 = vweird.f32 %v1367
        %vm1374 = vmor %vm1372, %vm1373
        %v1375 = vsel %vm1374, %v1367, %v1371
        %v1376 = vand.u32 2147483647, %v1015
        %vm1377 = vcmp.eq.f32.partialorder %v1376, 8.507059e+37
        %v1378 = vand.u32 %v1015, 2147483648
        %v1379 = vor.u32 1.1754944e-38, %v1378
        %v1380 = vsel %vm1377, %v1379, %v1375
        %v1381 = vmul.f32 %v1035, %v1380
        %v1382 = vmul.f32 %v1316, %v1336
        %v1383 = vmul.f32 %v1317, %v1351
        %v1384 = vadd.f32 %v1366, %v1382
        %v1385 = vadd.f32 %v1381, %v1383
        %v1386 = vsub.f32 %v980, %v1384
        %v1387 = vsub.f32 %v995, %v1385
        %v1388 = vld [vmem:[%s884] sm:$0xff]
        %v1389 = vld [vmem:[%s884 + $0x8] sm:$0xff]
        %v1390 = vsub.f32 1.0, %v1386
        %v1391 = vsub.f32 1.0, %v1387
        %v1392 = vmul.f32 %v1390, %v901
        %v1393 = vmul.f32 %v1391, %v902
        %v1394 = vadd.f32 %v1388, %v1392
        %v1395 = vadd.f32 %v1389, %v1393
        %1396 = vst [vmem:[%s884] sm:$0xff] %v1394
        %1397 = vst [vmem:[%s884 + $0x8] sm:$0xff] %v1395
        %s1398 = scalar_lea.vmem %s839, 128 [#allocation2]
        %v1399 = vld [vmem:[%s1398] sm:$0xff]
        %v1400 = vld [vmem:[%s1398 + $0x8] sm:$0xff]
        %v1401 = vld [vmem:[%s914] sm:$0xff]
        %v1402 = vld [vmem:[%s914 + $0x8] sm:$0xff]
        %v1403 = vsub.f32 %v1399, %v1401
        %v1404 = vsub.f32 %v1400, %v1402
        %v1405 = vmax.f32 %v1403, 0.0
        %v1406 = vmax.f32 %v1404, 0.0
        %v1407 = vmin.f32 %v1405, 14.99
        %v1408 = vmin.f32 %v1406, 14.99
        %v1409 = vld [vmem:[%s846] sm:$0xff]
        %v1410 = vld [vmem:[%s846 + $0x8] sm:$0xff]
        %s1411 = scalar_lea.vmem %s846, 16 [#allocation3]
        %v1412 = vld [vmem:[%s1411] sm:$0xff]
        %v1413 = vld [vmem:[%s1411 + $0x8] sm:$0xff]
        %v1414 = vmax.f32 %v1409, %v1412
        %v1415 = vmax.f32 %v1410, %v1413
        %s1416 = scalar_lea.vmem %s846, 32 [#allocation3]
        %v1417 = vld [vmem:[%s1416] sm:$0xff]
        %v1418 = vld [vmem:[%s1416 + $0x8] sm:$0xff]
        %v1419 = vmax.f32 %v1414, %v1417
        %v1420 = vmax.f32 %v1415, %v1418
        %s1421 = scalar_lea.vmem %s846, 48 [#allocation3]
        %v1422 = vld [vmem:[%s1421] sm:$0xff]
        %v1423 = vld [vmem:[%s1421 + $0x8] sm:$0xff]
        %v1424 = vmax.f32 %v1419, %v1422
        %v1425 = vmax.f32 %v1420, %v1423
        %s1426 = scalar_lea.vmem %s846, 64 [#allocation3]
        %v1427 = vld [vmem:[%s1426] sm:$0xff]
        %v1428 = vld [vmem:[%s1426 + $0x8] sm:$0xff]
        %v1429 = vmax.f32 %v1424, %v1427
        %v1430 = vmax.f32 %v1425, %v1428
        %s1431 = scalar_lea.vmem %s846, 80 [#allocation3]
        %v1432 = vld [vmem:[%s1431] sm:$0xff]
        %v1433 = vld [vmem:[%s1431 + $0x8] sm:$0xff]
        %v1434 = vmax.f32 %v1429, %v1432
        %v1435 = vmax.f32 %v1430, %v1433
        %s1436 = scalar_lea.vmem %s846, 96 [#allocation3]
        %v1437 = vld [vmem:[%s1436] sm:$0xff]
        %v1438 = vld [vmem:[%s1436 + $0x8] sm:$0xff]
        %v1439 = vmax.f32 %v1434, %v1437
        %v1440 = vmax.f32 %v1435, %v1438
        %s1441 = scalar_lea.vmem %s846, 112 [#allocation3]
        %v1442 = vld [vmem:[%s1441] sm:$0xff]
        %v1443 = vld [vmem:[%s1441 + $0x8] sm:$0xff]
        %v1444 = vmax.f32 %v1439, %v1442
        %v1445 = vmax.f32 %v1440, %v1443
        %s1446 = scalar_lea.vmem %s846, 128 [#allocation3]
        %v1447 = vld [vmem:[%s1446] sm:$0xff]
        %v1448 = vld [vmem:[%s1446 + $0x8] sm:$0xff]
        %v1449 = vmax.f32 %v1444, %v1447
        %v1450 = vmax.f32 %v1445, %v1448
        %s1451 = scalar_lea.vmem %s846, 144 [#allocation3]
        %v1452 = vld [vmem:[%s1451] sm:$0xff]
        %v1453 = vld [vmem:[%s1451 + $0x8] sm:$0xff]
        %v1454 = vmax.f32 %v1449, %v1452
        %v1455 = vmax.f32 %v1450, %v1453
        %s1456 = scalar_lea.vmem %s846, 160 [#allocation3]
        %v1457 = vld [vmem:[%s1456] sm:$0xff]
        %v1458 = vld [vmem:[%s1456 + $0x8] sm:$0xff]
        %v1459 = vmax.f32 %v1454, %v1457
        %v1460 = vmax.f32 %v1455, %v1458
        %s1461 = scalar_lea.vmem %s846, 176 [#allocation3]
        %v1462 = vld [vmem:[%s1461] sm:$0xff]
        %v1463 = vld [vmem:[%s1461 + $0x8] sm:$0xff]
        %v1464 = vmax.f32 %v1459, %v1462
        %v1465 = vmax.f32 %v1460, %v1463
        %s1466 = scalar_lea.vmem %s846, 192 [#allocation3]
        %v1467 = vld [vmem:[%s1466] sm:$0xff]
        %v1468 = vld [vmem:[%s1466 + $0x8] sm:$0xff]
        %v1469 = vmax.f32 %v1464, %v1467
        %v1470 = vmax.f32 %v1465, %v1468
        %s1471 = scalar_lea.vmem %s846, 208 [#allocation3]
        %v1472 = vld [vmem:[%s1471] sm:$0xff]
        %v1473 = vld [vmem:[%s1471 + $0x8] sm:$0xff]
        %v1474 = vmax.f32 %v1469, %v1472
        %v1475 = vmax.f32 %v1470, %v1473
        %s1476 = scalar_lea.vmem %s846, 224 [#allocation3]
        %v1477 = vld [vmem:[%s1476] sm:$0xff]
        %v1478 = vld [vmem:[%s1476 + $0x8] sm:$0xff]
        %v1479 = vmax.f32 %v1474, %v1477
        %v1480 = vmax.f32 %v1475, %v1478
        %s1481 = scalar_lea.vmem %s846, 240 [#allocation3]
        %v1482 = vld [vmem:[%s1481] sm:$0xff]
        %v1483 = vld [vmem:[%s1481 + $0x8] sm:$0xff]
        %v1484 = vmax.f32 %v1479, %v1482
        %v1485 = vmax.f32 %v1480, %v1483
        %v1486 = vsub.f32 %v1409, %v1484
        %v1487 = vsub.f32 %v1410, %v1485
        %v1488 = vmul.f32 %v1486, 1.442695
        %v1489 = vpow.pop %v1488
        %v1490 = vmul.f32 %v1487, 1.442695
        %v1491 = vpow.pop %v1490
        %v1492 = vadd.f32 %v1489, 0.0
        %v1493 = vadd.f32 %v1491, 0.0
        %v1494 = vand.u32 2147483647, %v1407
        %v1495 = vand.u32 2147483647, %v1408
        %v1496 = vsub.f32 1.0, %v1494
        %v1497 = vsub.f32 1.0, %v1495
        %v1498 = vmax.f32 %v1496, 0.0
        %v1499 = vmax.f32 %v1497, 0.0
        %v1500 = vmul.f32 %v1409, %v1498
        %v1501 = vmul.f32 %v1410, %v1499
        %v1502 = vadd.f32 %v1500, 0.0
        %v1503 = vadd.f32 %v1501, 0.0
        %v1504 = vsub.f32 %v1412, %v1484
        %v1505 = vsub.f32 %v1413, %v1485
        %v1506 = vmul.f32 %v1504, 1.442695
        %v1507 = vpow.pop %v1506
        %v1508 = vmul.f32 %v1505, 1.442695
        %v1509 = vpow.pop %v1508
        %v1510 = vadd.f32 %v1492, %v1507
        %v1511 = vadd.f32 %v1493, %v1509
        %v1512 = vsub.f32 %v1407, 1.0
        %v1513 = vsub.f32 %v1408, 1.0
        %v1514 = vand.u32 2147483647, %v1512
        %v1515 = vand.u32 2147483647, %v1513
        %v1516 = vsub.f32 1.0, %v1514
        %v1517 = vsub.f32 1.0, %v1515
        %v1518 = vmax.f32 %v1516, 0.0
        %v1519 = vmax.f32 %v1517, 0.0
        %v1520 = vmul.f32 %v1412, %v1518
        %v1521 = vmul.f32 %v1413, %v1519
        %v1522 = vadd.f32 %v1502, %v1520
        %v1523 = vadd.f32 %v1503, %v1521
        %v1524 = vsub.f32 %v1417, %v1484
        %v1525 = vsub.f32 %v1418, %v1485
        %v1526 = vmul.f32 %v1524, 1.442695
        %v1527 = vpow.pop %v1526
        %v1528 = vmul.f32 %v1525, 1.442695
        %v1529 = vpow.pop %v1528
        %v1530 = vadd.f32 %v1510, %v1527
        %v1531 = vadd.f32 %v1511, %v1529
        %v1532 = vsub.f32 %v1407, 2.0
        %v1533 = vsub.f32 %v1408, 2.0
        %v1534 = vand.u32 2147483647, %v1532
        %v1535 = vand.u32 2147483647, %v1533
        %v1536 = vsub.f32 1.0, %v1534
        %v1537 = vsub.f32 1.0, %v1535
        %v1538 = vmax.f32 %v1536, 0.0
        %v1539 = vmax.f32 %v1537, 0.0
        %v1540 = vmul.f32 %v1417, %v1538
        %v1541 = vmul.f32 %v1418, %v1539
        %v1542 = vadd.f32 %v1522, %v1540
        %v1543 = vadd.f32 %v1523, %v1541
        %v1544 = vsub.f32 %v1422, %v1484
        %v1545 = vsub.f32 %v1423, %v1485
        %v1546 = vmul.f32 %v1544, 1.442695
        %v1547 = vpow.pop %v1546
        %v1548 = vmul.f32 %v1545, 1.442695
        %v1549 = vpow.pop %v1548
        %v1550 = vadd.f32 %v1530, %v1547
        %v1551 = vadd.f32 %v1531, %v1549
        %v1552 = vsub.f32 %v1407, 3.0
        %v1553 = vsub.f32 %v1408, 3.0
        %v1554 = vand.u32 2147483647, %v1552
        %v1555 = vand.u32 2147483647, %v1553
        %v1556 = vsub.f32 1.0, %v1554
        %v1557 = vsub.f32 1.0, %v1555
        %v1558 = vmax.f32 %v1556, 0.0
        %v1559 = vmax.f32 %v1557, 0.0
        %v1560 = vmul.f32 %v1422, %v1558
        %v1561 = vmul.f32 %v1423, %v1559
        %v1562 = vadd.f32 %v1542, %v1560
        %v1563 = vadd.f32 %v1543, %v1561
        %v1564 = vsub.f32 %v1427, %v1484
        %v1565 = vsub.f32 %v1428, %v1485
        %v1566 = vmul.f32 %v1564, 1.442695
        %v1567 = vpow.pop %v1566
        %v1568 = vmul.f32 %v1565, 1.442695
        %v1569 = vpow.pop %v1568
        %v1570 = vadd.f32 %v1550, %v1567
        %v1571 = vadd.f32 %v1551, %v1569
        %v1572 = vsub.f32 %v1407, 4.0
        %v1573 = vsub.f32 %v1408, 4.0
        %v1574 = vand.u32 2147483647, %v1572
        %v1575 = vand.u32 2147483647, %v1573
        %v1576 = vsub.f32 1.0, %v1574
        %v1577 = vsub.f32 1.0, %v1575
        %v1578 = vmax.f32 %v1576, 0.0
        %v1579 = vmax.f32 %v1577, 0.0
        %v1580 = vmul.f32 %v1427, %v1578
        %v1581 = vmul.f32 %v1428, %v1579
        %v1582 = vadd.f32 %v1562, %v1580
        %v1583 = vadd.f32 %v1563, %v1581
        %v1584 = vsub.f32 %v1432, %v1484
        %v1585 = vsub.f32 %v1433, %v1485
        %v1586 = vmul.f32 %v1584, 1.442695
        %v1587 = vpow.pop %v1586
        %v1588 = vmul.f32 %v1585, 1.442695
        %v1589 = vpow.pop %v1588
        %v1590 = vadd.f32 %v1570, %v1587
        %v1591 = vadd.f32 %v1571, %v1589
        %v1592 = vsub.f32 %v1407, 5.0
        %v1593 = vsub.f32 %v1408, 5.0
        %v1594 = vand.u32 2147483647, %v1592
        %v1595 = vand.u32 2147483647, %v1593
        %v1596 = vsub.f32 1.0, %v1594
        %v1597 = vsub.f32 1.0, %v1595
        %v1598 = vmax.f32 %v1596, 0.0
        %v1599 = vmax.f32 %v1597, 0.0
        %v1600 = vmul.f32 %v1432, %v1598
        %v1601 = vmul.f32 %v1433, %v1599
        %v1602 = vadd.f32 %v1582, %v1600
        %v1603 = vadd.f32 %v1583, %v1601
        %v1604 = vsub.f32 %v1437, %v1484
        %v1605 = vsub.f32 %v1438, %v1485
        %v1606 = vmul.f32 %v1604, 1.442695
        %v1607 = vpow.pop %v1606
        %v1608 = vmul.f32 %v1605, 1.442695
        %v1609 = vpow.pop %v1608
        %v1610 = vadd.f32 %v1590, %v1607
        %v1611 = vadd.f32 %v1591, %v1609
        %v1612 = vsub.f32 %v1407, 6.0
        %v1613 = vsub.f32 %v1408, 6.0
        %v1614 = vand.u32 2147483647, %v1612
        %v1615 = vand.u32 2147483647, %v1613
        %v1616 = vsub.f32 1.0, %v1614
        %v1617 = vsub.f32 1.0, %v1615
        %v1618 = vmax.f32 %v1616, 0.0
        %v1619 = vmax.f32 %v1617, 0.0
        %v1620 = vmul.f32 %v1437, %v1618
        %v1621 = vmul.f32 %v1438, %v1619
        %v1622 = vadd.f32 %v1602, %v1620
        %v1623 = vadd.f32 %v1603, %v1621
        %v1624 = vsub.f32 %v1442, %v1484
        %v1625 = vsub.f32 %v1443, %v1485
        %v1626 = vmul.f32 %v1624, 1.442695
        %v1627 = vpow.pop %v1626
        %v1628 = vmul.f32 %v1625, 1.442695
        %v1629 = vpow.pop %v1628
        %v1630 = vadd.f32 %v1610, %v1627
        %v1631 = vadd.f32 %v1611, %v1629
        %v1632 = vsub.f32 %v1407, 7.0
        %v1633 = vsub.f32 %v1408, 7.0
        %v1634 = vand.u32 2147483647, %v1632
        %v1635 = vand.u32 2147483647, %v1633
        %v1636 = vsub.f32 1.0, %v1634
        %v1637 = vsub.f32 1.0, %v1635
        %v1638 = vmax.f32 %v1636, 0.0
        %v1639 = vmax.f32 %v1637, 0.0
        %v1640 = vmul.f32 %v1442, %v1638
        %v1641 = vmul.f32 %v1443, %v1639
        %v1642 = vadd.f32 %v1622, %v1640
        %v1643 = vadd.f32 %v1623, %v1641
        %v1644 = vsub.f32 %v1447, %v1484
        %v1645 = vsub.f32 %v1448, %v1485
        %v1646 = vmul.f32 %v1644, 1.442695
        %v1647 = vpow.pop %v1646
        %v1648 = vmul.f32 %v1645, 1.442695
        %v1649 = vpow.pop %v1648
        %v1650 = vadd.f32 %v1630, %v1647
        %v1651 = vadd.f32 %v1631, %v1649
        %v1652 = vsub.f32 %v1407, 8.0
        %v1653 = vsub.f32 %v1408, 8.0
        %v1654 = vand.u32 2147483647, %v1652
        %v1655 = vand.u32 2147483647, %v1653
        %v1656 = vsub.f32 1.0, %v1654
        %v1657 = vsub.f32 1.0, %v1655
        %v1658 = vmax.f32 %v1656, 0.0
        %v1659 = vmax.f32 %v1657, 0.0
        %v1660 = vmul.f32 %v1447, %v1658
        %v1661 = vmul.f32 %v1448, %v1659
        %v1662 = vadd.f32 %v1642, %v1660
        %v1663 = vadd.f32 %v1643, %v1661
        %v1664 = vsub.f32 %v1452, %v1484
        %v1665 = vsub.f32 %v1453, %v1485
        %v1666 = vmul.f32 %v1664, 1.442695
        %v1667 = vpow.pop %v1666
        %v1668 = vmul.f32 %v1665, 1.442695
        %v1669 = vpow.pop %v1668
        %v1670 = vadd.f32 %v1650, %v1667
        %v1671 = vadd.f32 %v1651, %v1669
        %v1672 = vsub.f32 %v1407, 9.0
        %v1673 = vsub.f32 %v1408, 9.0
        %v1674 = vand.u32 2147483647, %v1672
        %v1675 = vand.u32 2147483647, %v1673
        %v1676 = vsub.f32 1.0, %v1674
        %v1677 = vsub.f32 1.0, %v1675
        %v1678 = vmax.f32 %v1676, 0.0
        %v1679 = vmax.f32 %v1677, 0.0
        %v1680 = vmul.f32 %v1452, %v1678
        %v1681 = vmul.f32 %v1453, %v1679
        %v1682 = vadd.f32 %v1662, %v1680
        %v1683 = vadd.f32 %v1663, %v1681
        %v1684 = vsub.f32 %v1457, %v1484
        %v1685 = vsub.f32 %v1458, %v1485
        %v1686 = vmul.f32 %v1684, 1.442695
        %v1687 = vpow.pop %v1686
        %v1688 = vmul.f32 %v1685, 1.442695
        %v1689 = vpow.pop %v1688
        %v1690 = vadd.f32 %v1670, %v1687
        %v1691 = vadd.f32 %v1671, %v1689
        %v1692 = vsub.f32 %v1407, 10.0
        %v1693 = vsub.f32 %v1408, 10.0
        %v1694 = vand.u32 2147483647, %v1692
        %v1695 = vand.u32 2147483647, %v1693
        %v1696 = vsub.f32 1.0, %v1694
        %v1697 = vsub.f32 1.0, %v1695
        %v1698 = vmax.f32 %v1696, 0.0
        %v1699 = vmax.f32 %v1697, 0.0
        %v1700 = vmul.f32 %v1457, %v1698
        %v1701 = vmul.f32 %v1458, %v1699
        %v1702 = vadd.f32 %v1682, %v1700
        %v1703 = vadd.f32 %v1683, %v1701
        %v1704 = vsub.f32 %v1462, %v1484
        %v1705 = vsub.f32 %v1463, %v1485
        %v1706 = vmul.f32 %v1704, 1.442695
        %v1707 = vpow.pop %v1706
        %v1708 = vmul.f32 %v1705, 1.442695
        %v1709 = vpow.pop %v1708
        %v1710 = vadd.f32 %v1690, %v1707
        %v1711 = vadd.f32 %v1691, %v1709
        %v1712 = vsub.f32 %v1407, 11.0
        %v1713 = vsub.f32 %v1408, 11.0
        %v1714 = vand.u32 2147483647, %v1712
        %v1715 = vand.u32 2147483647, %v1713
        %v1716 = vsub.f32 1.0, %v1714
        %v1717 = vsub.f32 1.0, %v1715
        %v1718 = vmax.f32 %v1716, 0.0
        %v1719 = vmax.f32 %v1717, 0.0
        %v1720 = vmul.f32 %v1462, %v1718
        %v1721 = vmul.f32 %v1463, %v1719
        %v1722 = vadd.f32 %v1702, %v1720
        %v1723 = vadd.f32 %v1703, %v1721
        %v1724 = vsub.f32 %v1467, %v1484
        %v1725 = vsub.f32 %v1468, %v1485
        %v1726 = vmul.f32 %v1724, 1.442695
        %v1727 = vpow.pop %v1726
        %v1728 = vmul.f32 %v1725, 1.442695
        %v1729 = vpow.pop %v1728
        %v1730 = vadd.f32 %v1710, %v1727
        %v1731 = vadd.f32 %v1711, %v1729
        %v1732 = vsub.f32 %v1407, 12.0
        %v1733 = vsub.f32 %v1408, 12.0
        %v1734 = vand.u32 2147483647, %v1732
        %v1735 = vand.u32 2147483647, %v1733
        %v1736 = vsub.f32 1.0, %v1734
        %v1737 = vsub.f32 1.0, %v1735
        %v1738 = vmax.f32 %v1736, 0.0
        %v1739 = vmax.f32 %v1737, 0.0
        %v1740 = vmul.f32 %v1467, %v1738
        %v1741 = vmul.f32 %v1468, %v1739
        %v1742 = vadd.f32 %v1722, %v1740
        %v1743 = vadd.f32 %v1723, %v1741
        %v1744 = vsub.f32 %v1472, %v1484
        %v1745 = vsub.f32 %v1473, %v1485
        %v1746 = vmul.f32 %v1744, 1.442695
        %v1747 = vpow.pop %v1746
        %v1748 = vmul.f32 %v1745, 1.442695
        %v1749 = vpow.pop %v1748
        %v1750 = vadd.f32 %v1730, %v1747
        %v1751 = vadd.f32 %v1731, %v1749
        %v1752 = vsub.f32 %v1407, 13.0
        %v1753 = vsub.f32 %v1408, 13.0
        %v1754 = vand.u32 2147483647, %v1752
        %v1755 = vand.u32 2147483647, %v1753
        %v1756 = vsub.f32 1.0, %v1754
        %v1757 = vsub.f32 1.0, %v1755
        %v1758 = vmax.f32 %v1756, 0.0
        %v1759 = vmax.f32 %v1757, 0.0
        %v1760 = vmul.f32 %v1472, %v1758
        %v1761 = vmul.f32 %v1473, %v1759
        %v1762 = vadd.f32 %v1742, %v1760
        %v1763 = vadd.f32 %v1743, %v1761
        %v1764 = vsub.f32 %v1477, %v1484
        %v1765 = vsub.f32 %v1478, %v1485
        %v1766 = vmul.f32 %v1764, 1.442695
        %v1767 = vpow.pop %v1766
        %v1768 = vmul.f32 %v1765, 1.442695
        %v1769 = vpow.pop %v1768
        %v1770 = vadd.f32 %v1750, %v1767
        %v1771 = vadd.f32 %v1751, %v1769
        %v1772 = vsub.f32 %v1407, 14.0
        %v1773 = vsub.f32 %v1408, 14.0
        %v1774 = vand.u32 2147483647, %v1772
        %v1775 = vand.u32 2147483647, %v1773
        %v1776 = vsub.f32 1.0, %v1774
        %v1777 = vsub.f32 1.0, %v1775
        %v1778 = vmax.f32 %v1776, 0.0
        %v1779 = vmax.f32 %v1777, 0.0
        %v1780 = vmul.f32 %v1477, %v1778
        %v1781 = vmul.f32 %v1478, %v1779
        %v1782 = vadd.f32 %v1762, %v1780
        %v1783 = vadd.f32 %v1763, %v1781
        %v1784 = vsub.f32 %v1482, %v1484
        %v1785 = vsub.f32 %v1483, %v1485
        %v1786 = vmul.f32 %v1784, 1.442695
        %v1787 = vpow.pop %v1786
        %v1788 = vmul.f32 %v1785, 1.442695
        %v1789 = vpow.pop %v1788
        %v1790 = vadd.f32 %v1770, %v1787
        %v1791 = vadd.f32 %v1771, %v1789
        %v1792 = vsub.f32 %v1407, 15.0
        %v1793 = vsub.f32 %v1408, 15.0
        %v1794 = vand.u32 2147483647, %v1792
        %v1795 = vand.u32 2147483647, %v1793
        %v1796 = vsub.f32 1.0, %v1794
        %v1797 = vsub.f32 1.0, %v1795
        %v1798 = vmax.f32 %v1796, 0.0
        %v1799 = vmax.f32 %v1797, 0.0
        %v1800 = vmul.f32 %v1482, %v1798
        %v1801 = vmul.f32 %v1483, %v1799
        %v1802 = vadd.f32 %v1782, %v1800
        %v1803 = vadd.f32 %v1783, %v1801
        %v1804 = vlog2.pop %v1790
        %v1805 = vmul.f32 %v1804, 0.6931472
        %v1806 = vlog2.pop %v1791
        %v1807 = vmul.f32 %v1806, 0.6931472
        %v1808 = vadd.f32 %v1484, %v1805
        %v1809 = vadd.f32 %v1485, %v1807
        %v1810 = vadd.f32 %v1808, 0.0
        %v1811 = vadd.f32 %v1809, 0.0
        %v1812 = vsub.f32 %v1810, %v1802
        %v1813 = vsub.f32 %v1811, %v1803
        %s1814 = scalar_lea.vmem %s839, 144 [#allocation2]
        %v1815 = vld [vmem:[%s1814] sm:$0xff]
        %v1816 = vld [vmem:[%s1814 + $0x8] sm:$0xff]
        %v1817 = vld [vmem:[%s917] sm:$0xff]
        %v1818 = vld [vmem:[%s917 + $0x8] sm:$0xff]
        %v1819 = vsub.f32 %v1815, %v1817
        %v1820 = vsub.f32 %v1816, %v1818
        %v1821 = vmax.f32 %v1819, 0.0
        %v1822 = vmax.f32 %v1820, 0.0
        %v1823 = vmin.f32 %v1821, 14.99
        %v1824 = vmin.f32 %v1822, 14.99
        %s1825 = scalar_lea.vmem %s846, 256 [#allocation3]
        %v1826 = vld [vmem:[%s1825] sm:$0xff]
        %v1827 = vld [vmem:[%s1825 + $0x8] sm:$0xff]
        %s1828 = scalar_lea.vmem %s846, 272 [#allocation3]
        %v1829 = vld [vmem:[%s1828] sm:$0xff]
        %v1830 = vld [vmem:[%s1828 + $0x8] sm:$0xff]
        %v1831 = vmax.f32 %v1826, %v1829
        %v1832 = vmax.f32 %v1827, %v1830
        %s1833 = scalar_lea.vmem %s846, 288 [#allocation3]
        %v1834 = vld [vmem:[%s1833] sm:$0xff]
        %v1835 = vld [vmem:[%s1833 + $0x8] sm:$0xff]
        %v1836 = vmax.f32 %v1831, %v1834
        %v1837 = vmax.f32 %v1832, %v1835
        %s1838 = scalar_lea.vmem %s846, 304 [#allocation3]
        %v1839 = vld [vmem:[%s1838] sm:$0xff]
        %v1840 = vld [vmem:[%s1838 + $0x8] sm:$0xff]
        %v1841 = vmax.f32 %v1836, %v1839
        %v1842 = vmax.f32 %v1837, %v1840
        %s1843 = scalar_lea.vmem %s846, 320 [#allocation3]
        %v1844 = vld [vmem:[%s1843] sm:$0xff]
        %v1845 = vld [vmem:[%s1843 + $0x8] sm:$0xff]
        %v1846 = vmax.f32 %v1841, %v1844
        %v1847 = vmax.f32 %v1842, %v1845
        %s1848 = scalar_lea.vmem %s846, 336 [#allocation3]
        %v1849 = vld [vmem:[%s1848] sm:$0xff]
        %v1850 = vld [vmem:[%s1848 + $0x8] sm:$0xff]
        %v1851 = vmax.f32 %v1846, %v1849
        %v1852 = vmax.f32 %v1847, %v1850
        %s1853 = scalar_lea.vmem %s846, 352 [#allocation3]
        %v1854 = vld [vmem:[%s1853] sm:$0xff]
        %v1855 = vld [vmem:[%s1853 + $0x8] sm:$0xff]
        %v1856 = vmax.f32 %v1851, %v1854
        %v1857 = vmax.f32 %v1852, %v1855
        %s1858 = scalar_lea.vmem %s846, 368 [#allocation3]
        %v1859 = vld [vmem:[%s1858] sm:$0xff]
        %v1860 = vld [vmem:[%s1858 + $0x8] sm:$0xff]
        %v1861 = vmax.f32 %v1856, %v1859
        %v1862 = vmax.f32 %v1857, %v1860
        %s1863 = scalar_lea.vmem %s846, 384 [#allocation3]
        %v1864 = vld [vmem:[%s1863] sm:$0xff]
        %v1865 = vld [vmem:[%s1863 + $0x8] sm:$0xff]
        %v1866 = vmax.f32 %v1861, %v1864
        %v1867 = vmax.f32 %v1862, %v1865
        %s1868 = scalar_lea.vmem %s846, 400 [#allocation3]
        %v1869 = vld [vmem:[%s1868] sm:$0xff]
        %v1870 = vld [vmem:[%s1868 + $0x8] sm:$0xff]
        %v1871 = vmax.f32 %v1866, %v1869
        %v1872 = vmax.f32 %v1867, %v1870
        %s1873 = scalar_lea.vmem %s846, 416 [#allocation3]
        %v1874 = vld [vmem:[%s1873] sm:$0xff]
        %v1875 = vld [vmem:[%s1873 + $0x8] sm:$0xff]
        %v1876 = vmax.f32 %v1871, %v1874
        %v1877 = vmax.f32 %v1872, %v1875
        %s1878 = scalar_lea.vmem %s846, 432 [#allocation3]
        %v1879 = vld [vmem:[%s1878] sm:$0xff]
        %v1880 = vld [vmem:[%s1878 + $0x8] sm:$0xff]
        %v1881 = vmax.f32 %v1876, %v1879
        %v1882 = vmax.f32 %v1877, %v1880
        %s1883 = scalar_lea.vmem %s846, 448 [#allocation3]
        %v1884 = vld [vmem:[%s1883] sm:$0xff]
        %v1885 = vld [vmem:[%s1883 + $0x8] sm:$0xff]
        %v1886 = vmax.f32 %v1881, %v1884
        %v1887 = vmax.f32 %v1882, %v1885
        %s1888 = scalar_lea.vmem %s846, 464 [#allocation3]
        %v1889 = vld [vmem:[%s1888] sm:$0xff]
        %v1890 = vld [vmem:[%s1888 + $0x8] sm:$0xff]
        %v1891 = vmax.f32 %v1886, %v1889
        %v1892 = vmax.f32 %v1887, %v1890
        %s1893 = scalar_lea.vmem %s846, 480 [#allocation3]
        %v1894 = vld [vmem:[%s1893] sm:$0xff]
        %v1895 = vld [vmem:[%s1893 + $0x8] sm:$0xff]
        %v1896 = vmax.f32 %v1891, %v1894
        %v1897 = vmax.f32 %v1892, %v1895
        %s1898 = scalar_lea.vmem %s846, 496 [#allocation3]
        %v1899 = vld [vmem:[%s1898] sm:$0xff]
        %v1900 = vld [vmem:[%s1898 + $0x8] sm:$0xff]
        %v1901 = vmax.f32 %v1896, %v1899
        %v1902 = vmax.f32 %v1897, %v1900
        %v1903 = vsub.f32 %v1826, %v1901
        %v1904 = vsub.f32 %v1827, %v1902
        %v1905 = vmul.f32 %v1903, 1.442695
        %v1906 = vpow.pop %v1905
        %v1907 = vmul.f32 %v1904, 1.442695
        %v1908 = vpow.pop %v1907
        %v1909 = vadd.f32 %v1906, 0.0
        %v1910 = vadd.f32 %v1908, 0.0
        %v1911 = vand.u32 2147483647, %v1823
        %v1912 = vand.u32 2147483647, %v1824
        %v1913 = vsub.f32 1.0, %v1911
        %v1914 = vsub.f32 1.0, %v1912
        %v1915 = vmax.f32 %v1913, 0.0
        %v1916 = vmax.f32 %v1914, 0.0
        %v1917 = vmul.f32 %v1826, %v1915
        %v1918 = vmul.f32 %v1827, %v1916
        %v1919 = vadd.f32 %v1917, 0.0
        %v1920 = vadd.f32 %v1918, 0.0
        %v1921 = vsub.f32 %v1829, %v1901
        %v1922 = vsub.f32 %v1830, %v1902
        %v1923 = vmul.f32 %v1921, 1.442695
        %v1924 = vpow.pop %v1923
        %v1925 = vmul.f32 %v1922, 1.442695
        %v1926 = vpow.pop %v1925
        %v1927 = vadd.f32 %v1909, %v1924
        %v1928 = vadd.f32 %v1910, %v1926
        %v1929 = vsub.f32 %v1823, 1.0
        %v1930 = vsub.f32 %v1824, 1.0
        %v1931 = vand.u32 2147483647, %v1929
        %v1932 = vand.u32 2147483647, %v1930
        %v1933 = vsub.f32 1.0, %v1931
        %v1934 = vsub.f32 1.0, %v1932
        %v1935 = vmax.f32 %v1933, 0.0
        %v1936 = vmax.f32 %v1934, 0.0
        %v1937 = vmul.f32 %v1829, %v1935
        %v1938 = vmul.f32 %v1830, %v1936
        %v1939 = vadd.f32 %v1919, %v1937
        %v1940 = vadd.f32 %v1920, %v1938
        %v1941 = vsub.f32 %v1834, %v1901
        %v1942 = vsub.f32 %v1835, %v1902
        %v1943 = vmul.f32 %v1941, 1.442695
        %v1944 = vpow.pop %v1943
        %v1945 = vmul.f32 %v1942, 1.442695
        %v1946 = vpow.pop %v1945
        %v1947 = vadd.f32 %v1927, %v1944
        %v1948 = vadd.f32 %v1928, %v1946
        %v1949 = vsub.f32 %v1823, 2.0
        %v1950 = vsub.f32 %v1824, 2.0
        %v1951 = vand.u32 2147483647, %v1949
        %v1952 = vand.u32 2147483647, %v1950
        %v1953 = vsub.f32 1.0, %v1951
        %v1954 = vsub.f32 1.0, %v1952
        %v1955 = vmax.f32 %v1953, 0.0
        %v1956 = vmax.f32 %v1954, 0.0
        %v1957 = vmul.f32 %v1834, %v1955
        %v1958 = vmul.f32 %v1835, %v1956
        %v1959 = vadd.f32 %v1939, %v1957
        %v1960 = vadd.f32 %v1940, %v1958
        %v1961 = vsub.f32 %v1839, %v1901
        %v1962 = vsub.f32 %v1840, %v1902
        %v1963 = vmul.f32 %v1961, 1.442695
        %v1964 = vpow.pop %v1963
        %v1965 = vmul.f32 %v1962, 1.442695
        %v1966 = vpow.pop %v1965
        %v1967 = vadd.f32 %v1947, %v1964
        %v1968 = vadd.f32 %v1948, %v1966
        %v1969 = vsub.f32 %v1823, 3.0
        %v1970 = vsub.f32 %v1824, 3.0
        %v1971 = vand.u32 2147483647, %v1969
        %v1972 = vand.u32 2147483647, %v1970
        %v1973 = vsub.f32 1.0, %v1971
        %v1974 = vsub.f32 1.0, %v1972
        %v1975 = vmax.f32 %v1973, 0.0
        %v1976 = vmax.f32 %v1974, 0.0
        %v1977 = vmul.f32 %v1839, %v1975
        %v1978 = vmul.f32 %v1840, %v1976
        %v1979 = vadd.f32 %v1959, %v1977
        %v1980 = vadd.f32 %v1960, %v1978
        %v1981 = vsub.f32 %v1844, %v1901
        %v1982 = vsub.f32 %v1845, %v1902
        %v1983 = vmul.f32 %v1981, 1.442695
        %v1984 = vpow.pop %v1983
        %v1985 = vmul.f32 %v1982, 1.442695
        %v1986 = vpow.pop %v1985
        %v1987 = vadd.f32 %v1967, %v1984
        %v1988 = vadd.f32 %v1968, %v1986
        %v1989 = vsub.f32 %v1823, 4.0
        %v1990 = vsub.f32 %v1824, 4.0
        %v1991 = vand.u32 2147483647, %v1989
        %v1992 = vand.u32 2147483647, %v1990
        %v1993 = vsub.f32 1.0, %v1991
        %v1994 = vsub.f32 1.0, %v1992
        %v1995 = vmax.f32 %v1993, 0.0
        %v1996 = vmax.f32 %v1994, 0.0
        %v1997 = vmul.f32 %v1844, %v1995
        %v1998 = vmul.f32 %v1845, %v1996
        %v1999 = vadd.f32 %v1979, %v1997
        %v2000 = vadd.f32 %v1980, %v1998
        %v2001 = vsub.f32 %v1849, %v1901
        %v2002 = vsub.f32 %v1850, %v1902
        %v2003 = vmul.f32 %v2001, 1.442695
        %v2004 = vpow.pop %v2003
        %v2005 = vmul.f32 %v2002, 1.442695
        %v2006 = vpow.pop %v2005
        %v2007 = vadd.f32 %v1987, %v2004
        %v2008 = vadd.f32 %v1988, %v2006
        %v2009 = vsub.f32 %v1823, 5.0
        %v2010 = vsub.f32 %v1824, 5.0
        %v2011 = vand.u32 2147483647, %v2009
        %v2012 = vand.u32 2147483647, %v2010
        %v2013 = vsub.f32 1.0, %v2011
        %v2014 = vsub.f32 1.0, %v2012
        %v2015 = vmax.f32 %v2013, 0.0
        %v2016 = vmax.f32 %v2014, 0.0
        %v2017 = vmul.f32 %v1849, %v2015
        %v2018 = vmul.f32 %v1850, %v2016
        %v2019 = vadd.f32 %v1999, %v2017
        %v2020 = vadd.f32 %v2000, %v2018
        %v2021 = vsub.f32 %v1854, %v1901
        %v2022 = vsub.f32 %v1855, %v1902
        %v2023 = vmul.f32 %v2021, 1.442695
        %v2024 = vpow.pop %v2023
        %v2025 = vmul.f32 %v2022, 1.442695
        %v2026 = vpow.pop %v2025
        %v2027 = vadd.f32 %v2007, %v2024
        %v2028 = vadd.f32 %v2008, %v2026
        %v2029 = vsub.f32 %v1823, 6.0
        %v2030 = vsub.f32 %v1824, 6.0
        %v2031 = vand.u32 2147483647, %v2029
        %v2032 = vand.u32 2147483647, %v2030
        %v2033 = vsub.f32 1.0, %v2031
        %v2034 = vsub.f32 1.0, %v2032
        %v2035 = vmax.f32 %v2033, 0.0
        %v2036 = vmax.f32 %v2034, 0.0
        %v2037 = vmul.f32 %v1854, %v2035
        %v2038 = vmul.f32 %v1855, %v2036
        %v2039 = vadd.f32 %v2019, %v2037
        %v2040 = vadd.f32 %v2020, %v2038
        %v2041 = vsub.f32 %v1859, %v1901
        %v2042 = vsub.f32 %v1860, %v1902
        %v2043 = vmul.f32 %v2041, 1.442695
        %v2044 = vpow.pop %v2043
        %v2045 = vmul.f32 %v2042, 1.442695
        %v2046 = vpow.pop %v2045
        %v2047 = vadd.f32 %v2027, %v2044
        %v2048 = vadd.f32 %v2028, %v2046
        %v2049 = vsub.f32 %v1823, 7.0
        %v2050 = vsub.f32 %v1824, 7.0
        %v2051 = vand.u32 2147483647, %v2049
        %v2052 = vand.u32 2147483647, %v2050
        %v2053 = vsub.f32 1.0, %v2051
        %v2054 = vsub.f32 1.0, %v2052
        %v2055 = vmax.f32 %v2053, 0.0
        %v2056 = vmax.f32 %v2054, 0.0
        %v2057 = vmul.f32 %v1859, %v2055
        %v2058 = vmul.f32 %v1860, %v2056
        %v2059 = vadd.f32 %v2039, %v2057
        %v2060 = vadd.f32 %v2040, %v2058
        %v2061 = vsub.f32 %v1864, %v1901
        %v2062 = vsub.f32 %v1865, %v1902
        %v2063 = vmul.f32 %v2061, 1.442695
        %v2064 = vpow.pop %v2063
        %v2065 = vmul.f32 %v2062, 1.442695
        %v2066 = vpow.pop %v2065
        %v2067 = vadd.f32 %v2047, %v2064
        %v2068 = vadd.f32 %v2048, %v2066
        %v2069 = vsub.f32 %v1823, 8.0
        %v2070 = vsub.f32 %v1824, 8.0
        %v2071 = vand.u32 2147483647, %v2069
        %v2072 = vand.u32 2147483647, %v2070
        %v2073 = vsub.f32 1.0, %v2071
        %v2074 = vsub.f32 1.0, %v2072
        %v2075 = vmax.f32 %v2073, 0.0
        %v2076 = vmax.f32 %v2074, 0.0
        %v2077 = vmul.f32 %v1864, %v2075
        %v2078 = vmul.f32 %v1865, %v2076
        %v2079 = vadd.f32 %v2059, %v2077
        %v2080 = vadd.f32 %v2060, %v2078
        %v2081 = vsub.f32 %v1869, %v1901
        %v2082 = vsub.f32 %v1870, %v1902
        %v2083 = vmul.f32 %v2081, 1.442695
        %v2084 = vpow.pop %v2083
        %v2085 = vmul.f32 %v2082, 1.442695
        %v2086 = vpow.pop %v2085
        %v2087 = vadd.f32 %v2067, %v2084
        %v2088 = vadd.f32 %v2068, %v2086
        %v2089 = vsub.f32 %v1823, 9.0
        %v2090 = vsub.f32 %v1824, 9.0
        %v2091 = vand.u32 2147483647, %v2089
        %v2092 = vand.u32 2147483647, %v2090
        %v2093 = vsub.f32 1.0, %v2091
        %v2094 = vsub.f32 1.0, %v2092
        %v2095 = vmax.f32 %v2093, 0.0
        %v2096 = vmax.f32 %v2094, 0.0
        %v2097 = vmul.f32 %v1869, %v2095
        %v2098 = vmul.f32 %v1870, %v2096
        %v2099 = vadd.f32 %v2079, %v2097
        %v2100 = vadd.f32 %v2080, %v2098
        %v2101 = vsub.f32 %v1874, %v1901
        %v2102 = vsub.f32 %v1875, %v1902
        %v2103 = vmul.f32 %v2101, 1.442695
        %v2104 = vpow.pop %v2103
        %v2105 = vmul.f32 %v2102, 1.442695
        %v2106 = vpow.pop %v2105
        %v2107 = vadd.f32 %v2087, %v2104
        %v2108 = vadd.f32 %v2088, %v2106
        %v2109 = vsub.f32 %v1823, 10.0
        %v2110 = vsub.f32 %v1824, 10.0
        %v2111 = vand.u32 2147483647, %v2109
        %v2112 = vand.u32 2147483647, %v2110
        %v2113 = vsub.f32 1.0, %v2111
        %v2114 = vsub.f32 1.0, %v2112
        %v2115 = vmax.f32 %v2113, 0.0
        %v2116 = vmax.f32 %v2114, 0.0
        %v2117 = vmul.f32 %v1874, %v2115
        %v2118 = vmul.f32 %v1875, %v2116
        %v2119 = vadd.f32 %v2099, %v2117
        %v2120 = vadd.f32 %v2100, %v2118
        %v2121 = vsub.f32 %v1879, %v1901
        %v2122 = vsub.f32 %v1880, %v1902
        %v2123 = vmul.f32 %v2121, 1.442695
        %v2124 = vpow.pop %v2123
        %v2125 = vmul.f32 %v2122, 1.442695
        %v2126 = vpow.pop %v2125
        %v2127 = vadd.f32 %v2107, %v2124
        %v2128 = vadd.f32 %v2108, %v2126
        %v2129 = vsub.f32 %v1823, 11.0
        %v2130 = vsub.f32 %v1824, 11.0
        %v2131 = vand.u32 2147483647, %v2129
        %v2132 = vand.u32 2147483647, %v2130
        %v2133 = vsub.f32 1.0, %v2131
        %v2134 = vsub.f32 1.0, %v2132
        %v2135 = vmax.f32 %v2133, 0.0
        %v2136 = vmax.f32 %v2134, 0.0
        %v2137 = vmul.f32 %v1879, %v2135
        %v2138 = vmul.f32 %v1880, %v2136
        %v2139 = vadd.f32 %v2119, %v2137
        %v2140 = vadd.f32 %v2120, %v2138
        %v2141 = vsub.f32 %v1884, %v1901
        %v2142 = vsub.f32 %v1885, %v1902
        %v2143 = vmul.f32 %v2141, 1.442695
        %v2144 = vpow.pop %v2143
        %v2145 = vmul.f32 %v2142, 1.442695
        %v2146 = vpow.pop %v2145
        %v2147 = vadd.f32 %v2127, %v2144
        %v2148 = vadd.f32 %v2128, %v2146
        %v2149 = vsub.f32 %v1823, 12.0
        %v2150 = vsub.f32 %v1824, 12.0
        %v2151 = vand.u32 2147483647, %v2149
        %v2152 = vand.u32 2147483647, %v2150
        %v2153 = vsub.f32 1.0, %v2151
        %v2154 = vsub.f32 1.0, %v2152
        %v2155 = vmax.f32 %v2153, 0.0
        %v2156 = vmax.f32 %v2154, 0.0
        %v2157 = vmul.f32 %v1884, %v2155
        %v2158 = vmul.f32 %v1885, %v2156
        %v2159 = vadd.f32 %v2139, %v2157
        %v2160 = vadd.f32 %v2140, %v2158
        %v2161 = vsub.f32 %v1889, %v1901
        %v2162 = vsub.f32 %v1890, %v1902
        %v2163 = vmul.f32 %v2161, 1.442695
        %v2164 = vpow.pop %v2163
        %v2165 = vmul.f32 %v2162, 1.442695
        %v2166 = vpow.pop %v2165
        %v2167 = vadd.f32 %v2147, %v2164
        %v2168 = vadd.f32 %v2148, %v2166
        %v2169 = vsub.f32 %v1823, 13.0
        %v2170 = vsub.f32 %v1824, 13.0
        %v2171 = vand.u32 2147483647, %v2169
        %v2172 = vand.u32 2147483647, %v2170
        %v2173 = vsub.f32 1.0, %v2171
        %v2174 = vsub.f32 1.0, %v2172
        %v2175 = vmax.f32 %v2173, 0.0
        %v2176 = vmax.f32 %v2174, 0.0
        %v2177 = vmul.f32 %v1889, %v2175
        %v2178 = vmul.f32 %v1890, %v2176
        %v2179 = vadd.f32 %v2159, %v2177
        %v2180 = vadd.f32 %v2160, %v2178
        %v2181 = vsub.f32 %v1894, %v1901
        %v2182 = vsub.f32 %v1895, %v1902
        %v2183 = vmul.f32 %v2181, 1.442695
        %v2184 = vpow.pop %v2183
        %v2185 = vmul.f32 %v2182, 1.442695
        %v2186 = vpow.pop %v2185
        %v2187 = vadd.f32 %v2167, %v2184
        %v2188 = vadd.f32 %v2168, %v2186
        %v2189 = vsub.f32 %v1823, 14.0
        %v2190 = vsub.f32 %v1824, 14.0
        %v2191 = vand.u32 2147483647, %v2189
        %v2192 = vand.u32 2147483647, %v2190
        %v2193 = vsub.f32 1.0, %v2191
        %v2194 = vsub.f32 1.0, %v2192
        %v2195 = vmax.f32 %v2193, 0.0
        %v2196 = vmax.f32 %v2194, 0.0
        %v2197 = vmul.f32 %v1894, %v2195
        %v2198 = vmul.f32 %v1895, %v2196
        %v2199 = vadd.f32 %v2179, %v2197
        %v2200 = vadd.f32 %v2180, %v2198
        %v2201 = vsub.f32 %v1899, %v1901
        %v2202 = vsub.f32 %v1900, %v1902
        %v2203 = vmul.f32 %v2201, 1.442695
        %v2204 = vpow.pop %v2203
        %v2205 = vmul.f32 %v2202, 1.442695
        %v2206 = vpow.pop %v2205
        %v2207 = vadd.f32 %v2187, %v2204
        %v2208 = vadd.f32 %v2188, %v2206
        %v2209 = vsub.f32 %v1823, 15.0
        %v2210 = vsub.f32 %v1824, 15.0
        %v2211 = vand.u32 2147483647, %v2209
        %v2212 = vand.u32 2147483647, %v2210
        %v2213 = vsub.f32 1.0, %v2211
        %v2214 = vsub.f32 1.0, %v2212
        %v2215 = vmax.f32 %v2213, 0.0
        %v2216 = vmax.f32 %v2214, 0.0
        %v2217 = vmul.f32 %v1899, %v2215
        %v2218 = vmul.f32 %v1900, %v2216
        %v2219 = vadd.f32 %v2199, %v2217
        %v2220 = vadd.f32 %v2200, %v2218
        %v2221 = vlog2.pop %v2207
        %v2222 = vmul.f32 %v2221, 0.6931472
        %v2223 = vlog2.pop %v2208
        %v2224 = vmul.f32 %v2223, 0.6931472
        %v2225 = vadd.f32 %v1901, %v2222
        %v2226 = vadd.f32 %v1902, %v2224
        %v2227 = vadd.f32 %v1812, %v2225
        %v2228 = vadd.f32 %v1813, %v2226
        %v2229 = vsub.f32 %v2227, %v2219
        %v2230 = vsub.f32 %v2228, %v2220
        %v2231 = vld [vmem:[%s920] sm:$0xff]
        %v2232 = vld [vmem:[%s920 + $0x8] sm:$0xff]
        %v2233 = vsub.f32 %v2231, %v1399
        %v2234 = vsub.f32 %v2232, %v1400
        %v2235 = vmax.f32 %v2233, 0.0
        %v2236 = vmax.f32 %v2234, 0.0
        %v2237 = vmin.f32 %v2235, 14.99
        %v2238 = vmin.f32 %v2236, 14.99
        %s2239 = scalar_lea.vmem %s846, 512 [#allocation3]
        %v2240 = vld [vmem:[%s2239] sm:$0xff]
        %v2241 = vld [vmem:[%s2239 + $0x8] sm:$0xff]
        %s2242 = scalar_lea.vmem %s846, 528 [#allocation3]
        %v2243 = vld [vmem:[%s2242] sm:$0xff]
        %v2244 = vld [vmem:[%s2242 + $0x8] sm:$0xff]
        %v2245 = vmax.f32 %v2240, %v2243
        %v2246 = vmax.f32 %v2241, %v2244
        %s2247 = scalar_lea.vmem %s846, 544 [#allocation3]
        %v2248 = vld [vmem:[%s2247] sm:$0xff]
        %v2249 = vld [vmem:[%s2247 + $0x8] sm:$0xff]
        %v2250 = vmax.f32 %v2245, %v2248
        %v2251 = vmax.f32 %v2246, %v2249
        %s2252 = scalar_lea.vmem %s846, 560 [#allocation3]
        %v2253 = vld [vmem:[%s2252] sm:$0xff]
        %v2254 = vld [vmem:[%s2252 + $0x8] sm:$0xff]
        %v2255 = vmax.f32 %v2250, %v2253
        %v2256 = vmax.f32 %v2251, %v2254
        %s2257 = scalar_lea.vmem %s846, 576 [#allocation3]
        %v2258 = vld [vmem:[%s2257] sm:$0xff]
        %v2259 = vld [vmem:[%s2257 + $0x8] sm:$0xff]
        %v2260 = vmax.f32 %v2255, %v2258
        %v2261 = vmax.f32 %v2256, %v2259
        %s2262 = scalar_lea.vmem %s846, 592 [#allocation3]
        %v2263 = vld [vmem:[%s2262] sm:$0xff]
        %v2264 = vld [vmem:[%s2262 + $0x8] sm:$0xff]
        %v2265 = vmax.f32 %v2260, %v2263
        %v2266 = vmax.f32 %v2261, %v2264
        %s2267 = scalar_lea.vmem %s846, 608 [#allocation3]
        %v2268 = vld [vmem:[%s2267] sm:$0xff]
        %v2269 = vld [vmem:[%s2267 + $0x8] sm:$0xff]
        %v2270 = vmax.f32 %v2265, %v2268
        %v2271 = vmax.f32 %v2266, %v2269
        %s2272 = scalar_lea.vmem %s846, 624 [#allocation3]
        %v2273 = vld [vmem:[%s2272] sm:$0xff]
        %v2274 = vld [vmem:[%s2272 + $0x8] sm:$0xff]
        %v2275 = vmax.f32 %v2270, %v2273
        %v2276 = vmax.f32 %v2271, %v2274
        %s2277 = scalar_lea.vmem %s846, 640 [#allocation3]
        %v2278 = vld [vmem:[%s2277] sm:$0xff]
        %v2279 = vld [vmem:[%s2277 + $0x8] sm:$0xff]
        %v2280 = vmax.f32 %v2275, %v2278
        %v2281 = vmax.f32 %v2276, %v2279
        %s2282 = scalar_lea.vmem %s846, 656 [#allocation3]
        %v2283 = vld [vmem:[%s2282] sm:$0xff]
        %v2284 = vld [vmem:[%s2282 + $0x8] sm:$0xff]
        %v2285 = vmax.f32 %v2280, %v2283
        %v2286 = vmax.f32 %v2281, %v2284
        %s2287 = scalar_lea.vmem %s846, 672 [#allocation3]
        %v2288 = vld [vmem:[%s2287] sm:$0xff]
        %v2289 = vld [vmem:[%s2287 + $0x8] sm:$0xff]
        %v2290 = vmax.f32 %v2285, %v2288
        %v2291 = vmax.f32 %v2286, %v2289
        %s2292 = scalar_lea.vmem %s846, 688 [#allocation3]
        %v2293 = vld [vmem:[%s2292] sm:$0xff]
        %v2294 = vld [vmem:[%s2292 + $0x8] sm:$0xff]
        %v2295 = vmax.f32 %v2290, %v2293
        %v2296 = vmax.f32 %v2291, %v2294
        %s2297 = scalar_lea.vmem %s846, 704 [#allocation3]
        %v2298 = vld [vmem:[%s2297] sm:$0xff]
        %v2299 = vld [vmem:[%s2297 + $0x8] sm:$0xff]
        %v2300 = vmax.f32 %v2295, %v2298
        %v2301 = vmax.f32 %v2296, %v2299
        %s2302 = scalar_lea.vmem %s846, 720 [#allocation3]
        %v2303 = vld [vmem:[%s2302] sm:$0xff]
        %v2304 = vld [vmem:[%s2302 + $0x8] sm:$0xff]
        %v2305 = vmax.f32 %v2300, %v2303
        %v2306 = vmax.f32 %v2301, %v2304
        %s2307 = scalar_lea.vmem %s846, 736 [#allocation3]
        %v2308 = vld [vmem:[%s2307] sm:$0xff]
        %v2309 = vld [vmem:[%s2307 + $0x8] sm:$0xff]
        %v2310 = vmax.f32 %v2305, %v2308
        %v2311 = vmax.f32 %v2306, %v2309
        %s2312 = scalar_lea.vmem %s846, 752 [#allocation3]
        %v2313 = vld [vmem:[%s2312] sm:$0xff]
        %v2314 = vld [vmem:[%s2312 + $0x8] sm:$0xff]
        %v2315 = vmax.f32 %v2310, %v2313
        %v2316 = vmax.f32 %v2311, %v2314
        %v2317 = vsub.f32 %v2240, %v2315
        %v2318 = vsub.f32 %v2241, %v2316
        %v2319 = vmul.f32 %v2317, 1.442695
        %v2320 = vpow.pop %v2319
        %v2321 = vmul.f32 %v2318, 1.442695
        %v2322 = vpow.pop %v2321
        %v2323 = vadd.f32 %v2320, 0.0
        %v2324 = vadd.f32 %v2322, 0.0
        %v2325 = vand.u32 2147483647, %v2237
        %v2326 = vand.u32 2147483647, %v2238
        %v2327 = vsub.f32 1.0, %v2325
        %v2328 = vsub.f32 1.0, %v2326
        %v2329 = vmax.f32 %v2327, 0.0
        %v2330 = vmax.f32 %v2328, 0.0
        %v2331 = vmul.f32 %v2240, %v2329
        %v2332 = vmul.f32 %v2241, %v2330
        %v2333 = vadd.f32 %v2331, 0.0
        %v2334 = vadd.f32 %v2332, 0.0
        %v2335 = vsub.f32 %v2243, %v2315
        %v2336 = vsub.f32 %v2244, %v2316
        %v2337 = vmul.f32 %v2335, 1.442695
        %v2338 = vpow.pop %v2337
        %v2339 = vmul.f32 %v2336, 1.442695
        %v2340 = vpow.pop %v2339
        %v2341 = vadd.f32 %v2323, %v2338
        %v2342 = vadd.f32 %v2324, %v2340
        %v2343 = vsub.f32 %v2237, 1.0
        %v2344 = vsub.f32 %v2238, 1.0
        %v2345 = vand.u32 2147483647, %v2343
        %v2346 = vand.u32 2147483647, %v2344
        %v2347 = vsub.f32 1.0, %v2345
        %v2348 = vsub.f32 1.0, %v2346
        %v2349 = vmax.f32 %v2347, 0.0
        %v2350 = vmax.f32 %v2348, 0.0
        %v2351 = vmul.f32 %v2243, %v2349
        %v2352 = vmul.f32 %v2244, %v2350
        %v2353 = vadd.f32 %v2333, %v2351
        %v2354 = vadd.f32 %v2334, %v2352
        %v2355 = vsub.f32 %v2248, %v2315
        %v2356 = vsub.f32 %v2249, %v2316
        %v2357 = vmul.f32 %v2355, 1.442695
        %v2358 = vpow.pop %v2357
        %v2359 = vmul.f32 %v2356, 1.442695
        %v2360 = vpow.pop %v2359
        %v2361 = vadd.f32 %v2341, %v2358
        %v2362 = vadd.f32 %v2342, %v2360
        %v2363 = vsub.f32 %v2237, 2.0
        %v2364 = vsub.f32 %v2238, 2.0
        %v2365 = vand.u32 2147483647, %v2363
        %v2366 = vand.u32 2147483647, %v2364
        %v2367 = vsub.f32 1.0, %v2365
        %v2368 = vsub.f32 1.0, %v2366
        %v2369 = vmax.f32 %v2367, 0.0
        %v2370 = vmax.f32 %v2368, 0.0
        %v2371 = vmul.f32 %v2248, %v2369
        %v2372 = vmul.f32 %v2249, %v2370
        %v2373 = vadd.f32 %v2353, %v2371
        %v2374 = vadd.f32 %v2354, %v2372
        %v2375 = vsub.f32 %v2253, %v2315
        %v2376 = vsub.f32 %v2254, %v2316
        %v2377 = vmul.f32 %v2375, 1.442695
        %v2378 = vpow.pop %v2377
        %v2379 = vmul.f32 %v2376, 1.442695
        %v2380 = vpow.pop %v2379
        %v2381 = vadd.f32 %v2361, %v2378
        %v2382 = vadd.f32 %v2362, %v2380
        %v2383 = vsub.f32 %v2237, 3.0
        %v2384 = vsub.f32 %v2238, 3.0
        %v2385 = vand.u32 2147483647, %v2383
        %v2386 = vand.u32 2147483647, %v2384
        %v2387 = vsub.f32 1.0, %v2385
        %v2388 = vsub.f32 1.0, %v2386
        %v2389 = vmax.f32 %v2387, 0.0
        %v2390 = vmax.f32 %v2388, 0.0
        %v2391 = vmul.f32 %v2253, %v2389
        %v2392 = vmul.f32 %v2254, %v2390
        %v2393 = vadd.f32 %v2373, %v2391
        %v2394 = vadd.f32 %v2374, %v2392
        %v2395 = vsub.f32 %v2258, %v2315
        %v2396 = vsub.f32 %v2259, %v2316
        %v2397 = vmul.f32 %v2395, 1.442695
        %v2398 = vpow.pop %v2397
        %v2399 = vmul.f32 %v2396, 1.442695
        %v2400 = vpow.pop %v2399
        %v2401 = vadd.f32 %v2381, %v2398
        %v2402 = vadd.f32 %v2382, %v2400
        %v2403 = vsub.f32 %v2237, 4.0
        %v2404 = vsub.f32 %v2238, 4.0
        %v2405 = vand.u32 2147483647, %v2403
        %v2406 = vand.u32 2147483647, %v2404
        %v2407 = vsub.f32 1.0, %v2405
        %v2408 = vsub.f32 1.0, %v2406
        %v2409 = vmax.f32 %v2407, 0.0
        %v2410 = vmax.f32 %v2408, 0.0
        %v2411 = vmul.f32 %v2258, %v2409
        %v2412 = vmul.f32 %v2259, %v2410
        %v2413 = vadd.f32 %v2393, %v2411
        %v2414 = vadd.f32 %v2394, %v2412
        %v2415 = vsub.f32 %v2263, %v2315
        %v2416 = vsub.f32 %v2264, %v2316
        %v2417 = vmul.f32 %v2415, 1.442695
        %v2418 = vpow.pop %v2417
        %v2419 = vmul.f32 %v2416, 1.442695
        %v2420 = vpow.pop %v2419
        %v2421 = vadd.f32 %v2401, %v2418
        %v2422 = vadd.f32 %v2402, %v2420
        %v2423 = vsub.f32 %v2237, 5.0
        %v2424 = vsub.f32 %v2238, 5.0
        %v2425 = vand.u32 2147483647, %v2423
        %v2426 = vand.u32 2147483647, %v2424
        %v2427 = vsub.f32 1.0, %v2425
        %v2428 = vsub.f32 1.0, %v2426
        %v2429 = vmax.f32 %v2427, 0.0
        %v2430 = vmax.f32 %v2428, 0.0
        %v2431 = vmul.f32 %v2263, %v2429
        %v2432 = vmul.f32 %v2264, %v2430
        %v2433 = vadd.f32 %v2413, %v2431
        %v2434 = vadd.f32 %v2414, %v2432
        %v2435 = vsub.f32 %v2268, %v2315
        %v2436 = vsub.f32 %v2269, %v2316
        %v2437 = vmul.f32 %v2435, 1.442695
        %v2438 = vpow.pop %v2437
        %v2439 = vmul.f32 %v2436, 1.442695
        %v2440 = vpow.pop %v2439
        %v2441 = vadd.f32 %v2421, %v2438
        %v2442 = vadd.f32 %v2422, %v2440
        %v2443 = vsub.f32 %v2237, 6.0
        %v2444 = vsub.f32 %v2238, 6.0
        %v2445 = vand.u32 2147483647, %v2443
        %v2446 = vand.u32 2147483647, %v2444
        %v2447 = vsub.f32 1.0, %v2445
        %v2448 = vsub.f32 1.0, %v2446
        %v2449 = vmax.f32 %v2447, 0.0
        %v2450 = vmax.f32 %v2448, 0.0
        %v2451 = vmul.f32 %v2268, %v2449
        %v2452 = vmul.f32 %v2269, %v2450
        %v2453 = vadd.f32 %v2433, %v2451
        %v2454 = vadd.f32 %v2434, %v2452
        %v2455 = vsub.f32 %v2273, %v2315
        %v2456 = vsub.f32 %v2274, %v2316
        %v2457 = vmul.f32 %v2455, 1.442695
        %v2458 = vpow.pop %v2457
        %v2459 = vmul.f32 %v2456, 1.442695
        %v2460 = vpow.pop %v2459
        %v2461 = vadd.f32 %v2441, %v2458
        %v2462 = vadd.f32 %v2442, %v2460
        %v2463 = vsub.f32 %v2237, 7.0
        %v2464 = vsub.f32 %v2238, 7.0
        %v2465 = vand.u32 2147483647, %v2463
        %v2466 = vand.u32 2147483647, %v2464
        %v2467 = vsub.f32 1.0, %v2465
        %v2468 = vsub.f32 1.0, %v2466
        %v2469 = vmax.f32 %v2467, 0.0
        %v2470 = vmax.f32 %v2468, 0.0
        %v2471 = vmul.f32 %v2273, %v2469
        %v2472 = vmul.f32 %v2274, %v2470
        %v2473 = vadd.f32 %v2453, %v2471
        %v2474 = vadd.f32 %v2454, %v2472
        %v2475 = vsub.f32 %v2278, %v2315
        %v2476 = vsub.f32 %v2279, %v2316
        %v2477 = vmul.f32 %v2475, 1.442695
        %v2478 = vpow.pop %v2477
        %v2479 = vmul.f32 %v2476, 1.442695
        %v2480 = vpow.pop %v2479
        %v2481 = vadd.f32 %v2461, %v2478
        %v2482 = vadd.f32 %v2462, %v2480
        %v2483 = vsub.f32 %v2237, 8.0
        %v2484 = vsub.f32 %v2238, 8.0
        %v2485 = vand.u32 2147483647, %v2483
        %v2486 = vand.u32 2147483647, %v2484
        %v2487 = vsub.f32 1.0, %v2485
        %v2488 = vsub.f32 1.0, %v2486
        %v2489 = vmax.f32 %v2487, 0.0
        %v2490 = vmax.f32 %v2488, 0.0
        %v2491 = vmul.f32 %v2278, %v2489
        %v2492 = vmul.f32 %v2279, %v2490
        %v2493 = vadd.f32 %v2473, %v2491
        %v2494 = vadd.f32 %v2474, %v2492
        %v2495 = vsub.f32 %v2283, %v2315
        %v2496 = vsub.f32 %v2284, %v2316
        %v2497 = vmul.f32 %v2495, 1.442695
        %v2498 = vpow.pop %v2497
        %v2499 = vmul.f32 %v2496, 1.442695
        %v2500 = vpow.pop %v2499
        %v2501 = vadd.f32 %v2481, %v2498
        %v2502 = vadd.f32 %v2482, %v2500
        %v2503 = vsub.f32 %v2237, 9.0
        %v2504 = vsub.f32 %v2238, 9.0
        %v2505 = vand.u32 2147483647, %v2503
        %v2506 = vand.u32 2147483647, %v2504
        %v2507 = vsub.f32 1.0, %v2505
        %v2508 = vsub.f32 1.0, %v2506
        %v2509 = vmax.f32 %v2507, 0.0
        %v2510 = vmax.f32 %v2508, 0.0
        %v2511 = vmul.f32 %v2283, %v2509
        %v2512 = vmul.f32 %v2284, %v2510
        %v2513 = vadd.f32 %v2493, %v2511
        %v2514 = vadd.f32 %v2494, %v2512
        %v2515 = vsub.f32 %v2288, %v2315
        %v2516 = vsub.f32 %v2289, %v2316
        %v2517 = vmul.f32 %v2515, 1.442695
        %v2518 = vpow.pop %v2517
        %v2519 = vmul.f32 %v2516, 1.442695
        %v2520 = vpow.pop %v2519
        %v2521 = vadd.f32 %v2501, %v2518
        %v2522 = vadd.f32 %v2502, %v2520
        %v2523 = vsub.f32 %v2237, 10.0
        %v2524 = vsub.f32 %v2238, 10.0
        %v2525 = vand.u32 2147483647, %v2523
        %v2526 = vand.u32 2147483647, %v2524
        %v2527 = vsub.f32 1.0, %v2525
        %v2528 = vsub.f32 1.0, %v2526
        %v2529 = vmax.f32 %v2527, 0.0
        %v2530 = vmax.f32 %v2528, 0.0
        %v2531 = vmul.f32 %v2288, %v2529
        %v2532 = vmul.f32 %v2289, %v2530
        %v2533 = vadd.f32 %v2513, %v2531
        %v2534 = vadd.f32 %v2514, %v2532
        %v2535 = vsub.f32 %v2293, %v2315
        %v2536 = vsub.f32 %v2294, %v2316
        %v2537 = vmul.f32 %v2535, 1.442695
        %v2538 = vpow.pop %v2537
        %v2539 = vmul.f32 %v2536, 1.442695
        %v2540 = vpow.pop %v2539
        %v2541 = vadd.f32 %v2521, %v2538
        %v2542 = vadd.f32 %v2522, %v2540
        %v2543 = vsub.f32 %v2237, 11.0
        %v2544 = vsub.f32 %v2238, 11.0
        %v2545 = vand.u32 2147483647, %v2543
        %v2546 = vand.u32 2147483647, %v2544
        %v2547 = vsub.f32 1.0, %v2545
        %v2548 = vsub.f32 1.0, %v2546
        %v2549 = vmax.f32 %v2547, 0.0
        %v2550 = vmax.f32 %v2548, 0.0
        %v2551 = vmul.f32 %v2293, %v2549
        %v2552 = vmul.f32 %v2294, %v2550
        %v2553 = vadd.f32 %v2533, %v2551
        %v2554 = vadd.f32 %v2534, %v2552
        %v2555 = vsub.f32 %v2298, %v2315
        %v2556 = vsub.f32 %v2299, %v2316
        %v2557 = vmul.f32 %v2555, 1.442695
        %v2558 = vpow.pop %v2557
        %v2559 = vmul.f32 %v2556, 1.442695
        %v2560 = vpow.pop %v2559
        %v2561 = vadd.f32 %v2541, %v2558
        %v2562 = vadd.f32 %v2542, %v2560
        %v2563 = vsub.f32 %v2237, 12.0
        %v2564 = vsub.f32 %v2238, 12.0
        %v2565 = vand.u32 2147483647, %v2563
        %v2566 = vand.u32 2147483647, %v2564
        %v2567 = vsub.f32 1.0, %v2565
        %v2568 = vsub.f32 1.0, %v2566
        %v2569 = vmax.f32 %v2567, 0.0
        %v2570 = vmax.f32 %v2568, 0.0
        %v2571 = vmul.f32 %v2298, %v2569
        %v2572 = vmul.f32 %v2299, %v2570
        %v2573 = vadd.f32 %v2553, %v2571
        %v2574 = vadd.f32 %v2554, %v2572
        %v2575 = vsub.f32 %v2303, %v2315
        %v2576 = vsub.f32 %v2304, %v2316
        %v2577 = vmul.f32 %v2575, 1.442695
        %v2578 = vpow.pop %v2577
        %v2579 = vmul.f32 %v2576, 1.442695
        %v2580 = vpow.pop %v2579
        %v2581 = vadd.f32 %v2561, %v2578
        %v2582 = vadd.f32 %v2562, %v2580
        %v2583 = vsub.f32 %v2237, 13.0
        %v2584 = vsub.f32 %v2238, 13.0
        %v2585 = vand.u32 2147483647, %v2583
        %v2586 = vand.u32 2147483647, %v2584
        %v2587 = vsub.f32 1.0, %v2585
        %v2588 = vsub.f32 1.0, %v2586
        %v2589 = vmax.f32 %v2587, 0.0
        %v2590 = vmax.f32 %v2588, 0.0
        %v2591 = vmul.f32 %v2303, %v2589
        %v2592 = vmul.f32 %v2304, %v2590
        %v2593 = vadd.f32 %v2573, %v2591
        %v2594 = vadd.f32 %v2574, %v2592
        %v2595 = vsub.f32 %v2308, %v2315
        %v2596 = vsub.f32 %v2309, %v2316
        %v2597 = vmul.f32 %v2595, 1.442695
        %v2598 = vpow.pop %v2597
        %v2599 = vmul.f32 %v2596, 1.442695
        %v2600 = vpow.pop %v2599
        %v2601 = vadd.f32 %v2581, %v2598
        %v2602 = vadd.f32 %v2582, %v2600
        %v2603 = vsub.f32 %v2237, 14.0
        %v2604 = vsub.f32 %v2238, 14.0
        %v2605 = vand.u32 2147483647, %v2603
        %v2606 = vand.u32 2147483647, %v2604
        %v2607 = vsub.f32 1.0, %v2605
        %v2608 = vsub.f32 1.0, %v2606
        %v2609 = vmax.f32 %v2607, 0.0
        %v2610 = vmax.f32 %v2608, 0.0
        %v2611 = vmul.f32 %v2308, %v2609
        %v2612 = vmul.f32 %v2309, %v2610
        %v2613 = vadd.f32 %v2593, %v2611
        %v2614 = vadd.f32 %v2594, %v2612
        %v2615 = vsub.f32 %v2313, %v2315
        %v2616 = vsub.f32 %v2314, %v2316
        %v2617 = vmul.f32 %v2615, 1.442695
        %v2618 = vpow.pop %v2617
        %v2619 = vmul.f32 %v2616, 1.442695
        %v2620 = vpow.pop %v2619
        %v2621 = vadd.f32 %v2601, %v2618
        %v2622 = vadd.f32 %v2602, %v2620
        %v2623 = vsub.f32 %v2237, 15.0
        %v2624 = vsub.f32 %v2238, 15.0
        %v2625 = vand.u32 2147483647, %v2623
        %v2626 = vand.u32 2147483647, %v2624
        %v2627 = vsub.f32 1.0, %v2625
        %v2628 = vsub.f32 1.0, %v2626
        %v2629 = vmax.f32 %v2627, 0.0
        %v2630 = vmax.f32 %v2628, 0.0
        %v2631 = vmul.f32 %v2313, %v2629
        %v2632 = vmul.f32 %v2314, %v2630
        %v2633 = vadd.f32 %v2613, %v2631
        %v2634 = vadd.f32 %v2614, %v2632
        %v2635 = vlog2.pop %v2621
        %v2636 = vmul.f32 %v2635, 0.6931472
        %v2637 = vlog2.pop %v2622
        %v2638 = vmul.f32 %v2637, 0.6931472
        %v2639 = vadd.f32 %v2315, %v2636
        %v2640 = vadd.f32 %v2316, %v2638
        %v2641 = vadd.f32 %v2229, %v2639
        %v2642 = vadd.f32 %v2230, %v2640
        %v2643 = vsub.f32 %v2641, %v2633
        %v2644 = vsub.f32 %v2642, %v2634
        %v2645 = vld [vmem:[%s923] sm:$0xff]
        %v2646 = vld [vmem:[%s923 + $0x8] sm:$0xff]
        %v2647 = vsub.f32 %v2645, %v1815
        %v2648 = vsub.f32 %v2646, %v1816
        %v2649 = vmax.f32 %v2647, 0.0
        %v2650 = vmax.f32 %v2648, 0.0
        %v2651 = vmin.f32 %v2649, 14.99
        %v2652 = vmin.f32 %v2650, 14.99
        %s2653 = scalar_lea.vmem %s846, 768 [#allocation3]
        %v2654 = vld [vmem:[%s2653] sm:$0xff]
        %v2655 = vld [vmem:[%s2653 + $0x8] sm:$0xff]
        %s2656 = scalar_lea.vmem %s846, 784 [#allocation3]
        %v2657 = vld [vmem:[%s2656] sm:$0xff]
        %v2658 = vld [vmem:[%s2656 + $0x8] sm:$0xff]
        %v2659 = vmax.f32 %v2654, %v2657
        %v2660 = vmax.f32 %v2655, %v2658
        %s2661 = scalar_lea.vmem %s846, 800 [#allocation3]
        %v2662 = vld [vmem:[%s2661] sm:$0xff]
        %v2663 = vld [vmem:[%s2661 + $0x8] sm:$0xff]
        %v2664 = vmax.f32 %v2659, %v2662
        %v2665 = vmax.f32 %v2660, %v2663
        %s2666 = scalar_lea.vmem %s846, 816 [#allocation3]
        %v2667 = vld [vmem:[%s2666] sm:$0xff]
        %v2668 = vld [vmem:[%s2666 + $0x8] sm:$0xff]
        %v2669 = vmax.f32 %v2664, %v2667
        %v2670 = vmax.f32 %v2665, %v2668
        %s2671 = scalar_lea.vmem %s846, 832 [#allocation3]
        %v2672 = vld [vmem:[%s2671] sm:$0xff]
        %v2673 = vld [vmem:[%s2671 + $0x8] sm:$0xff]
        %v2674 = vmax.f32 %v2669, %v2672
        %v2675 = vmax.f32 %v2670, %v2673
        %s2676 = scalar_lea.vmem %s846, 848 [#allocation3]
        %v2677 = vld [vmem:[%s2676] sm:$0xff]
        %v2678 = vld [vmem:[%s2676 + $0x8] sm:$0xff]
        %v2679 = vmax.f32 %v2674, %v2677
        %v2680 = vmax.f32 %v2675, %v2678
        %s2681 = scalar_lea.vmem %s846, 864 [#allocation3]
        %v2682 = vld [vmem:[%s2681] sm:$0xff]
        %v2683 = vld [vmem:[%s2681 + $0x8] sm:$0xff]
        %v2684 = vmax.f32 %v2679, %v2682
        %v2685 = vmax.f32 %v2680, %v2683
        %s2686 = scalar_lea.vmem %s846, 880 [#allocation3]
        %v2687 = vld [vmem:[%s2686] sm:$0xff]
        %v2688 = vld [vmem:[%s2686 + $0x8] sm:$0xff]
        %v2689 = vmax.f32 %v2684, %v2687
        %v2690 = vmax.f32 %v2685, %v2688
        %s2691 = scalar_lea.vmem %s846, 896 [#allocation3]
        %v2692 = vld [vmem:[%s2691] sm:$0xff]
        %v2693 = vld [vmem:[%s2691 + $0x8] sm:$0xff]
        %v2694 = vmax.f32 %v2689, %v2692
        %v2695 = vmax.f32 %v2690, %v2693
        %s2696 = scalar_lea.vmem %s846, 912 [#allocation3]
        %v2697 = vld [vmem:[%s2696] sm:$0xff]
        %v2698 = vld [vmem:[%s2696 + $0x8] sm:$0xff]
        %v2699 = vmax.f32 %v2694, %v2697
        %v2700 = vmax.f32 %v2695, %v2698
        %s2701 = scalar_lea.vmem %s846, 928 [#allocation3]
        %v2702 = vld [vmem:[%s2701] sm:$0xff]
        %v2703 = vld [vmem:[%s2701 + $0x8] sm:$0xff]
        %v2704 = vmax.f32 %v2699, %v2702
        %v2705 = vmax.f32 %v2700, %v2703
        %s2706 = scalar_lea.vmem %s846, 944 [#allocation3]
        %v2707 = vld [vmem:[%s2706] sm:$0xff]
        %v2708 = vld [vmem:[%s2706 + $0x8] sm:$0xff]
        %v2709 = vmax.f32 %v2704, %v2707
        %v2710 = vmax.f32 %v2705, %v2708
        %s2711 = scalar_lea.vmem %s846, 960 [#allocation3]
        %v2712 = vld [vmem:[%s2711] sm:$0xff]
        %v2713 = vld [vmem:[%s2711 + $0x8] sm:$0xff]
        %v2714 = vmax.f32 %v2709, %v2712
        %v2715 = vmax.f32 %v2710, %v2713
        %s2716 = scalar_lea.vmem %s846, 976 [#allocation3]
        %v2717 = vld [vmem:[%s2716] sm:$0xff]
        %v2718 = vld [vmem:[%s2716 + $0x8] sm:$0xff]
        %v2719 = vmax.f32 %v2714, %v2717
        %v2720 = vmax.f32 %v2715, %v2718
        %s2721 = scalar_lea.vmem %s846, 992 [#allocation3]
        %v2722 = vld [vmem:[%s2721] sm:$0xff]
        %v2723 = vld [vmem:[%s2721 + $0x8] sm:$0xff]
        %v2724 = vmax.f32 %v2719, %v2722
        %v2725 = vmax.f32 %v2720, %v2723
        %s2726 = scalar_lea.vmem %s846, 1008 [#allocation3]
        %v2727 = vld [vmem:[%s2726] sm:$0xff]
        %v2728 = vld [vmem:[%s2726 + $0x8] sm:$0xff]
        %v2729 = vmax.f32 %v2724, %v2727
        %v2730 = vmax.f32 %v2725, %v2728
        %v2731 = vsub.f32 %v2654, %v2729
        %v2732 = vsub.f32 %v2655, %v2730
        %v2733 = vmul.f32 %v2731, 1.442695
        %v2734 = vpow.pop %v2733
        %v2735 = vmul.f32 %v2732, 1.442695
        %v2736 = vpow.pop %v2735
        %v2737 = vadd.f32 %v2734, 0.0
        %v2738 = vadd.f32 %v2736, 0.0
        %v2739 = vand.u32 2147483647, %v2651
        %v2740 = vand.u32 2147483647, %v2652
        %v2741 = vsub.f32 1.0, %v2739
        %v2742 = vsub.f32 1.0, %v2740
        %v2743 = vmax.f32 %v2741, 0.0
        %v2744 = vmax.f32 %v2742, 0.0
        %v2745 = vmul.f32 %v2654, %v2743
        %v2746 = vmul.f32 %v2655, %v2744
        %v2747 = vadd.f32 %v2745, 0.0
        %v2748 = vadd.f32 %v2746, 0.0
        %v2749 = vsub.f32 %v2657, %v2729
        %v2750 = vsub.f32 %v2658, %v2730
        %v2751 = vmul.f32 %v2749, 1.442695
        %v2752 = vpow.pop %v2751
        %v2753 = vmul.f32 %v2750, 1.442695
        %v2754 = vpow.pop %v2753
        %v2755 = vadd.f32 %v2737, %v2752
        %v2756 = vadd.f32 %v2738, %v2754
        %v2757 = vsub.f32 %v2651, 1.0
        %v2758 = vsub.f32 %v2652, 1.0
        %v2759 = vand.u32 2147483647, %v2757
        %v2760 = vand.u32 2147483647, %v2758
        %v2761 = vsub.f32 1.0, %v2759
        %v2762 = vsub.f32 1.0, %v2760
        %v2763 = vmax.f32 %v2761, 0.0
        %v2764 = vmax.f32 %v2762, 0.0
        %v2765 = vmul.f32 %v2657, %v2763
        %v2766 = vmul.f32 %v2658, %v2764
        %v2767 = vadd.f32 %v2747, %v2765
        %v2768 = vadd.f32 %v2748, %v2766
        %v2769 = vsub.f32 %v2662, %v2729
        %v2770 = vsub.f32 %v2663, %v2730
        %v2771 = vmul.f32 %v2769, 1.442695
        %v2772 = vpow.pop %v2771
        %v2773 = vmul.f32 %v2770, 1.442695
        %v2774 = vpow.pop %v2773
        %v2775 = vadd.f32 %v2755, %v2772
        %v2776 = vadd.f32 %v2756, %v2774
        %v2777 = vsub.f32 %v2651, 2.0
        %v2778 = vsub.f32 %v2652, 2.0
        %v2779 = vand.u32 2147483647, %v2777
        %v2780 = vand.u32 2147483647, %v2778
        %v2781 = vsub.f32 1.0, %v2779
        %v2782 = vsub.f32 1.0, %v2780
        %v2783 = vmax.f32 %v2781, 0.0
        %v2784 = vmax.f32 %v2782, 0.0
        %v2785 = vmul.f32 %v2662, %v2783
        %v2786 = vmul.f32 %v2663, %v2784
        %v2787 = vadd.f32 %v2767, %v2785
        %v2788 = vadd.f32 %v2768, %v2786
        %v2789 = vsub.f32 %v2667, %v2729
        %v2790 = vsub.f32 %v2668, %v2730
        %v2791 = vmul.f32 %v2789, 1.442695
        %v2792 = vpow.pop %v2791
        %v2793 = vmul.f32 %v2790, 1.442695
        %v2794 = vpow.pop %v2793
        %v2795 = vadd.f32 %v2775, %v2792
        %v2796 = vadd.f32 %v2776, %v2794
        %v2797 = vsub.f32 %v2651, 3.0
        %v2798 = vsub.f32 %v2652, 3.0
        %v2799 = vand.u32 2147483647, %v2797
        %v2800 = vand.u32 2147483647, %v2798
        %v2801 = vsub.f32 1.0, %v2799
        %v2802 = vsub.f32 1.0, %v2800
        %v2803 = vmax.f32 %v2801, 0.0
        %v2804 = vmax.f32 %v2802, 0.0
        %v2805 = vmul.f32 %v2667, %v2803
        %v2806 = vmul.f32 %v2668, %v2804
        %v2807 = vadd.f32 %v2787, %v2805
        %v2808 = vadd.f32 %v2788, %v2806
        %v2809 = vsub.f32 %v2672, %v2729
        %v2810 = vsub.f32 %v2673, %v2730
        %v2811 = vmul.f32 %v2809, 1.442695
        %v2812 = vpow.pop %v2811
        %v2813 = vmul.f32 %v2810, 1.442695
        %v2814 = vpow.pop %v2813
        %v2815 = vadd.f32 %v2795, %v2812
        %v2816 = vadd.f32 %v2796, %v2814
        %v2817 = vsub.f32 %v2651, 4.0
        %v2818 = vsub.f32 %v2652, 4.0
        %v2819 = vand.u32 2147483647, %v2817
        %v2820 = vand.u32 2147483647, %v2818
        %v2821 = vsub.f32 1.0, %v2819
        %v2822 = vsub.f32 1.0, %v2820
        %v2823 = vmax.f32 %v2821, 0.0
        %v2824 = vmax.f32 %v2822, 0.0
        %v2825 = vmul.f32 %v2672, %v2823
        %v2826 = vmul.f32 %v2673, %v2824
        %v2827 = vadd.f32 %v2807, %v2825
        %v2828 = vadd.f32 %v2808, %v2826
        %v2829 = vsub.f32 %v2677, %v2729
        %v2830 = vsub.f32 %v2678, %v2730
        %v2831 = vmul.f32 %v2829, 1.442695
        %v2832 = vpow.pop %v2831
        %v2833 = vmul.f32 %v2830, 1.442695
        %v2834 = vpow.pop %v2833
        %v2835 = vadd.f32 %v2815, %v2832
        %v2836 = vadd.f32 %v2816, %v2834
        %v2837 = vsub.f32 %v2651, 5.0
        %v2838 = vsub.f32 %v2652, 5.0
        %v2839 = vand.u32 2147483647, %v2837
        %v2840 = vand.u32 2147483647, %v2838
        %v2841 = vsub.f32 1.0, %v2839
        %v2842 = vsub.f32 1.0, %v2840
        %v2843 = vmax.f32 %v2841, 0.0
        %v2844 = vmax.f32 %v2842, 0.0
        %v2845 = vmul.f32 %v2677, %v2843
        %v2846 = vmul.f32 %v2678, %v2844
        %v2847 = vadd.f32 %v2827, %v2845
        %v2848 = vadd.f32 %v2828, %v2846
        %v2849 = vsub.f32 %v2682, %v2729
        %v2850 = vsub.f32 %v2683, %v2730
        %v2851 = vmul.f32 %v2849, 1.442695
        %v2852 = vpow.pop %v2851
        %v2853 = vmul.f32 %v2850, 1.442695
        %v2854 = vpow.pop %v2853
        %v2855 = vadd.f32 %v2835, %v2852
        %v2856 = vadd.f32 %v2836, %v2854
        %v2857 = vsub.f32 %v2651, 6.0
        %v2858 = vsub.f32 %v2652, 6.0
        %v2859 = vand.u32 2147483647, %v2857
        %v2860 = vand.u32 2147483647, %v2858
        %v2861 = vsub.f32 1.0, %v2859
        %v2862 = vsub.f32 1.0, %v2860
        %v2863 = vmax.f32 %v2861, 0.0
        %v2864 = vmax.f32 %v2862, 0.0
        %v2865 = vmul.f32 %v2682, %v2863
        %v2866 = vmul.f32 %v2683, %v2864
        %v2867 = vadd.f32 %v2847, %v2865
        %v2868 = vadd.f32 %v2848, %v2866
        %v2869 = vsub.f32 %v2687, %v2729
        %v2870 = vsub.f32 %v2688, %v2730
        %v2871 = vmul.f32 %v2869, 1.442695
        %v2872 = vpow.pop %v2871
        %v2873 = vmul.f32 %v2870, 1.442695
        %v2874 = vpow.pop %v2873
        %v2875 = vadd.f32 %v2855, %v2872
        %v2876 = vadd.f32 %v2856, %v2874
        %v2877 = vsub.f32 %v2651, 7.0
        %v2878 = vsub.f32 %v2652, 7.0
        %v2879 = vand.u32 2147483647, %v2877
        %v2880 = vand.u32 2147483647, %v2878
        %v2881 = vsub.f32 1.0, %v2879
        %v2882 = vsub.f32 1.0, %v2880
        %v2883 = vmax.f32 %v2881, 0.0
        %v2884 = vmax.f32 %v2882, 0.0
        %v2885 = vmul.f32 %v2687, %v2883
        %v2886 = vmul.f32 %v2688, %v2884
        %v2887 = vadd.f32 %v2867, %v2885
        %v2888 = vadd.f32 %v2868, %v2886
        %v2889 = vsub.f32 %v2692, %v2729
        %v2890 = vsub.f32 %v2693, %v2730
        %v2891 = vmul.f32 %v2889, 1.442695
        %v2892 = vpow.pop %v2891
        %v2893 = vmul.f32 %v2890, 1.442695
        %v2894 = vpow.pop %v2893
        %v2895 = vadd.f32 %v2875, %v2892
        %v2896 = vadd.f32 %v2876, %v2894
        %v2897 = vsub.f32 %v2651, 8.0
        %v2898 = vsub.f32 %v2652, 8.0
        %v2899 = vand.u32 2147483647, %v2897
        %v2900 = vand.u32 2147483647, %v2898
        %v2901 = vsub.f32 1.0, %v2899
        %v2902 = vsub.f32 1.0, %v2900
        %v2903 = vmax.f32 %v2901, 0.0
        %v2904 = vmax.f32 %v2902, 0.0
        %v2905 = vmul.f32 %v2692, %v2903
        %v2906 = vmul.f32 %v2693, %v2904
        %v2907 = vadd.f32 %v2887, %v2905
        %v2908 = vadd.f32 %v2888, %v2906
        %v2909 = vsub.f32 %v2697, %v2729
        %v2910 = vsub.f32 %v2698, %v2730
        %v2911 = vmul.f32 %v2909, 1.442695
        %v2912 = vpow.pop %v2911
        %v2913 = vmul.f32 %v2910, 1.442695
        %v2914 = vpow.pop %v2913
        %v2915 = vadd.f32 %v2895, %v2912
        %v2916 = vadd.f32 %v2896, %v2914
        %v2917 = vsub.f32 %v2651, 9.0
        %v2918 = vsub.f32 %v2652, 9.0
        %v2919 = vand.u32 2147483647, %v2917
        %v2920 = vand.u32 2147483647, %v2918
        %v2921 = vsub.f32 1.0, %v2919
        %v2922 = vsub.f32 1.0, %v2920
        %v2923 = vmax.f32 %v2921, 0.0
        %v2924 = vmax.f32 %v2922, 0.0
        %v2925 = vmul.f32 %v2697, %v2923
        %v2926 = vmul.f32 %v2698, %v2924
        %v2927 = vadd.f32 %v2907, %v2925
        %v2928 = vadd.f32 %v2908, %v2926
        %v2929 = vsub.f32 %v2702, %v2729
        %v2930 = vsub.f32 %v2703, %v2730
        %v2931 = vmul.f32 %v2929, 1.442695
        %v2932 = vpow.pop %v2931
        %v2933 = vmul.f32 %v2930, 1.442695
        %v2934 = vpow.pop %v2933
        %v2935 = vadd.f32 %v2915, %v2932
        %v2936 = vadd.f32 %v2916, %v2934
        %v2937 = vsub.f32 %v2651, 10.0
        %v2938 = vsub.f32 %v2652, 10.0
        %v2939 = vand.u32 2147483647, %v2937
        %v2940 = vand.u32 2147483647, %v2938
        %v2941 = vsub.f32 1.0, %v2939
        %v2942 = vsub.f32 1.0, %v2940
        %v2943 = vmax.f32 %v2941, 0.0
        %v2944 = vmax.f32 %v2942, 0.0
        %v2945 = vmul.f32 %v2702, %v2943
        %v2946 = vmul.f32 %v2703, %v2944
        %v2947 = vadd.f32 %v2927, %v2945
        %v2948 = vadd.f32 %v2928, %v2946
        %v2949 = vsub.f32 %v2707, %v2729
        %v2950 = vsub.f32 %v2708, %v2730
        %v2951 = vmul.f32 %v2949, 1.442695
        %v2952 = vpow.pop %v2951
        %v2953 = vmul.f32 %v2950, 1.442695
        %v2954 = vpow.pop %v2953
        %v2955 = vadd.f32 %v2935, %v2952
        %v2956 = vadd.f32 %v2936, %v2954
        %v2957 = vsub.f32 %v2651, 11.0
        %v2958 = vsub.f32 %v2652, 11.0
        %v2959 = vand.u32 2147483647, %v2957
        %v2960 = vand.u32 2147483647, %v2958
        %v2961 = vsub.f32 1.0, %v2959
        %v2962 = vsub.f32 1.0, %v2960
        %v2963 = vmax.f32 %v2961, 0.0
        %v2964 = vmax.f32 %v2962, 0.0
        %v2965 = vmul.f32 %v2707, %v2963
        %v2966 = vmul.f32 %v2708, %v2964
        %v2967 = vadd.f32 %v2947, %v2965
        %v2968 = vadd.f32 %v2948, %v2966
        %v2969 = vsub.f32 %v2712, %v2729
        %v2970 = vsub.f32 %v2713, %v2730
        %v2971 = vmul.f32 %v2969, 1.442695
        %v2972 = vpow.pop %v2971
        %v2973 = vmul.f32 %v2970, 1.442695
        %v2974 = vpow.pop %v2973
        %v2975 = vadd.f32 %v2955, %v2972
        %v2976 = vadd.f32 %v2956, %v2974
        %v2977 = vsub.f32 %v2651, 12.0
        %v2978 = vsub.f32 %v2652, 12.0
        %v2979 = vand.u32 2147483647, %v2977
        %v2980 = vand.u32 2147483647, %v2978
        %v2981 = vsub.f32 1.0, %v2979
        %v2982 = vsub.f32 1.0, %v2980
        %v2983 = vmax.f32 %v2981, 0.0
        %v2984 = vmax.f32 %v2982, 0.0
        %v2985 = vmul.f32 %v2712, %v2983
        %v2986 = vmul.f32 %v2713, %v2984
        %v2987 = vadd.f32 %v2967, %v2985
        %v2988 = vadd.f32 %v2968, %v2986
        %v2989 = vsub.f32 %v2717, %v2729
        %v2990 = vsub.f32 %v2718, %v2730
        %v2991 = vmul.f32 %v2989, 1.442695
        %v2992 = vpow.pop %v2991
        %v2993 = vmul.f32 %v2990, 1.442695
        %v2994 = vpow.pop %v2993
        %v2995 = vadd.f32 %v2975, %v2992
        %v2996 = vadd.f32 %v2976, %v2994
        %v2997 = vsub.f32 %v2651, 13.0
        %v2998 = vsub.f32 %v2652, 13.0
        %v2999 = vand.u32 2147483647, %v2997
        %v3000 = vand.u32 2147483647, %v2998
        %v3001 = vsub.f32 1.0, %v2999
        %v3002 = vsub.f32 1.0, %v3000
        %v3003 = vmax.f32 %v3001, 0.0
        %v3004 = vmax.f32 %v3002, 0.0
        %v3005 = vmul.f32 %v2717, %v3003
        %v3006 = vmul.f32 %v2718, %v3004
        %v3007 = vadd.f32 %v2987, %v3005
        %v3008 = vadd.f32 %v2988, %v3006
        %v3009 = vsub.f32 %v2722, %v2729
        %v3010 = vsub.f32 %v2723, %v2730
        %v3011 = vmul.f32 %v3009, 1.442695
        %v3012 = vpow.pop %v3011
        %v3013 = vmul.f32 %v3010, 1.442695
        %v3014 = vpow.pop %v3013
        %v3015 = vadd.f32 %v2995, %v3012
        %v3016 = vadd.f32 %v2996, %v3014
        %v3017 = vsub.f32 %v2651, 14.0
        %v3018 = vsub.f32 %v2652, 14.0
        %v3019 = vand.u32 2147483647, %v3017
        %v3020 = vand.u32 2147483647, %v3018
        %v3021 = vsub.f32 1.0, %v3019
        %v3022 = vsub.f32 1.0, %v3020
        %v3023 = vmax.f32 %v3021, 0.0
        %v3024 = vmax.f32 %v3022, 0.0
        %v3025 = vmul.f32 %v2722, %v3023
        %v3026 = vmul.f32 %v2723, %v3024
        %v3027 = vadd.f32 %v3007, %v3025
        %v3028 = vadd.f32 %v3008, %v3026
        %v3029 = vsub.f32 %v2727, %v2729
        %v3030 = vsub.f32 %v2728, %v2730
        %v3031 = vmul.f32 %v3029, 1.442695
        %v3032 = vpow.pop %v3031
        %v3033 = vmul.f32 %v3030, 1.442695
        %v3034 = vpow.pop %v3033
        %v3035 = vadd.f32 %v3015, %v3032
        %v3036 = vadd.f32 %v3016, %v3034
        %v3037 = vsub.f32 %v2651, 15.0
        %v3038 = vsub.f32 %v2652, 15.0
        %v3039 = vand.u32 2147483647, %v3037
        %v3040 = vand.u32 2147483647, %v3038
        %v3041 = vsub.f32 1.0, %v3039
        %v3042 = vsub.f32 1.0, %v3040
        %v3043 = vmax.f32 %v3041, 0.0
        %v3044 = vmax.f32 %v3042, 0.0
        %v3045 = vmul.f32 %v2727, %v3043
        %v3046 = vmul.f32 %v2728, %v3044
        %v3047 = vadd.f32 %v3027, %v3045
        %v3048 = vadd.f32 %v3028, %v3046
        %v3049 = vlog2.pop %v3035
        %v3050 = vmul.f32 %v3049, 0.6931472
        %v3051 = vlog2.pop %v3036
        %v3052 = vmul.f32 %v3051, 0.6931472
        %v3053 = vadd.f32 %v2729, %v3050
        %v3054 = vadd.f32 %v2730, %v3052
        %v3055 = vadd.f32 %v2643, %v3053
        %v3056 = vadd.f32 %v2644, %v3054
        %v3057 = vsub.f32 %v3055, %v3047
        %v3058 = vsub.f32 %v3056, %v3048
        %v3059 = vld [vmem:[%s890] sm:$0xff]
        %v3060 = vld [vmem:[%s890 + $0x8] sm:$0xff]
        %v3061 = vmul.f32 %v3057, 0.25
        %v3062 = vmul.f32 %v3058, 0.25
        %v3063 = vmul.f32 %v3061, %v901
        %v3064 = vmul.f32 %v3062, %v902
        %v3065 = vadd.f32 %v3059, %v3063
        %v3066 = vadd.f32 %v3060, %v3064
        %3067 = vst [vmem:[%s890] sm:$0xff] %v3065
        %3068 = vst [vmem:[%s890 + $0x8] sm:$0xff] %v3066
        %s3069 = smul.u32 2, %s19
        %p3070 = scmp.lt.s32.totalorder %s3069, 3
        %s3071 = scalar_select %p3070, %s3069, 3
        %s3072 = smul.addr %s3071, 8
        %s3073 = scalar_lea.vmem %s2, %s3072
        %s3074 = smul.u32 2, %s19
        %p3075 = scmp.lt.s32.totalorder %s3074, 3
        %s3076 = scalar_select %p3075, %s3074, 3
        %s3077 = smul.addr %s3076, 8
        %s3078 = scalar_lea.vmem %s3, %s3077
        // Predicated region
        $region109: #{bbox_loss.1} parent=95 // pred_check
          %p3079 = pneg %p101
        $region110: #{bbox_loss.1} parent=95 // pred_check_branch
          %3081 = sbr.rel (%p3079) target = $region112
        $region111: #{bbox_loss.1} parent=95 // pred_region
          %s3082 = smul.u32 2, %s19
        $region112: #{bbox_loss.1} parent=95 // pred_fallthru
          _
        // Predicated region
        $region113: #{bbox_loss.1} parent=95 // pred_check
          %p3083 = pneg %p127
        $region114: #{bbox_loss.1} parent=95 // pred_check_branch
          %3085 = sbr.rel (%p3083) target = $region116
        $region115: #{bbox_loss.1} parent=95 // pred_region
          %s3086 = smul.u32 2, %s19
        $region116: #{bbox_loss.1} parent=95 // pred_fallthru
          _
      $region96: #{bbox_loss.1} parent=5 // pred_fallthru
        _
      %p3087 = scmp.le.s32.totalorder 2, %s10
      // Predicated region
      $region117: #{bbox_loss.1} parent=5 // pred_check
        %p3088 = pneg %p3087
      $region118: #{bbox_loss.1} parent=5 // pred_check_branch
        %3090 = sbr.rel (%p3088) target = $region120
      $region119: #{bbox_loss.1} parent=5 // pred_region
        %s3091 = ssub.s32 %s10, 2
        // Predicated region
        $region121: #{bbox_loss.1} parent=119 // pred_check
          %p3092 = pneg %p107
        $region122: #{bbox_loss.1} parent=119 // pred_check_branch
          %3094 = sbr.rel (%p3092) target = $region124
        $region123: #{bbox_loss.1} parent=119 // pred_region
          %s3095 = smul.u32 2, %s21
          %p3096 = scmp.lt.s32.totalorder %s3095, 3
          %s3097 = scalar_select %p3096, %s3095, 3
          %s3098 = smul.addr %s3097, 8
          %s3099 = scalar_lea.vmem %s2, %s3098
        $region124: #{bbox_loss.1} parent=119 // pred_fallthru
          _
        // Predicated region
        $region125: #{bbox_loss.1} parent=119 // pred_check
          %p3100 = pneg %p133
        $region126: #{bbox_loss.1} parent=119 // pred_check_branch
          %3102 = sbr.rel (%p3100) target = $region128
        $region127: #{bbox_loss.1} parent=119 // pred_region
          %s3103 = smul.u32 2, %s21
          %p3104 = scmp.lt.s32.totalorder %s3103, 3
          %s3105 = scalar_select %p3104, %s3103, 3
          %s3106 = smul.addr %s3105, 8
          %s3107 = scalar_lea.vmem %s3, %s3106
        $region128: #{bbox_loss.1} parent=119 // pred_fallthru
          _
      $region120: #{bbox_loss.1} parent=5 // pred_fallthru
        _
    $region6: #{bbox_loss.1} parent=1 // loop_footer
      %s14 = sadd.s32 1, %s10
    $region7: #{bbox_loss.1} parent=1 // loop_footer_branch
      %9 = sbr.rel target = $region3
    $region8: #{bbox_loss.1} parent=1 // loop_exit
      _

</llo_original>
